<compile_context>
chip_gen: v6e
topology: v6e:2x2x1
jax: 0.10.0
libtpu: 0.0.40
codegen_flags: <defaults>
</compile_context>

<pallas_src>
import functools

import jax
import jax.numpy as jnp
from jax.experimental import pallas as pl
from jax.experimental.pallas import tpu as pltpu


def _round_up(x, m):
    return ((x + m - 1) // m) * m


# ------------------------------ fused kernel --------------------------------

def _env_fused_kernel(x_ref, wc_ref, bc_ref, wf_ref, bf_ref, o_ref, a_ref, *,
                      C, K, W, OC, Q_pad, apply_relu, fc_bf16):
    # x_ref : [C, BT, HW_pad]     VMEM   flattened H*W rows per channel (zero pad)
    # wc_ref: [C*K*K, OC]         SMEM   conv weights, k = (c*K + di)*K + dj
    # bc_ref: [1, OC]             SMEM   conv bias
    # wf_ref: [OC*Q_pad, N_pad]   VMEM   fc weights in conv-q layout (zero rows
    #                                    at every invalid / wrap / padded q)
    # bf_ref: [1, N_pad]          VMEM   fc bias (zero padded)
    # o_ref : [BT, N_pad]         VMEM   output block
    # a_ref : [BT, OC*Q_pad]      VMEM   scratch conv activation
    BT = o_ref.shape[0]

    # ---- conv: 27 scalar-operand FMAs per output channel over [BT, Q_pad] ----
    for oc in range(OC):
        partials = []
        for c in range(C):                         # C independent FMA chains
            p = jnp.zeros((BT, Q_pad), jnp.float32)
            for di in range(K):
                for dj in range(K):
                    k = (c * K + di) * K + dj
                    s = di * W + dj                # static lane offset
                    row = x_ref[c, :, s:s + Q_pad]          # [BT, Q_pad]
                    p = p + row * wc_ref[k, oc]             # scalar from SMEM
            partials.append(p)
        acc = partials[0]
        for p in partials[1:]:
            acc = acc + p
        # bias + ReLU.  Invalid q positions (ow >= OW, q >= Q, padded q) hold
        # garbage here; correctness relies on the matching wf rows being zero.
        a_ref[:, oc * Q_pad:(oc + 1) * Q_pad] = jnp.maximum(
            acc + bc_ref[0, oc], 0.0)

    # ---- fc: ONE lane-aligned MXU matmul [BT, OC*Q_pad] x [OC*Q_pad, N_pad] --
    a = a_ref[...]
    if fc_bf16:
        a = a.astype(jnp.bfloat16)
    y = jnp.dot(a, wf_ref[...], preferred_element_type=jnp.float32)
    y = y + bf_ref[...]
    if apply_relu:
        y = jnp.maximum(y, 0.0)
    o_ref[...] = y.astype(o_ref.dtype)


# ------------------------------ module wrapper -------------------------------

class EnvPallas:
    """Pallas re-implementation of Env's forward (isLstm=False path)."""

    def __init__(self, in_channels, out_channels, kernel_size, height, width,
                 hidden, activation=True, *, key, block_batch=128,
                 fc_bf16=False):
        C, OC, K, H, W = in_channels, out_channels, kernel_size, height, width
        OH, OW = H - K + 1, W - K + 1
        F_in = OC * OH * OW                      # == in_dim of fc1

        k1, k2, k3, k4 = jax.random.split(key, 4)
        fan_conv = C * K * K
        fan_fc = F_in
        self.conv_w = jax.random.uniform(
            k1, (OC, C, K, K), jnp.float32,
            -1.0 / jnp.sqrt(fan_conv), 1.0 / jnp.sqrt(fan_conv))
        self.conv_b = jax.random.uniform(
            k2, (OC,), jnp.float32,
            -1.0 / jnp.sqrt(fan_conv), 1.0 / jnp.sqrt(fan_conv))
        self.fc_w = jax.random.uniform(
            k3, (hidden, F_in), jnp.float32,
            -1.0 / jnp.sqrt(fan_fc), 1.0 / jnp.sqrt(fan_fc))
        self.fc_b = jax.random.uniform(
            k4, (hidden,), jnp.float32,
            -1.0 / jnp.sqrt(fan_fc), 1.0 / jnp.sqrt(fan_fc))

        # ---- static geometry -------------------------------------------------
        self.C, self.OC, self.K, self.H, self.W = C, OC, K, H, W
        self.OH, self.OW, self.hidden, self.activation = OH, OW, hidden, activation
        self.block_batch = max(8, _round_up(block_batch, 8))
        self.fc_bf16 = fc_bf16

        Q = (OH - 1) * W + OW                    # valid extent of q = oh*W + ow
        self.Q = Q
        self.Q_pad = _round_up(Q, 128)           # per-oc segment, lane aligned
        self.N_pad = _round_up(hidden, 128)      # lane-dense output
        self.HW_pad = _round_up(self.Q_pad + (K - 1) * W + (K - 1), 128)
        assert self.HW_pad >= H * W

        # ---- one-time weight re-layouts (no per-call XLA glue) ---------------
        # conv weights / bias as SMEM scalar tables: k = (c*K + di)*K + dj
        self.wc_sc = self.conv_w.transpose(1, 2, 3, 0).reshape(C * K * K, OC)
        self.bc_sc = self.conv_b.reshape(1, OC)

        # fc weight folded into the conv q-layout (matches PyTorch .view(B,-1)):
        # f = oc*OH*OW + oh*OW + ow  ->  row oc*Q_pad + (oh*W + ow).
        # All other rows (ow >= OW wrap, q >= Q, padded q) are EXACTLY zero --
        # the kernel relies on this to neutralize garbage conv activations.
        wf_t = self.fc_w.T.reshape(OC, OH, OW, hidden)
        wf_q = jnp.zeros((OC, OH, W, hidden), jnp.float32).at[:, :, :OW, :].set(wf_t)
        wf_q = wf_q.reshape(OC, OH * W, hidden)[:, :Q, :]
        wf3 = jnp.zeros((OC, self.Q_pad, self.N_pad),
                        jnp.float32).at[:, :Q, :hidden].set(wf_q)
        fc_dtype = jnp.bfloat16 if fc_bf16 else jnp.float32
        self.wf2 = wf3.reshape(OC * self.Q_pad, self.N_pad).astype(fc_dtype)
        self.bf_row = jnp.zeros((1, self.N_pad),
                                jnp.float32).at[0, :hidden].set(self.fc_b)

    def __call__(self, env):
        # env: [B, C, H, W]  (NCHW, like PyTorch)
        B, C, H, W = env.shape
        assert (C, H, W) == (self.C, self.H, self.W)
        BT = min(self.block_batch, _round_up(B, 8))
        B_pad = _round_up(B, BT)
        HW = H * W

        # Channel-major, batch/lane-padded input: [C, B_pad, HW_pad].
        # (Single cheap XLA copy; hoist upstream if the caller can.)
        x = jnp.transpose(env.reshape(B, C, HW), (1, 0, 2))
        x = jnp.pad(x, ((0, 0), (0, B_pad - B), (0, self.HW_pad - HW)))

        kernel = functools.partial(
            _env_fused_kernel, C=self.C, K=self.K, W=self.W, OC=self.OC,
            Q_pad=self.Q_pad, apply_relu=self.activation, fc_bf16=self.fc_bf16)

        out = pl.pallas_call(
            kernel,
            out_shape=jax.ShapeDtypeStruct((B_pad, self.N_pad), jnp.float32),
            grid=(B_pad // BT,),
            in_specs=[
                pl.BlockSpec((self.C, BT, self.HW_pad), lambda g: (0, g, 0)),
                pl.BlockSpec(memory_space=pltpu.MemorySpace.SMEM),   # conv w
                pl.BlockSpec(memory_space=pltpu.MemorySpace.SMEM),   # conv b
                pl.BlockSpec((self.OC * self.Q_pad, self.N_pad),
                             lambda g: (0, 0)),                      # fc w
                pl.BlockSpec((1, self.N_pad), lambda g: (0, 0)),     # fc b
            ],
            out_specs=pl.BlockSpec((BT, self.N_pad), lambda g: (g, 0)),
            scratch_shapes=[pltpu.VMEM((BT, self.OC * self.Q_pad), jnp.float32)],
            compiler_params=pltpu.CompilerParams(
                dimension_semantics=("parallel",),
                vmem_limit_bytes=32 * 1024 * 1024),
        )(x, self.wc_sc, self.bc_sc, self.wf2, self.bf_row)

        return out[:B, :self.hidden]


# ------------------------------ reference & main -----------------------------

def reference_forward(model, env):
    """Pure-JAX reference mirroring the PyTorch module semantics."""
    out = jax.lax.conv_general_dilated(
        env, model.conv_w, window_strides=(1, 1), padding="VALID",
        dimension_numbers=("NCHW", "OIHW", "NCHW"))
    out = jnp.maximum(out + model.conv_b.reshape(1, -1, 1, 1), 0.0)
    flat = out.reshape(env.shape[0], -1)
    y = flat @ model.fc_w.T + model.fc_b
    if model.activation:
        y = jnp.maximum(y, 0.0)
    return y


if __name__ == "__main__":
    key = jax.random.PRNGKey(0)
    k_param, k_in = jax.random.split(key)

    # Shapes implied by the module: Conv2d(3, 6, 3x3) and fc1 in_dim=1014
    # -> input spatial 15x15 (6 * 13 * 13 = 1014).  HIDDEN = 32.
    B, C, H, W = 16, 3, 15, 15
    OC, K = 6, 3
    HIDDEN = 32

    # block_batch=8 -> 2 "parallel" grid steps so both v7x TensorCores get work
    # even at this small test batch; use 128 (default) for production batches.
    model = EnvPallas(C, OC, K, H, W, HIDDEN, activation=True, key=k_param,
                      block_batch=8, fc_bf16=False)
    env = jax.random.normal(k_in, (B, C, H, W), jnp.float32)

    y = jax.block_until_ready(model(env))
    y_ref = reference_forward(model, env)

    assert y.shape == (B, HIDDEN), y.shape
    max_err = float(jnp.max(jnp.abs(y - y_ref)))
    assert jnp.allclose(y, y_ref, atol=1e-4, rtol=1e-4), max_err

    print("KERNEL_OK")
</pallas_src>

<mosaic_0001>
module attributes {stable_mosaic.version = 11 : i64} {
  func.func @_env_fused_kernel(%arg0: i32, %arg1: memref<3x8x384xf32, #tpu.memory_space<vmem>>, %arg2: memref<27x6xf32, #tpu.memory_space<smem>>, %arg3: memref<1x6xf32, #tpu.memory_space<smem>>, %arg4: memref<1536x128xf32, #tpu.memory_space<vmem>>, %arg5: memref<1x128xf32, #tpu.memory_space<vmem>>, %arg6: memref<8x128xf32, #tpu.memory_space<vmem>>, %arg7: memref<8x1536xf32, #tpu.memory_space<vmem>>) attributes {dimension_semantics = [#tpu.dimension_semantics<parallel>], iteration_bounds = array<i64: 2>, scalar_prefetch = 0 : i64, scratch_operands = 1 : i64, tpu.core_type = #tpu.core_type<tc>, window_params = [{transform_indices = @transform_0, window_bounds = array<i64: 3, 8, 384>}, {transform_indices = @transform_1, window_bounds = array<i64: 27, 6>}, {transform_indices = @transform_2, window_bounds = array<i64: 1, 6>}, {pipeline_mode = #tpu.pipeline_mode<synchronous>, transform_indices = @transform_3, window_bounds = array<i64: 1536, 128>}, {pipeline_mode = #tpu.pipeline_mode<synchronous>, transform_indices = @transform_4, window_bounds = array<i64: 1, 128>}, {transform_indices = @transform_5, window_bounds = array<i64: 8, 128>}]} {
    %cst = arith.constant 0.000000e+00 : f32
    %0 = vector.broadcast %cst : f32 to vector<8x256xf32>
    %c0 = arith.constant 0 : index
    %c0_0 = arith.constant 0 : index
    %c0_1 = arith.constant 0 : index
    %1 = vector.load %arg1[%c0, %c0_0, %c0_1] : memref<3x8x384xf32, #tpu.memory_space<vmem>>, vector<1x8x256xf32>
    %2 = vector.shape_cast %1 : vector<1x8x256xf32> to vector<8x256xf32>
    %c0_2 = arith.constant 0 : index
    %c0_3 = arith.constant 0 : index
    %3 = memref.load %arg2[%c0_2, %c0_3] : memref<27x6xf32, #tpu.memory_space<smem>>
    %4 = vector.broadcast %3 : f32 to vector<8x256xf32>
    %5 = arith.mulf %2, %4 : vector<8x256xf32>
    %6 = arith.addf %0, %5 : vector<8x256xf32>
    %c0_4 = arith.constant 0 : index
    %c0_5 = arith.constant 0 : index
    %c1 = arith.constant 1 : index
    %7 = vector.load %arg1[%c0_4, %c0_5, %c1] : memref<3x8x384xf32, #tpu.memory_space<vmem>>, vector<1x8x256xf32>
    %8 = vector.shape_cast %7 : vector<1x8x256xf32> to vector<8x256xf32>
    %c1_6 = arith.constant 1 : index
    %c0_7 = arith.constant 0 : index
    %9 = memref.load %arg2[%c1_6, %c0_7] : memref<27x6xf32, #tpu.memory_space<smem>>
    %10 = vector.broadcast %9 : f32 to vector<8x256xf32>
    %11 = arith.mulf %8, %10 : vector<8x256xf32>
    %12 = arith.addf %6, %11 : vector<8x256xf32>
    %c0_8 = arith.constant 0 : index
    %c0_9 = arith.constant 0 : index
    %c2 = arith.constant 2 : index
    %13 = vector.load %arg1[%c0_8, %c0_9, %c2] : memref<3x8x384xf32, #tpu.memory_space<vmem>>, vector<1x8x256xf32>
    %14 = vector.shape_cast %13 : vector<1x8x256xf32> to vector<8x256xf32>
    %c2_10 = arith.constant 2 : index
    %c0_11 = arith.constant 0 : index
    %15 = memref.load %arg2[%c2_10, %c0_11] : memref<27x6xf32, #tpu.memory_space<smem>>
    %16 = vector.broadcast %15 : f32 to vector<8x256xf32>
    %17 = arith.mulf %14, %16 : vector<8x256xf32>
    %18 = arith.addf %12, %17 : vector<8x256xf32>
    %c0_12 = arith.constant 0 : index
    %c0_13 = arith.constant 0 : index
    %c15 = arith.constant 15 : index
    %19 = vector.load %arg1[%c0_12, %c0_13, %c15] : memref<3x8x384xf32, #tpu.memory_space<vmem>>, vector<1x8x256xf32>
    %20 = vector.shape_cast %19 : vector<1x8x256xf32> to vector<8x256xf32>
    %c3 = arith.constant 3 : index
    %c0_14 = arith.constant 0 : index
    %21 = memref.load %arg2[%c3, %c0_14] : memref<27x6xf32, #tpu.memory_space<smem>>
    %22 = vector.broadcast %21 : f32 to vector<8x256xf32>
    %23 = arith.mulf %20, %22 : vector<8x256xf32>
    %24 = arith.addf %18, %23 : vector<8x256xf32>
    %c0_15 = arith.constant 0 : index
    %c0_16 = arith.constant 0 : index
    %c16 = arith.constant 16 : index
    %25 = vector.load %arg1[%c0_15, %c0_16, %c16] : memref<3x8x384xf32, #tpu.memory_space<vmem>>, vector<1x8x256xf32>
    %26 = vector.shape_cast %25 : vector<1x8x256xf32> to vector<8x256xf32>
    %c4 = arith.constant 4 : index
    %c0_17 = arith.constant 0 : index
    %27 = memref.load %arg2[%c4, %c0_17] : memref<27x6xf32, #tpu.memory_space<smem>>
    %28 = vector.broadcast %27 : f32 to vector<8x256xf32>
    %29 = arith.mulf %26, %28 : vector<8x256xf32>
    %30 = arith.addf %24, %29 : vector<8x256xf32>
    %c0_18 = arith.constant 0 : index
    %c0_19 = arith.constant 0 : index
    %c17 = arith.constant 17 : index
    %31 = vector.load %arg1[%c0_18, %c0_19, %c17] : memref<3x8x384xf32, #tpu.memory_space<vmem>>, vector<1x8x256xf32>
    %32 = vector.shape_cast %31 : vector<1x8x256xf32> to vector<8x256xf32>
    %c5 = arith.constant 5 : index
    %c0_20 = arith.constant 0 : index
    %33 = memref.load %arg2[%c5, %c0_20] : memref<27x6xf32, #tpu.memory_space<smem>>
    %34 = vector.broadcast %33 : f32 to vector<8x256xf32>
    %35 = arith.mulf %32, %34 : vector<8x256xf32>
    %36 = arith.addf %30, %35 : vector<8x256xf32>
    %c0_21 = arith.constant 0 : index
    %c0_22 = arith.constant 0 : index
    %c30 = arith.constant 30 : index
    %37 = vector.load %arg1[%c0_21, %c0_22, %c30] : memref<3x8x384xf32, #tpu.memory_space<vmem>>, vector<1x8x256xf32>
    %38 = vector.shape_cast %37 : vector<1x8x256xf32> to vector<8x256xf32>
    %c6 = arith.constant 6 : index
    %c0_23 = arith.constant 0 : index
    %39 = memref.load %arg2[%c6, %c0_23] : memref<27x6xf32, #tpu.memory_space<smem>>
    %40 = vector.broadcast %39 : f32 to vector<8x256xf32>
    %41 = arith.mulf %38, %40 : vector<8x256xf32>
    %42 = arith.addf %36, %41 : vector<8x256xf32>
    %c0_24 = arith.constant 0 : index
    %c0_25 = arith.constant 0 : index
    %c31 = arith.constant 31 : index
    %43 = vector.load %arg1[%c0_24, %c0_25, %c31] : memref<3x8x384xf32, #tpu.memory_space<vmem>>, vector<1x8x256xf32>
    %44 = vector.shape_cast %43 : vector<1x8x256xf32> to vector<8x256xf32>
    %c7 = arith.constant 7 : index
    %c0_26 = arith.constant 0 : index
    %45 = memref.load %arg2[%c7, %c0_26] : memref<27x6xf32, #tpu.memory_space<smem>>
    %46 = vector.broadcast %45 : f32 to vector<8x256xf32>
    %47 = arith.mulf %44, %46 : vector<8x256xf32>
    %48 = arith.addf %42, %47 : vector<8x256xf32>
    %c0_27 = arith.constant 0 : index
    %c0_28 = arith.constant 0 : index
    %c32 = arith.constant 32 : index
    %49 = vector.load %arg1[%c0_27, %c0_28, %c32] : memref<3x8x384xf32, #tpu.memory_space<vmem>>, vector<1x8x256xf32>
    %50 = vector.shape_cast %49 : vector<1x8x256xf32> to vector<8x256xf32>
    %c8 = arith.constant 8 : index
    %c0_29 = arith.constant 0 : index
    %51 = memref.load %arg2[%c8, %c0_29] : memref<27x6xf32, #tpu.memory_space<smem>>
    %52 = vector.broadcast %51 : f32 to vector<8x256xf32>
    %53 = arith.mulf %50, %52 : vector<8x256xf32>
    %54 = arith.addf %48, %53 : vector<8x256xf32>
    %cst_30 = arith.constant 0.000000e+00 : f32
    %55 = vector.broadcast %cst_30 : f32 to vector<8x256xf32>
    %c1_31 = arith.constant 1 : index
    %c0_32 = arith.constant 0 : index
    %c0_33 = arith.constant 0 : index
    %56 = vector.load %arg1[%c1_31, %c0_32, %c0_33] : memref<3x8x384xf32, #tpu.memory_space<vmem>>, vector<1x8x256xf32>
    %57 = vector.shape_cast %56 : vector<1x8x256xf32> to vector<8x256xf32>
    %c9 = arith.constant 9 : index
    %c0_34 = arith.constant 0 : index
    %58 = memref.load %arg2[%c9, %c0_34] : memref<27x6xf32, #tpu.memory_space<smem>>
    %59 = vector.broadcast %58 : f32 to vector<8x256xf32>
    %60 = arith.mulf %57, %59 : vector<8x256xf32>
    %61 = arith.addf %55, %60 : vector<8x256xf32>
    %c1_35 = arith.constant 1 : index
    %c0_36 = arith.constant 0 : index
    %c1_37 = arith.constant 1 : index
    %62 = vector.load %arg1[%c1_35, %c0_36, %c1_37] : memref<3x8x384xf32, #tpu.memory_space<vmem>>, vector<1x8x256xf32>
    %63 = vector.shape_cast %62 : vector<1x8x256xf32> to vector<8x256xf32>
    %c10 = arith.constant 10 : index
    %c0_38 = arith.constant 0 : index
    %64 = memref.load %arg2[%c10, %c0_38] : memref<27x6xf32, #tpu.memory_space<smem>>
    %65 = vector.broadcast %64 : f32 to vector<8x256xf32>
    %66 = arith.mulf %63, %65 : vector<8x256xf32>
    %67 = arith.addf %61, %66 : vector<8x256xf32>
    %c1_39 = arith.constant 1 : index
    %c0_40 = arith.constant 0 : index
    %c2_41 = arith.constant 2 : index
    %68 = vector.load %arg1[%c1_39, %c0_40, %c2_41] : memref<3x8x384xf32, #tpu.memory_space<vmem>>, vector<1x8x256xf32>
    %69 = vector.shape_cast %68 : vector<1x8x256xf32> to vector<8x256xf32>
    %c11 = arith.constant 11 : index
    %c0_42 = arith.constant 0 : index
    %70 = memref.load %arg2[%c11, %c0_42] : memref<27x6xf32, #tpu.memory_space<smem>>
    %71 = vector.broadcast %70 : f32 to vector<8x256xf32>
    %72 = arith.mulf %69, %71 : vector<8x256xf32>
    %73 = arith.addf %67, %72 : vector<8x256xf32>
    %c1_43 = arith.constant 1 : index
    %c0_44 = arith.constant 0 : index
    %c15_45 = arith.constant 15 : index
    %74 = vector.load %arg1[%c1_43, %c0_44, %c15_45] : memref<3x8x384xf32, #tpu.memory_space<vmem>>, vector<1x8x256xf32>
    %75 = vector.shape_cast %74 : vector<1x8x256xf32> to vector<8x256xf32>
    %c12 = arith.constant 12 : index
    %c0_46 = arith.constant 0 : index
    %76 = memref.load %arg2[%c12, %c0_46] : memref<27x6xf32, #tpu.memory_space<smem>>
    %77 = vector.broadcast %76 : f32 to vector<8x256xf32>
    %78 = arith.mulf %75, %77 : vector<8x256xf32>
    %79 = arith.addf %73, %78 : vector<8x256xf32>
    %c1_47 = arith.constant 1 : index
    %c0_48 = arith.constant 0 : index
    %c16_49 = arith.constant 16 : index
    %80 = vector.load %arg1[%c1_47, %c0_48, %c16_49] : memref<3x8x384xf32, #tpu.memory_space<vmem>>, vector<1x8x256xf32>
    %81 = vector.shape_cast %80 : vector<1x8x256xf32> to vector<8x256xf32>
    %c13 = arith.constant 13 : index
    %c0_50 = arith.constant 0 : index
    %82 = memref.load %arg2[%c13, %c0_50] : memref<27x6xf32, #tpu.memory_space<smem>>
    %83 = vector.broadcast %82 : f32 to vector<8x256xf32>
    %84 = arith.mulf %81, %83 : vector<8x256xf32>
    %85 = arith.addf %79, %84 : vector<8x256xf32>
    %c1_51 = arith.constant 1 : index
    %c0_52 = arith.constant 0 : index
    %c17_53 = arith.constant 17 : index
    %86 = vector.load %arg1[%c1_51, %c0_52, %c17_53] : memref<3x8x384xf32, #tpu.memory_space<vmem>>, vector<1x8x256xf32>
    %87 = vector.shape_cast %86 : vector<1x8x256xf32> to vector<8x256xf32>
    %c14 = arith.constant 14 : index
    %c0_54 = arith.constant 0 : index
    %88 = memref.load %arg2[%c14, %c0_54] : memref<27x6xf32, #tpu.memory_space<smem>>
    %89 = vector.broadcast %88 : f32 to vector<8x256xf32>
    %90 = arith.mulf %87, %89 : vector<8x256xf32>
    %91 = arith.addf %85, %90 : vector<8x256xf32>
    %c1_55 = arith.constant 1 : index
    %c0_56 = arith.constant 0 : index
    %c30_57 = arith.constant 30 : index
    %92 = vector.load %arg1[%c1_55, %c0_56, %c30_57] : memref<3x8x384xf32, #tpu.memory_space<vmem>>, vector<1x8x256xf32>
    %93 = vector.shape_cast %92 : vector<1x8x256xf32> to vector<8x256xf32>
    %c15_58 = arith.constant 15 : index
    %c0_59 = arith.constant 0 : index
    %94 = memref.load %arg2[%c15_58, %c0_59] : memref<27x6xf32, #tpu.memory_space<smem>>
    %95 = vector.broadcast %94 : f32 to vector<8x256xf32>
    %96 = arith.mulf %93, %95 : vector<8x256xf32>
    %97 = arith.addf %91, %96 : vector<8x256xf32>
    %c1_60 = arith.constant 1 : index
    %c0_61 = arith.constant 0 : index
    %c31_62 = arith.constant 31 : index
    %98 = vector.load %arg1[%c1_60, %c0_61, %c31_62] : memref<3x8x384xf32, #tpu.memory_space<vmem>>, vector<1x8x256xf32>
    %99 = vector.shape_cast %98 : vector<1x8x256xf32> to vector<8x256xf32>
    %c16_63 = arith.constant 16 : index
    %c0_64 = arith.constant 0 : index
    %100 = memref.load %arg2[%c16_63, %c0_64] : memref<27x6xf32, #tpu.memory_space<smem>>
    %101 = vector.broadcast %100 : f32 to vector<8x256xf32>
    %102 = arith.mulf %99, %101 : vector<8x256xf32>
    %103 = arith.addf %97, %102 : vector<8x256xf32>
    %c1_65 = arith.constant 1 : index
    %c0_66 = arith.constant 0 : index
    %c32_67 = arith.constant 32 : index
    %104 = vector.load %arg1[%c1_65, %c0_66, %c32_67] : memref<3x8x384xf32, #tpu.memory_space<vmem>>, vector<1x8x256xf32>
    %105 = vector.shape_cast %104 : vector<1x8x256xf32> to vector<8x256xf32>
    %c17_68 = arith.constant 17 : index
    %c0_69 = arith.constant 0 : index
    %106 = memref.load %arg2[%c17_68, %c0_69] : memref<27x6xf32, #tpu.memory_space<smem>>
    %107 = vector.broadcast %106 : f32 to vector<8x256xf32>
    %108 = arith.mulf %105, %107 : vector<8x256xf32>
    %109 = arith.addf %103, %108 : vector<8x256xf32>
    %cst_70 = arith.constant 0.000000e+00 : f32
    %110 = vector.broadcast %cst_70 : f32 to vector<8x256xf32>
    %c2_71 = arith.constant 2 : index
    %c0_72 = arith.constant 0 : index
    %c0_73 = arith.constant 0 : index
    %111 = vector.load %arg1[%c2_71, %c0_72, %c0_73] : memref<3x8x384xf32, #tpu.memory_space<vmem>>, vector<1x8x256xf32>
    %112 = vector.shape_cast %111 : vector<1x8x256xf32> to vector<8x256xf32>
    %c18 = arith.constant 18 : index
    %c0_74 = arith.constant 0 : index
    %113 = memref.load %arg2[%c18, %c0_74] : memref<27x6xf32, #tpu.memory_space<smem>>
    %114 = vector.broadcast %113 : f32 to vector<8x256xf32>
    %115 = arith.mulf %112, %114 : vector<8x256xf32>
    %116 = arith.addf %110, %115 : vector<8x256xf32>
    %c2_75 = arith.constant 2 : index
    %c0_76 = arith.constant 0 : index
    %c1_77 = arith.constant 1 : index
    %117 = vector.load %arg1[%c2_75, %c0_76, %c1_77] : memref<3x8x384xf32, #tpu.memory_space<vmem>>, vector<1x8x256xf32>
    %118 = vector.shape_cast %117 : vector<1x8x256xf32> to vector<8x256xf32>
    %c19 = arith.constant 19 : index
    %c0_78 = arith.constant 0 : index
    %119 = memref.load %arg2[%c19, %c0_78] : memref<27x6xf32, #tpu.memory_space<smem>>
    %120 = vector.broadcast %119 : f32 to vector<8x256xf32>
    %121 = arith.mulf %118, %120 : vector<8x256xf32>
    %122 = arith.addf %116, %121 : vector<8x256xf32>
    %c2_79 = arith.constant 2 : index
    %c0_80 = arith.constant 0 : index
    %c2_81 = arith.constant 2 : index
    %123 = vector.load %arg1[%c2_79, %c0_80, %c2_81] : memref<3x8x384xf32, #tpu.memory_space<vmem>>, vector<1x8x256xf32>
    %124 = vector.shape_cast %123 : vector<1x8x256xf32> to vector<8x256xf32>
    %c20 = arith.constant 20 : index
    %c0_82 = arith.constant 0 : index
    %125 = memref.load %arg2[%c20, %c0_82] : memref<27x6xf32, #tpu.memory_space<smem>>
    %126 = vector.broadcast %125 : f32 to vector<8x256xf32>
    %127 = arith.mulf %124, %126 : vector<8x256xf32>
    %128 = arith.addf %122, %127 : vector<8x256xf32>
    %c2_83 = arith.constant 2 : index
    %c0_84 = arith.constant 0 : index
    %c15_85 = arith.constant 15 : index
    %129 = vector.load %arg1[%c2_83, %c0_84, %c15_85] : memref<3x8x384xf32, #tpu.memory_space<vmem>>, vector<1x8x256xf32>
    %130 = vector.shape_cast %129 : vector<1x8x256xf32> to vector<8x256xf32>
    %c21 = arith.constant 21 : index
    %c0_86 = arith.constant 0 : index
    %131 = memref.load %arg2[%c21, %c0_86] : memref<27x6xf32, #tpu.memory_space<smem>>
    %132 = vector.broadcast %131 : f32 to vector<8x256xf32>
    %133 = arith.mulf %130, %132 : vector<8x256xf32>
    %134 = arith.addf %128, %133 : vector<8x256xf32>
    %c2_87 = arith.constant 2 : index
    %c0_88 = arith.constant 0 : index
    %c16_89 = arith.constant 16 : index
    %135 = vector.load %arg1[%c2_87, %c0_88, %c16_89] : memref<3x8x384xf32, #tpu.memory_space<vmem>>, vector<1x8x256xf32>
    %136 = vector.shape_cast %135 : vector<1x8x256xf32> to vector<8x256xf32>
    %c22 = arith.constant 22 : index
    %c0_90 = arith.constant 0 : index
    %137 = memref.load %arg2[%c22, %c0_90] : memref<27x6xf32, #tpu.memory_space<smem>>
    %138 = vector.broadcast %137 : f32 to vector<8x256xf32>
    %139 = arith.mulf %136, %138 : vector<8x256xf32>
    %140 = arith.addf %134, %139 : vector<8x256xf32>
    %c2_91 = arith.constant 2 : index
    %c0_92 = arith.constant 0 : index
    %c17_93 = arith.constant 17 : index
    %141 = vector.load %arg1[%c2_91, %c0_92, %c17_93] : memref<3x8x384xf32, #tpu.memory_space<vmem>>, vector<1x8x256xf32>
    %142 = vector.shape_cast %141 : vector<1x8x256xf32> to vector<8x256xf32>
    %c23 = arith.constant 23 : index
    %c0_94 = arith.constant 0 : index
    %143 = memref.load %arg2[%c23, %c0_94] : memref<27x6xf32, #tpu.memory_space<smem>>
    %144 = vector.broadcast %143 : f32 to vector<8x256xf32>
    %145 = arith.mulf %142, %144 : vector<8x256xf32>
    %146 = arith.addf %140, %145 : vector<8x256xf32>
    %c2_95 = arith.constant 2 : index
    %c0_96 = arith.constant 0 : index
    %c30_97 = arith.constant 30 : index
    %147 = vector.load %arg1[%c2_95, %c0_96, %c30_97] : memref<3x8x384xf32, #tpu.memory_space<vmem>>, vector<1x8x256xf32>
    %148 = vector.shape_cast %147 : vector<1x8x256xf32> to vector<8x256xf32>
    %c24 = arith.constant 24 : index
    %c0_98 = arith.constant 0 : index
    %149 = memref.load %arg2[%c24, %c0_98] : memref<27x6xf32, #tpu.memory_space<smem>>
    %150 = vector.broadcast %149 : f32 to vector<8x256xf32>
    %151 = arith.mulf %148, %150 : vector<8x256xf32>
    %152 = arith.addf %146, %151 : vector<8x256xf32>
    %c2_99 = arith.constant 2 : index
    %c0_100 = arith.constant 0 : index
    %c31_101 = arith.constant 31 : index
    %153 = vector.load %arg1[%c2_99, %c0_100, %c31_101] : memref<3x8x384xf32, #tpu.memory_space<vmem>>, vector<1x8x256xf32>
    %154 = vector.shape_cast %153 : vector<1x8x256xf32> to vector<8x256xf32>
    %c25 = arith.constant 25 : index
    %c0_102 = arith.constant 0 : index
    %155 = memref.load %arg2[%c25, %c0_102] : memref<27x6xf32, #tpu.memory_space<smem>>
    %156 = vector.broadcast %155 : f32 to vector<8x256xf32>
    %157 = arith.mulf %154, %156 : vector<8x256xf32>
    %158 = arith.addf %152, %157 : vector<8x256xf32>
    %c2_103 = arith.constant 2 : index
    %c0_104 = arith.constant 0 : index
    %c32_105 = arith.constant 32 : index
    %159 = vector.load %arg1[%c2_103, %c0_104, %c32_105] : memref<3x8x384xf32, #tpu.memory_space<vmem>>, vector<1x8x256xf32>
    %160 = vector.shape_cast %159 : vector<1x8x256xf32> to vector<8x256xf32>
    %c26 = arith.constant 26 : index
    %c0_106 = arith.constant 0 : index
    %161 = memref.load %arg2[%c26, %c0_106] : memref<27x6xf32, #tpu.memory_space<smem>>
    %162 = vector.broadcast %161 : f32 to vector<8x256xf32>
    %163 = arith.mulf %160, %162 : vector<8x256xf32>
    %164 = arith.addf %158, %163 : vector<8x256xf32>
    %165 = arith.addf %54, %109 : vector<8x256xf32>
    %166 = arith.addf %165, %164 : vector<8x256xf32>
    %c0_107 = arith.constant 0 : index
    %c0_108 = arith.constant 0 : index
    %167 = memref.load %arg3[%c0_107, %c0_108] : memref<1x6xf32, #tpu.memory_space<smem>>
    %168 = vector.broadcast %167 : f32 to vector<8x256xf32>
    %169 = arith.addf %166, %168 : vector<8x256xf32>
    %cst_109 = arith.constant 0.000000e+00 : f32
    %170 = vector.broadcast %cst_109 : f32 to vector<8x256xf32>
    %171 = arith.maximumf %169, %170 : vector<8x256xf32>
    %c0_110 = arith.constant 0 : index
    %c0_111 = arith.constant 0 : index
    %172 = vector.load %arg7[%c0_110, %c0_111] : memref<8x1536xf32, #tpu.memory_space<vmem>>, vector<8x256xf32>
    tpu.vector_store %arg7[%c0_110, %c0_111], %171 {strides = array<i32>} : memref<8x1536xf32, #tpu.memory_space<vmem>>, vector<8x256xf32>,
    %cst_112 = arith.constant 0.000000e+00 : f32
    %173 = vector.broadcast %cst_112 : f32 to vector<8x256xf32>
    %c0_113 = arith.constant 0 : index
    %c0_114 = arith.constant 0 : index
    %c0_115 = arith.constant 0 : index
    %174 = vector.load %arg1[%c0_113, %c0_114, %c0_115] : memref<3x8x384xf32, #tpu.memory_space<vmem>>, vector<1x8x256xf32>
    %175 = vector.shape_cast %174 : vector<1x8x256xf32> to vector<8x256xf32>
    %c0_116 = arith.constant 0 : index
    %c1_117 = arith.constant 1 : index
    %176 = memref.load %arg2[%c0_116, %c1_117] : memref<27x6xf32, #tpu.memory_space<smem>>
    %177 = vector.broadcast %176 : f32 to vector<8x256xf32>
    %178 = arith.mulf %175, %177 : vector<8x256xf32>
    %179 = arith.addf %173, %178 : vector<8x256xf32>
    %c0_118 = arith.constant 0 : index
    %c0_119 = arith.constant 0 : index
    %c1_120 = arith.constant 1 : index
    %180 = vector.load %arg1[%c0_118, %c0_119, %c1_120] : memref<3x8x384xf32, #tpu.memory_space<vmem>>, vector<1x8x256xf32>
    %181 = vector.shape_cast %180 : vector<1x8x256xf32> to vector<8x256xf32>
    %c1_121 = arith.constant 1 : index
    %c1_122 = arith.constant 1 : index
    %182 = memref.load %arg2[%c1_121, %c1_122] : memref<27x6xf32, #tpu.memory_space<smem>>
    %183 = vector.broadcast %182 : f32 to vector<8x256xf32>
    %184 = arith.mulf %181, %183 : vector<8x256xf32>
    %185 = arith.addf %179, %184 : vector<8x256xf32>
    %c0_123 = arith.constant 0 : index
    %c0_124 = arith.constant 0 : index
    %c2_125 = arith.constant 2 : index
    %186 = vector.load %arg1[%c0_123, %c0_124, %c2_125] : memref<3x8x384xf32, #tpu.memory_space<vmem>>, vector<1x8x256xf32>
    %187 = vector.shape_cast %186 : vector<1x8x256xf32> to vector<8x256xf32>
    %c2_126 = arith.constant 2 : index
    %c1_127 = arith.constant 1 : index
    %188 = memref.load %arg2[%c2_126, %c1_127] : memref<27x6xf32, #tpu.memory_space<smem>>
    %189 = vector.broadcast %188 : f32 to vector<8x256xf32>
    %190 = arith.mulf %187, %189 : vector<8x256xf32>
    %191 = arith.addf %185, %190 : vector<8x256xf32>
    %c0_128 = arith.constant 0 : index
    %c0_129 = arith.constant 0 : index
    %c15_130 = arith.constant 15 : index
    %192 = vector.load %arg1[%c0_128, %c0_129, %c15_130] : memref<3x8x384xf32, #tpu.memory_space<vmem>>, vector<1x8x256xf32>
    %193 = vector.shape_cast %192 : vector<1x8x256xf32> to vector<8x256xf32>
    %c3_131 = arith.constant 3 : index
    %c1_132 = arith.constant 1 : index
    %194 = memref.load %arg2[%c3_131, %c1_132] : memref<27x6xf32, #tpu.memory_space<smem>>
    %195 = vector.broadcast %194 : f32 to vector<8x256xf32>
    %196 = arith.mulf %193, %195 : vector<8x256xf32>
    %197 = arith.addf %191, %196 : vector<8x256xf32>
    %c0_133 = arith.constant 0 : index
    %c0_134 = arith.constant 0 : index
    %c16_135 = arith.constant 16 : index
    %198 = vector.load %arg1[%c0_133, %c0_134, %c16_135] : memref<3x8x384xf32, #tpu.memory_space<vmem>>, vector<1x8x256xf32>
    %199 = vector.shape_cast %198 : vector<1x8x256xf32> to vector<8x256xf32>
    %c4_136 = arith.constant 4 : index
    %c1_137 = arith.constant 1 : index
    %200 = memref.load %arg2[%c4_136, %c1_137] : memref<27x6xf32, #tpu.memory_space<smem>>
    %201 = vector.broadcast %200 : f32 to vector<8x256xf32>
    %202 = arith.mulf %199, %201 : vector<8x256xf32>
    %203 = arith.addf %197, %202 : vector<8x256xf32>
    %c0_138 = arith.constant 0 : index
    %c0_139 = arith.constant 0 : index
    %c17_140 = arith.constant 17 : index
    %204 = vector.load %arg1[%c0_138, %c0_139, %c17_140] : memref<3x8x384xf32, #tpu.memory_space<vmem>>, vector<1x8x256xf32>
    %205 = vector.shape_cast %204 : vector<1x8x256xf32> to vector<8x256xf32>
    %c5_141 = arith.constant 5 : index
    %c1_142 = arith.constant 1 : index
    %206 = memref.load %arg2[%c5_141, %c1_142] : memref<27x6xf32, #tpu.memory_space<smem>>
    %207 = vector.broadcast %206 : f32 to vector<8x256xf32>
    %208 = arith.mulf %205, %207 : vector<8x256xf32>
    %209 = arith.addf %203, %208 : vector<8x256xf32>
    %c0_143 = arith.constant 0 : index
    %c0_144 = arith.constant 0 : index
    %c30_145 = arith.constant 30 : index
    %210 = vector.load %arg1[%c0_143, %c0_144, %c30_145] : memref<3x8x384xf32, #tpu.memory_space<vmem>>, vector<1x8x256xf32>
    %211 = vector.shape_cast %210 : vector<1x8x256xf32> to vector<8x256xf32>
    %c6_146 = arith.constant 6 : index
    %c1_147 = arith.constant 1 : index
    %212 = memref.load %arg2[%c6_146, %c1_147] : memref<27x6xf32, #tpu.memory_space<smem>>
    %213 = vector.broadcast %212 : f32 to vector<8x256xf32>
    %214 = arith.mulf %211, %213 : vector<8x256xf32>
    %215 = arith.addf %209, %214 : vector<8x256xf32>
    %c0_148 = arith.constant 0 : index
    %c0_149 = arith.constant 0 : index
    %c31_150 = arith.constant 31 : index
    %216 = vector.load %arg1[%c0_148, %c0_149, %c31_150] : memref<3x8x384xf32, #tpu.memory_space<vmem>>, vector<1x8x256xf32>
    %217 = vector.shape_cast %216 : vector<1x8x256xf32> to vector<8x256xf32>
    %c7_151 = arith.constant 7 : index
    %c1_152 = arith.constant 1 : index
    %218 = memref.load %arg2[%c7_151, %c1_152] : memref<27x6xf32, #tpu.memory_space<smem>>
    %219 = vector.broadcast %218 : f32 to vector<8x256xf32>
    %220 = arith.mulf %217, %219 : vector<8x256xf32>
    %221 = arith.addf %215, %220 : vector<8x256xf32>
    %c0_153 = arith.constant 0 : index
    %c0_154 = arith.constant 0 : index
    %c32_155 = arith.constant 32 : index
    %222 = vector.load %arg1[%c0_153, %c0_154, %c32_155] : memref<3x8x384xf32, #tpu.memory_space<vmem>>, vector<1x8x256xf32>
    %223 = vector.shape_cast %222 : vector<1x8x256xf32> to vector<8x256xf32>
    %c8_156 = arith.constant 8 : index
    %c1_157 = arith.constant 1 : index
    %224 = memref.load %arg2[%c8_156, %c1_157] : memref<27x6xf32, #tpu.memory_space<smem>>
    %225 = vector.broadcast %224 : f32 to vector<8x256xf32>
    %226 = arith.mulf %223, %225 : vector<8x256xf32>
    %227 = arith.addf %221, %226 : vector<8x256xf32>
    %cst_158 = arith.constant 0.000000e+00 : f32
    %228 = vector.broadcast %cst_158 : f32 to vector<8x256xf32>
    %c1_159 = arith.constant 1 : index
    %c0_160 = arith.constant 0 : index
    %c0_161 = arith.constant 0 : index
    %229 = vector.load %arg1[%c1_159, %c0_160, %c0_161] : memref<3x8x384xf32, #tpu.memory_space<vmem>>, vector<1x8x256xf32>
    %230 = vector.shape_cast %229 : vector<1x8x256xf32> to vector<8x256xf32>
    %c9_162 = arith.constant 9 : index
    %c1_163 = arith.constant 1 : index
    %231 = memref.load %arg2[%c9_162, %c1_163] : memref<27x6xf32, #tpu.memory_space<smem>>
    %232 = vector.broadcast %231 : f32 to vector<8x256xf32>
    %233 = arith.mulf %230, %232 : vector<8x256xf32>
    %234 = arith.addf %228, %233 : vector<8x256xf32>
    %c1_164 = arith.constant 1 : index
    %c0_165 = arith.constant 0 : index
    %c1_166 = arith.constant 1 : index
    %235 = vector.load %arg1[%c1_164, %c0_165, %c1_166] : memref<3x8x384xf32, #tpu.memory_space<vmem>>, vector<1x8x256xf32>
    %236 = vector.shape_cast %235 : vector<1x8x256xf32> to vector<8x256xf32>
    %c10_167 = arith.constant 10 : index
    %c1_168 = arith.constant 1 : index
    %237 = memref.load %arg2[%c10_167, %c1_168] : memref<27x6xf32, #tpu.memory_space<smem>>
    %238 = vector.broadcast %237 : f32 to vector<8x256xf32>
    %239 = arith.mulf %236, %238 : vector<8x256xf32>
    %240 = arith.addf %234, %239 : vector<8x256xf32>
    %c1_169 = arith.constant 1 : index
    %c0_170 = arith.constant 0 : index
    %c2_171 = arith.constant 2 : index
    %241 = vector.load %arg1[%c1_169, %c0_170, %c2_171] : memref<3x8x384xf32, #tpu.memory_space<vmem>>, vector<1x8x256xf32>
    %242 = vector.shape_cast %241 : vector<1x8x256xf32> to vector<8x256xf32>
    %c11_172 = arith.constant 11 : index
    %c1_173 = arith.constant 1 : index
    %243 = memref.load %arg2[%c11_172, %c1_173] : memref<27x6xf32, #tpu.memory_space<smem>>
    %244 = vector.broadcast %243 : f32 to vector<8x256xf32>
    %245 = arith.mulf %242, %244 : vector<8x256xf32>
    %246 = arith.addf %240, %245 : vector<8x256xf32>
    %c1_174 = arith.constant 1 : index
    %c0_175 = arith.constant 0 : index
    %c15_176 = arith.constant 15 : index
    %247 = vector.load %arg1[%c1_174, %c0_175, %c15_176] : memref<3x8x384xf32, #tpu.memory_space<vmem>>, vector<1x8x256xf32>
    %248 = vector.shape_cast %247 : vector<1x8x256xf32> to vector<8x256xf32>
    %c12_177 = arith.constant 12 : index
    %c1_178 = arith.constant 1 : index
    %249 = memref.load %arg2[%c12_177, %c1_178] : memref<27x6xf32, #tpu.memory_space<smem>>
    %250 = vector.broadcast %249 : f32 to vector<8x256xf32>
    %251 = arith.mulf %248, %250 : vector<8x256xf32>
    %252 = arith.addf %246, %251 : vector<8x256xf32>
    %c1_179 = arith.constant 1 : index
    %c0_180 = arith.constant 0 : index
    %c16_181 = arith.constant 16 : index
    %253 = vector.load %arg1[%c1_179, %c0_180, %c16_181] : memref<3x8x384xf32, #tpu.memory_space<vmem>>, vector<1x8x256xf32>
    %254 = vector.shape_cast %253 : vector<1x8x256xf32> to vector<8x256xf32>
    %c13_182 = arith.constant 13 : index
    %c1_183 = arith.constant 1 : index
    %255 = memref.load %arg2[%c13_182, %c1_183] : memref<27x6xf32, #tpu.memory_space<smem>>
    %256 = vector.broadcast %255 : f32 to vector<8x256xf32>
    %257 = arith.mulf %254, %256 : vector<8x256xf32>
    %258 = arith.addf %252, %257 : vector<8x256xf32>
    %c1_184 = arith.constant 1 : index
    %c0_185 = arith.constant 0 : index
    %c17_186 = arith.constant 17 : index
    %259 = vector.load %arg1[%c1_184, %c0_185, %c17_186] : memref<3x8x384xf32, #tpu.memory_space<vmem>>, vector<1x8x256xf32>
    %260 = vector.shape_cast %259 : vector<1x8x256xf32> to vector<8x256xf32>
    %c14_187 = arith.constant 14 : index
    %c1_188 = arith.constant 1 : index
    %261 = memref.load %arg2[%c14_187, %c1_188] : memref<27x6xf32, #tpu.memory_space<smem>>
    %262 = vector.broadcast %261 : f32 to vector<8x256xf32>
    %263 = arith.mulf %260, %262 : vector<8x256xf32>
    %264 = arith.addf %258, %263 : vector<8x256xf32>
    %c1_189 = arith.constant 1 : index
    %c0_190 = arith.constant 0 : index
    %c30_191 = arith.constant 30 : index
    %265 = vector.load %arg1[%c1_189, %c0_190, %c30_191] : memref<3x8x384xf32, #tpu.memory_space<vmem>>, vector<1x8x256xf32>
    %266 = vector.shape_cast %265 : vector<1x8x256xf32> to vector<8x256xf32>
    %c15_192 = arith.constant 15 : index
    %c1_193 = arith.constant 1 : index
    %267 = memref.load %arg2[%c15_192, %c1_193] : memref<27x6xf32, #tpu.memory_space<smem>>
    %268 = vector.broadcast %267 : f32 to vector<8x256xf32>
    %269 = arith.mulf %266, %268 : vector<8x256xf32>
    %270 = arith.addf %264, %269 : vector<8x256xf32>
    %c1_194 = arith.constant 1 : index
    %c0_195 = arith.constant 0 : index
    %c31_196 = arith.constant 31 : index
    %271 = vector.load %arg1[%c1_194, %c0_195, %c31_196] : memref<3x8x384xf32, #tpu.memory_space<vmem>>, vector<1x8x256xf32>
    %272 = vector.shape_cast %271 : vector<1x8x256xf32> to vector<8x256xf32>
    %c16_197 = arith.constant 16 : index
    %c1_198 = arith.constant 1 : index
    %273 = memref.load %arg2[%c16_197, %c1_198] : memref<27x6xf32, #tpu.memory_space<smem>>
    %274 = vector.broadcast %273 : f32 to vector<8x256xf32>
    %275 = arith.mulf %272, %274 : vector<8x256xf32>
    %276 = arith.addf %270, %275 : vector<8x256xf32>
    %c1_199 = arith.constant 1 : index
    %c0_200 = arith.constant 0 : index
    %c32_201 = arith.constant 32 : index
    %277 = vector.load %arg1[%c1_199, %c0_200, %c32_201] : memref<3x8x384xf32, #tpu.memory_space<vmem>>, vector<1x8x256xf32>
    %278 = vector.shape_cast %277 : vector<1x8x256xf32> to vector<8x256xf32>
    %c17_202 = arith.constant 17 : index
    %c1_203 = arith.constant 1 : index
    %279 = memref.load %arg2[%c17_202, %c1_203] : memref<27x6xf32, #tpu.memory_space<smem>>
    %280 = vector.broadcast %279 : f32 to vector<8x256xf32>
    %281 = arith.mulf %278, %280 : vector<8x256xf32>
    %282 = arith.addf %276, %281 : vector<8x256xf32>
    %cst_204 = arith.constant 0.000000e+00 : f32
    %283 = vector.broadcast %cst_204 : f32 to vector<8x256xf32>
    %c2_205 = arith.constant 2 : index
    %c0_206 = arith.constant 0 : index
    %c0_207 = arith.constant 0 : index
    %284 = vector.load %arg1[%c2_205, %c0_206, %c0_207] : memref<3x8x384xf32, #tpu.memory_space<vmem>>, vector<1x8x256xf32>
    %285 = vector.shape_cast %284 : vector<1x8x256xf32> to vector<8x256xf32>
    %c18_208 = arith.constant 18 : index
    %c1_209 = arith.constant 1 : index
    %286 = memref.load %arg2[%c18_208, %c1_209] : memref<27x6xf32, #tpu.memory_space<smem>>
    %287 = vector.broadcast %286 : f32 to vector<8x256xf32>
    %288 = arith.mulf %285, %287 : vector<8x256xf32>
    %289 = arith.addf %283, %288 : vector<8x256xf32>
    %c2_210 = arith.constant 2 : index
    %c0_211 = arith.constant 0 : index
    %c1_212 = arith.constant 1 : index
    %290 = vector.load %arg1[%c2_210, %c0_211, %c1_212] : memref<3x8x384xf32, #tpu.memory_space<vmem>>, vector<1x8x256xf32>
    %291 = vector.shape_cast %290 : vector<1x8x256xf32> to vector<8x256xf32>
    %c19_213 = arith.constant 19 : index
    %c1_214 = arith.constant 1 : index
    %292 = memref.load %arg2[%c19_213, %c1_214] : memref<27x6xf32, #tpu.memory_space<smem>>
    %293 = vector.broadcast %292 : f32 to vector<8x256xf32>
    %294 = arith.mulf %291, %293 : vector<8x256xf32>
    %295 = arith.addf %289, %294 : vector<8x256xf32>
    %c2_215 = arith.constant 2 : index
    %c0_216 = arith.constant 0 : index
    %c2_217 = arith.constant 2 : index
    %296 = vector.load %arg1[%c2_215, %c0_216, %c2_217] : memref<3x8x384xf32, #tpu.memory_space<vmem>>, vector<1x8x256xf32>
    %297 = vector.shape_cast %296 : vector<1x8x256xf32> to vector<8x256xf32>
    %c20_218 = arith.constant 20 : index
    %c1_219 = arith.constant 1 : index
    %298 = memref.load %arg2[%c20_218, %c1_219] : memref<27x6xf32, #tpu.memory_space<smem>>
    %299 = vector.broadcast %298 : f32 to vector<8x256xf32>
    %300 = arith.mulf %297, %299 : vector<8x256xf32>
    %301 = arith.addf %295, %300 : vector<8x256xf32>
    %c2_220 = arith.constant 2 : index
    %c0_221 = arith.constant 0 : index
    %c15_222 = arith.constant 15 : index
    %302 = vector.load %arg1[%c2_220, %c0_221, %c15_222] : memref<3x8x384xf32, #tpu.memory_space<vmem>>, vector<1x8x256xf32>
    %303 = vector.shape_cast %302 : vector<1x8x256xf32> to vector<8x256xf32>
    %c21_223 = arith.constant 21 : index
    %c1_224 = arith.constant 1 : index
    %304 = memref.load %arg2[%c21_223, %c1_224] : memref<27x6xf32, #tpu.memory_space<smem>>
    %305 = vector.broadcast %304 : f32 to vector<8x256xf32>
    %306 = arith.mulf %303, %305 : vector<8x256xf32>
    %307 = arith.addf %301, %306 : vector<8x256xf32>
    %c2_225 = arith.constant 2 : index
    %c0_226 = arith.constant 0 : index
    %c16_227 = arith.constant 16 : index
    %308 = vector.load %arg1[%c2_225, %c0_226, %c16_227] : memref<3x8x384xf32, #tpu.memory_space<vmem>>, vector<1x8x256xf32>
    %309 = vector.shape_cast %308 : vector<1x8x256xf32> to vector<8x256xf32>
    %c22_228 = arith.constant 22 : index
    %c1_229 = arith.constant 1 : index
    %310 = memref.load %arg2[%c22_228, %c1_229] : memref<27x6xf32, #tpu.memory_space<smem>>
    %311 = vector.broadcast %310 : f32 to vector<8x256xf32>
    %312 = arith.mulf %309, %311 : vector<8x256xf32>
    %313 = arith.addf %307, %312 : vector<8x256xf32>
    %c2_230 = arith.constant 2 : index
    %c0_231 = arith.constant 0 : index
    %c17_232 = arith.constant 17 : index
    %314 = vector.load %arg1[%c2_230, %c0_231, %c17_232] : memref<3x8x384xf32, #tpu.memory_space<vmem>>, vector<1x8x256xf32>
    %315 = vector.shape_cast %314 : vector<1x8x256xf32> to vector<8x256xf32>
    %c23_233 = arith.constant 23 : index
    %c1_234 = arith.constant 1 : index
    %316 = memref.load %arg2[%c23_233, %c1_234] : memref<27x6xf32, #tpu.memory_space<smem>>
    %317 = vector.broadcast %316 : f32 to vector<8x256xf32>
    %318 = arith.mulf %315, %317 : vector<8x256xf32>
    %319 = arith.addf %313, %318 : vector<8x256xf32>
    %c2_235 = arith.constant 2 : index
    %c0_236 = arith.constant 0 : index
    %c30_237 = arith.constant 30 : index
    %320 = vector.load %arg1[%c2_235, %c0_236, %c30_237] : memref<3x8x384xf32, #tpu.memory_space<vmem>>, vector<1x8x256xf32>
    %321 = vector.shape_cast %320 : vector<1x8x256xf32> to vector<8x256xf32>
    %c24_238 = arith.constant 24 : index
    %c1_239 = arith.constant 1 : index
    %322 = memref.load %arg2[%c24_238, %c1_239] : memref<27x6xf32, #tpu.memory_space<smem>>
    %323 = vector.broadcast %322 : f32 to vector<8x256xf32>
    %324 = arith.mulf %321, %323 : vector<8x256xf32>
    %325 = arith.addf %319, %324 : vector<8x256xf32>
    %c2_240 = arith.constant 2 : index
    %c0_241 = arith.constant 0 : index
    %c31_242 = arith.constant 31 : index
    %326 = vector.load %arg1[%c2_240, %c0_241, %c31_242] : memref<3x8x384xf32, #tpu.memory_space<vmem>>, vector<1x8x256xf32>
    %327 = vector.shape_cast %326 : vector<1x8x256xf32> to vector<8x256xf32>
    %c25_243 = arith.constant 25 : index
    %c1_244 = arith.constant 1 : index
    %328 = memref.load %arg2[%c25_243, %c1_244] : memref<27x6xf32, #tpu.memory_space<smem>>
    %329 = vector.broadcast %328 : f32 to vector<8x256xf32>
    %330 = arith.mulf %327, %329 : vector<8x256xf32>
    %331 = arith.addf %325, %330 : vector<8x256xf32>
    %c2_245 = arith.constant 2 : index
    %c0_246 = arith.constant 0 : index
    %c32_247 = arith.constant 32 : index
    %332 = vector.load %arg1[%c2_245, %c0_246, %c32_247] : memref<3x8x384xf32, #tpu.memory_space<vmem>>, vector<1x8x256xf32>
    %333 = vector.shape_cast %332 : vector<1x8x256xf32> to vector<8x256xf32>
    %c26_248 = arith.constant 26 : index
    %c1_249 = arith.constant 1 : index
    %334 = memref.load %arg2[%c26_248, %c1_249] : memref<27x6xf32, #tpu.memory_space<smem>>
    %335 = vector.broadcast %334 : f32 to vector<8x256xf32>
    %336 = arith.mulf %333, %335 : vector<8x256xf32>
    %337 = arith.addf %331, %336 : vector<8x256xf32>
    %338 = arith.addf %227, %282 : vector<8x256xf32>
    %339 = arith.addf %338, %337 : vector<8x256xf32>
    %c0_250 = arith.constant 0 : index
    %c1_251 = arith.constant 1 : index
    %340 = memref.load %arg3[%c0_250, %c1_251] : memref<1x6xf32, #tpu.memory_space<smem>>
    %341 = vector.broadcast %340 : f32 to vector<8x256xf32>
    %342 = arith.addf %339, %341 : vector<8x256xf32>
    %cst_252 = arith.constant 0.000000e+00 : f32
    %343 = vector.broadcast %cst_252 : f32 to vector<8x256xf32>
    %344 = arith.maximumf %342, %343 : vector<8x256xf32>
    %c0_253 = arith.constant 0 : index
    %c256 = arith.constant 256 : index
    %345 = vector.load %arg7[%c0_253, %c256] : memref<8x1536xf32, #tpu.memory_space<vmem>>, vector<8x256xf32>
    tpu.vector_store %arg7[%c0_253, %c256], %344 {strides = array<i32>} : memref<8x1536xf32, #tpu.memory_space<vmem>>, vector<8x256xf32>,
    %cst_254 = arith.constant 0.000000e+00 : f32
    %346 = vector.broadcast %cst_254 : f32 to vector<8x256xf32>
    %c0_255 = arith.constant 0 : index
    %c0_256 = arith.constant 0 : index
    %c0_257 = arith.constant 0 : index
    %347 = vector.load %arg1[%c0_255, %c0_256, %c0_257] : memref<3x8x384xf32, #tpu.memory_space<vmem>>, vector<1x8x256xf32>
    %348 = vector.shape_cast %347 : vector<1x8x256xf32> to vector<8x256xf32>
    %c0_258 = arith.constant 0 : index
    %c2_259 = arith.constant 2 : index
    %349 = memref.load %arg2[%c0_258, %c2_259] : memref<27x6xf32, #tpu.memory_space<smem>>
    %350 = vector.broadcast %349 : f32 to vector<8x256xf32>
    %351 = arith.mulf %348, %350 : vector<8x256xf32>
    %352 = arith.addf %346, %351 : vector<8x256xf32>
    %c0_260 = arith.constant 0 : index
    %c0_261 = arith.constant 0 : index
    %c1_262 = arith.constant 1 : index
    %353 = vector.load %arg1[%c0_260, %c0_261, %c1_262] : memref<3x8x384xf32, #tpu.memory_space<vmem>>, vector<1x8x256xf32>
    %354 = vector.shape_cast %353 : vector<1x8x256xf32> to vector<8x256xf32>
    %c1_263 = arith.constant 1 : index
    %c2_264 = arith.constant 2 : index
    %355 = memref.load %arg2[%c1_263, %c2_264] : memref<27x6xf32, #tpu.memory_space<smem>>
    %356 = vector.broadcast %355 : f32 to vector<8x256xf32>
    %357 = arith.mulf %354, %356 : vector<8x256xf32>
    %358 = arith.addf %352, %357 : vector<8x256xf32>
    %c0_265 = arith.constant 0 : index
    %c0_266 = arith.constant 0 : index
    %c2_267 = arith.constant 2 : index
    %359 = vector.load %arg1[%c0_265, %c0_266, %c2_267] : memref<3x8x384xf32, #tpu.memory_space<vmem>>, vector<1x8x256xf32>
    %360 = vector.shape_cast %359 : vector<1x8x256xf32> to vector<8x256xf32>
    %c2_268 = arith.constant 2 : index
    %c2_269 = arith.constant 2 : index
    %361 = memref.load %arg2[%c2_268, %c2_269] : memref<27x6xf32, #tpu.memory_space<smem>>
    %362 = vector.broadcast %361 : f32 to vector<8x256xf32>
    %363 = arith.mulf %360, %362 : vector<8x256xf32>
    %364 = arith.addf %358, %363 : vector<8x256xf32>
    %c0_270 = arith.constant 0 : index
    %c0_271 = arith.constant 0 : index
    %c15_272 = arith.constant 15 : index
    %365 = vector.load %arg1[%c0_270, %c0_271, %c15_272] : memref<3x8x384xf32, #tpu.memory_space<vmem>>, vector<1x8x256xf32>
    %366 = vector.shape_cast %365 : vector<1x8x256xf32> to vector<8x256xf32>
    %c3_273 = arith.constant 3 : index
    %c2_274 = arith.constant 2 : index
    %367 = memref.load %arg2[%c3_273, %c2_274] : memref<27x6xf32, #tpu.memory_space<smem>>
    %368 = vector.broadcast %367 : f32 to vector<8x256xf32>
    %369 = arith.mulf %366, %368 : vector<8x256xf32>
    %370 = arith.addf %364, %369 : vector<8x256xf32>
    %c0_275 = arith.constant 0 : index
    %c0_276 = arith.constant 0 : index
    %c16_277 = arith.constant 16 : index
    %371 = vector.load %arg1[%c0_275, %c0_276, %c16_277] : memref<3x8x384xf32, #tpu.memory_space<vmem>>, vector<1x8x256xf32>
    %372 = vector.shape_cast %371 : vector<1x8x256xf32> to vector<8x256xf32>
    %c4_278 = arith.constant 4 : index
    %c2_279 = arith.constant 2 : index
    %373 = memref.load %arg2[%c4_278, %c2_279] : memref<27x6xf32, #tpu.memory_space<smem>>
    %374 = vector.broadcast %373 : f32 to vector<8x256xf32>
    %375 = arith.mulf %372, %374 : vector<8x256xf32>
    %376 = arith.addf %370, %375 : vector<8x256xf32>
    %c0_280 = arith.constant 0 : index
    %c0_281 = arith.constant 0 : index
    %c17_282 = arith.constant 17 : index
    %377 = vector.load %arg1[%c0_280, %c0_281, %c17_282] : memref<3x8x384xf32, #tpu.memory_space<vmem>>, vector<1x8x256xf32>
    %378 = vector.shape_cast %377 : vector<1x8x256xf32> to vector<8x256xf32>
    %c5_283 = arith.constant 5 : index
    %c2_284 = arith.constant 2 : index
    %379 = memref.load %arg2[%c5_283, %c2_284] : memref<27x6xf32, #tpu.memory_space<smem>>
    %380 = vector.broadcast %379 : f32 to vector<8x256xf32>
    %381 = arith.mulf %378, %380 : vector<8x256xf32>
    %382 = arith.addf %376, %381 : vector<8x256xf32>
    %c0_285 = arith.constant 0 : index
    %c0_286 = arith.constant 0 : index
    %c30_287 = arith.constant 30 : index
    %383 = vector.load %arg1[%c0_285, %c0_286, %c30_287] : memref<3x8x384xf32, #tpu.memory_space<vmem>>, vector<1x8x256xf32>
    %384 = vector.shape_cast %383 : vector<1x8x256xf32> to vector<8x256xf32>
    %c6_288 = arith.constant 6 : index
    %c2_289 = arith.constant 2 : index
    %385 = memref.load %arg2[%c6_288, %c2_289] : memref<27x6xf32, #tpu.memory_space<smem>>
    %386 = vector.broadcast %385 : f32 to vector<8x256xf32>
    %387 = arith.mulf %384, %386 : vector<8x256xf32>
    %388 = arith.addf %382, %387 : vector<8x256xf32>
    %c0_290 = arith.constant 0 : index
    %c0_291 = arith.constant 0 : index
    %c31_292 = arith.constant 31 : index
    %389 = vector.load %arg1[%c0_290, %c0_291, %c31_292] : memref<3x8x384xf32, #tpu.memory_space<vmem>>, vector<1x8x256xf32>
    %390 = vector.shape_cast %389 : vector<1x8x256xf32> to vector<8x256xf32>
    %c7_293 = arith.constant 7 : index
    %c2_294 = arith.constant 2 : index
    %391 = memref.load %arg2[%c7_293, %c2_294] : memref<27x6xf32, #tpu.memory_space<smem>>
    %392 = vector.broadcast %391 : f32 to vector<8x256xf32>
    %393 = arith.mulf %390, %392 : vector<8x256xf32>
    %394 = arith.addf %388, %393 : vector<8x256xf32>
    %c0_295 = arith.constant 0 : index
    %c0_296 = arith.constant 0 : index
    %c32_297 = arith.constant 32 : index
    %395 = vector.load %arg1[%c0_295, %c0_296, %c32_297] : memref<3x8x384xf32, #tpu.memory_space<vmem>>, vector<1x8x256xf32>
    %396 = vector.shape_cast %395 : vector<1x8x256xf32> to vector<8x256xf32>
    %c8_298 = arith.constant 8 : index
    %c2_299 = arith.constant 2 : index
    %397 = memref.load %arg2[%c8_298, %c2_299] : memref<27x6xf32, #tpu.memory_space<smem>>
    %398 = vector.broadcast %397 : f32 to vector<8x256xf32>
    %399 = arith.mulf %396, %398 : vector<8x256xf32>
    %400 = arith.addf %394, %399 : vector<8x256xf32>
    %cst_300 = arith.constant 0.000000e+00 : f32
    %401 = vector.broadcast %cst_300 : f32 to vector<8x256xf32>
    %c1_301 = arith.constant 1 : index
    %c0_302 = arith.constant 0 : index
    %c0_303 = arith.constant 0 : index
    %402 = vector.load %arg1[%c1_301, %c0_302, %c0_303] : memref<3x8x384xf32, #tpu.memory_space<vmem>>, vector<1x8x256xf32>
    %403 = vector.shape_cast %402 : vector<1x8x256xf32> to vector<8x256xf32>
    %c9_304 = arith.constant 9 : index
    %c2_305 = arith.constant 2 : index
    %404 = memref.load %arg2[%c9_304, %c2_305] : memref<27x6xf32, #tpu.memory_space<smem>>
    %405 = vector.broadcast %404 : f32 to vector<8x256xf32>
    %406 = arith.mulf %403, %405 : vector<8x256xf32>
    %407 = arith.addf %401, %406 : vector<8x256xf32>
    %c1_306 = arith.constant 1 : index
    %c0_307 = arith.constant 0 : index
    %c1_308 = arith.constant 1 : index
    %408 = vector.load %arg1[%c1_306, %c0_307, %c1_308] : memref<3x8x384xf32, #tpu.memory_space<vmem>>, vector<1x8x256xf32>
    %409 = vector.shape_cast %408 : vector<1x8x256xf32> to vector<8x256xf32>
    %c10_309 = arith.constant 10 : index
    %c2_310 = arith.constant 2 : index
    %410 = memref.load %arg2[%c10_309, %c2_310] : memref<27x6xf32, #tpu.memory_space<smem>>
    %411 = vector.broadcast %410 : f32 to vector<8x256xf32>
    %412 = arith.mulf %409, %411 : vector<8x256xf32>
    %413 = arith.addf %407, %412 : vector<8x256xf32>
    %c1_311 = arith.constant 1 : index
    %c0_312 = arith.constant 0 : index
    %c2_313 = arith.constant 2 : index
    %414 = vector.load %arg1[%c1_311, %c0_312, %c2_313] : memref<3x8x384xf32, #tpu.memory_space<vmem>>, vector<1x8x256xf32>
    %415 = vector.shape_cast %414 : vector<1x8x256xf32> to vector<8x256xf32>
    %c11_314 = arith.constant 11 : index
    %c2_315 = arith.constant 2 : index
    %416 = memref.load %arg2[%c11_314, %c2_315] : memref<27x6xf32, #tpu.memory_space<smem>>
    %417 = vector.broadcast %416 : f32 to vector<8x256xf32>
    %418 = arith.mulf %415, %417 : vector<8x256xf32>
    %419 = arith.addf %413, %418 : vector<8x256xf32>
    %c1_316 = arith.constant 1 : index
    %c0_317 = arith.constant 0 : index
    %c15_318 = arith.constant 15 : index
    %420 = vector.load %arg1[%c1_316, %c0_317, %c15_318] : memref<3x8x384xf32, #tpu.memory_space<vmem>>, vector<1x8x256xf32>
    %421 = vector.shape_cast %420 : vector<1x8x256xf32> to vector<8x256xf32>
    %c12_319 = arith.constant 12 : index
    %c2_320 = arith.constant 2 : index
    %422 = memref.load %arg2[%c12_319, %c2_320] : memref<27x6xf32, #tpu.memory_space<smem>>
    %423 = vector.broadcast %422 : f32 to vector<8x256xf32>
    %424 = arith.mulf %421, %423 : vector<8x256xf32>
    %425 = arith.addf %419, %424 : vector<8x256xf32>
    %c1_321 = arith.constant 1 : index
    %c0_322 = arith.constant 0 : index
    %c16_323 = arith.constant 16 : index
    %426 = vector.load %arg1[%c1_321, %c0_322, %c16_323] : memref<3x8x384xf32, #tpu.memory_space<vmem>>, vector<1x8x256xf32>
    %427 = vector.shape_cast %426 : vector<1x8x256xf32> to vector<8x256xf32>
    %c13_324 = arith.constant 13 : index
    %c2_325 = arith.constant 2 : index
    %428 = memref.load %arg2[%c13_324, %c2_325] : memref<27x6xf32, #tpu.memory_space<smem>>
    %429 = vector.broadcast %428 : f32 to vector<8x256xf32>
    %430 = arith.mulf %427, %429 : vector<8x256xf32>
    %431 = arith.addf %425, %430 : vector<8x256xf32>
    %c1_326 = arith.constant 1 : index
    %c0_327 = arith.constant 0 : index
    %c17_328 = arith.constant 17 : index
    %432 = vector.load %arg1[%c1_326, %c0_327, %c17_328] : memref<3x8x384xf32, #tpu.memory_space<vmem>>, vector<1x8x256xf32>
    %433 = vector.shape_cast %432 : vector<1x8x256xf32> to vector<8x256xf32>
    %c14_329 = arith.constant 14 : index
    %c2_330 = arith.constant 2 : index
    %434 = memref.load %arg2[%c14_329, %c2_330] : memref<27x6xf32, #tpu.memory_space<smem>>
    %435 = vector.broadcast %434 : f32 to vector<8x256xf32>
    %436 = arith.mulf %433, %435 : vector<8x256xf32>
    %437 = arith.addf %431, %436 : vector<8x256xf32>
    %c1_331 = arith.constant 1 : index
    %c0_332 = arith.constant 0 : index
    %c30_333 = arith.constant 30 : index
    %438 = vector.load %arg1[%c1_331, %c0_332, %c30_333] : memref<3x8x384xf32, #tpu.memory_space<vmem>>, vector<1x8x256xf32>
    %439 = vector.shape_cast %438 : vector<1x8x256xf32> to vector<8x256xf32>
    %c15_334 = arith.constant 15 : index
    %c2_335 = arith.constant 2 : index
    %440 = memref.load %arg2[%c15_334, %c2_335] : memref<27x6xf32, #tpu.memory_space<smem>>
    %441 = vector.broadcast %440 : f32 to vector<8x256xf32>
    %442 = arith.mulf %439, %441 : vector<8x256xf32>
    %443 = arith.addf %437, %442 : vector<8x256xf32>
    %c1_336 = arith.constant 1 : index
    %c0_337 = arith.constant 0 : index
    %c31_338 = arith.constant 31 : index
    %444 = vector.load %arg1[%c1_336, %c0_337, %c31_338] : memref<3x8x384xf32, #tpu.memory_space<vmem>>, vector<1x8x256xf32>
    %445 = vector.shape_cast %444 : vector<1x8x256xf32> to vector<8x256xf32>
    %c16_339 = arith.constant 16 : index
    %c2_340 = arith.constant 2 : index
    %446 = memref.load %arg2[%c16_339, %c2_340] : memref<27x6xf32, #tpu.memory_space<smem>>
    %447 = vector.broadcast %446 : f32 to vector<8x256xf32>
    %448 = arith.mulf %445, %447 : vector<8x256xf32>
    %449 = arith.addf %443, %448 : vector<8x256xf32>
    %c1_341 = arith.constant 1 : index
    %c0_342 = arith.constant 0 : index
    %c32_343 = arith.constant 32 : index
    %450 = vector.load %arg1[%c1_341, %c0_342, %c32_343] : memref<3x8x384xf32, #tpu.memory_space<vmem>>, vector<1x8x256xf32>
    %451 = vector.shape_cast %450 : vector<1x8x256xf32> to vector<8x256xf32>
    %c17_344 = arith.constant 17 : index
    %c2_345 = arith.constant 2 : index
    %452 = memref.load %arg2[%c17_344, %c2_345] : memref<27x6xf32, #tpu.memory_space<smem>>
    %453 = vector.broadcast %452 : f32 to vector<8x256xf32>
    %454 = arith.mulf %451, %453 : vector<8x256xf32>
    %455 = arith.addf %449, %454 : vector<8x256xf32>
    %cst_346 = arith.constant 0.000000e+00 : f32
    %456 = vector.broadcast %cst_346 : f32 to vector<8x256xf32>
    %c2_347 = arith.constant 2 : index
    %c0_348 = arith.constant 0 : index
    %c0_349 = arith.constant 0 : index
    %457 = vector.load %arg1[%c2_347, %c0_348, %c0_349] : memref<3x8x384xf32, #tpu.memory_space<vmem>>, vector<1x8x256xf32>
    %458 = vector.shape_cast %457 : vector<1x8x256xf32> to vector<8x256xf32>
    %c18_350 = arith.constant 18 : index
    %c2_351 = arith.constant 2 : index
    %459 = memref.load %arg2[%c18_350, %c2_351] : memref<27x6xf32, #tpu.memory_space<smem>>
    %460 = vector.broadcast %459 : f32 to vector<8x256xf32>
    %461 = arith.mulf %458, %460 : vector<8x256xf32>
    %462 = arith.addf %456, %461 : vector<8x256xf32>
    %c2_352 = arith.constant 2 : index
    %c0_353 = arith.constant 0 : index
    %c1_354 = arith.constant 1 : index
    %463 = vector.load %arg1[%c2_352, %c0_353, %c1_354] : memref<3x8x384xf32, #tpu.memory_space<vmem>>, vector<1x8x256xf32>
    %464 = vector.shape_cast %463 : vector<1x8x256xf32> to vector<8x256xf32>
    %c19_355 = arith.constant 19 : index
    %c2_356 = arith.constant 2 : index
    %465 = memref.load %arg2[%c19_355, %c2_356] : memref<27x6xf32, #tpu.memory_space<smem>>
    %466 = vector.broadcast %465 : f32 to vector<8x256xf32>
    %467 = arith.mulf %464, %466 : vector<8x256xf32>
    %468 = arith.addf %462, %467 : vector<8x256xf32>
    %c2_357 = arith.constant 2 : index
    %c0_358 = arith.constant 0 : index
    %c2_359 = arith.constant 2 : index
    %469 = vector.load %arg1[%c2_357, %c0_358, %c2_359] : memref<3x8x384xf32, #tpu.memory_space<vmem>>, vector<1x8x256xf32>
    %470 = vector.shape_cast %469 : vector<1x8x256xf32> to vector<8x256xf32>
    %c20_360 = arith.constant 20 : index
    %c2_361 = arith.constant 2 : index
    %471 = memref.load %arg2[%c20_360, %c2_361] : memref<27x6xf32, #tpu.memory_space<smem>>
    %472 = vector.broadcast %471 : f32 to vector<8x256xf32>
    %473 = arith.mulf %470, %472 : vector<8x256xf32>
    %474 = arith.addf %468, %473 : vector<8x256xf32>
    %c2_362 = arith.constant 2 : index
    %c0_363 = arith.constant 0 : index
    %c15_364 = arith.constant 15 : index
    %475 = vector.load %arg1[%c2_362, %c0_363, %c15_364] : memref<3x8x384xf32, #tpu.memory_space<vmem>>, vector<1x8x256xf32>
    %476 = vector.shape_cast %475 : vector<1x8x256xf32> to vector<8x256xf32>
    %c21_365 = arith.constant 21 : index
    %c2_366 = arith.constant 2 : index
    %477 = memref.load %arg2[%c21_365, %c2_366] : memref<27x6xf32, #tpu.memory_space<smem>>
    %478 = vector.broadcast %477 : f32 to vector<8x256xf32>
    %479 = arith.mulf %476, %478 : vector<8x256xf32>
    %480 = arith.addf %474, %479 : vector<8x256xf32>
    %c2_367 = arith.constant 2 : index
    %c0_368 = arith.constant 0 : index
    %c16_369 = arith.constant 16 : index
    %481 = vector.load %arg1[%c2_367, %c0_368, %c16_369] : memref<3x8x384xf32, #tpu.memory_space<vmem>>, vector<1x8x256xf32>
    %482 = vector.shape_cast %481 : vector<1x8x256xf32> to vector<8x256xf32>
    %c22_370 = arith.constant 22 : index
    %c2_371 = arith.constant 2 : index
    %483 = memref.load %arg2[%c22_370, %c2_371] : memref<27x6xf32, #tpu.memory_space<smem>>
    %484 = vector.broadcast %483 : f32 to vector<8x256xf32>
    %485 = arith.mulf %482, %484 : vector<8x256xf32>
    %486 = arith.addf %480, %485 : vector<8x256xf32>
    %c2_372 = arith.constant 2 : index
    %c0_373 = arith.constant 0 : index
    %c17_374 = arith.constant 17 : index
    %487 = vector.load %arg1[%c2_372, %c0_373, %c17_374] : memref<3x8x384xf32, #tpu.memory_space<vmem>>, vector<1x8x256xf32>
    %488 = vector.shape_cast %487 : vector<1x8x256xf32> to vector<8x256xf32>
    %c23_375 = arith.constant 23 : index
    %c2_376 = arith.constant 2 : index
    %489 = memref.load %arg2[%c23_375, %c2_376] : memref<27x6xf32, #tpu.memory_space<smem>>
    %490 = vector.broadcast %489 : f32 to vector<8x256xf32>
    %491 = arith.mulf %488, %490 : vector<8x256xf32>
    %492 = arith.addf %486, %491 : vector<8x256xf32>
    %c2_377 = arith.constant 2 : index
    %c0_378 = arith.constant 0 : index
    %c30_379 = arith.constant 30 : index
    %493 = vector.load %arg1[%c2_377, %c0_378, %c30_379] : memref<3x8x384xf32, #tpu.memory_space<vmem>>, vector<1x8x256xf32>
    %494 = vector.shape_cast %493 : vector<1x8x256xf32> to vector<8x256xf32>
    %c24_380 = arith.constant 24 : index
    %c2_381 = arith.constant 2 : index
    %495 = memref.load %arg2[%c24_380, %c2_381] : memref<27x6xf32, #tpu.memory_space<smem>>
    %496 = vector.broadcast %495 : f32 to vector<8x256xf32>
    %497 = arith.mulf %494, %496 : vector<8x256xf32>
    %498 = arith.addf %492, %497 : vector<8x256xf32>
    %c2_382 = arith.constant 2 : index
    %c0_383 = arith.constant 0 : index
    %c31_384 = arith.constant 31 : index
    %499 = vector.load %arg1[%c2_382, %c0_383, %c31_384] : memref<3x8x384xf32, #tpu.memory_space<vmem>>, vector<1x8x256xf32>
    %500 = vector.shape_cast %499 : vector<1x8x256xf32> to vector<8x256xf32>
    %c25_385 = arith.constant 25 : index
    %c2_386 = arith.constant 2 : index
    %501 = memref.load %arg2[%c25_385, %c2_386] : memref<27x6xf32, #tpu.memory_space<smem>>
    %502 = vector.broadcast %501 : f32 to vector<8x256xf32>
    %503 = arith.mulf %500, %502 : vector<8x256xf32>
    %504 = arith.addf %498, %503 : vector<8x256xf32>
    %c2_387 = arith.constant 2 : index
    %c0_388 = arith.constant 0 : index
    %c32_389 = arith.constant 32 : index
    %505 = vector.load %arg1[%c2_387, %c0_388, %c32_389] : memref<3x8x384xf32, #tpu.memory_space<vmem>>, vector<1x8x256xf32>
    %506 = vector.shape_cast %505 : vector<1x8x256xf32> to vector<8x256xf32>
    %c26_390 = arith.constant 26 : index
    %c2_391 = arith.constant 2 : index
    %507 = memref.load %arg2[%c26_390, %c2_391] : memref<27x6xf32, #tpu.memory_space<smem>>
    %508 = vector.broadcast %507 : f32 to vector<8x256xf32>
    %509 = arith.mulf %506, %508 : vector<8x256xf32>
    %510 = arith.addf %504, %509 : vector<8x256xf32>
    %511 = arith.addf %400, %455 : vector<8x256xf32>
    %512 = arith.addf %511, %510 : vector<8x256xf32>
    %c0_392 = arith.constant 0 : index
    %c2_393 = arith.constant 2 : index
    %513 = memref.load %arg3[%c0_392, %c2_393] : memref<1x6xf32, #tpu.memory_space<smem>>
    %514 = vector.broadcast %513 : f32 to vector<8x256xf32>
    %515 = arith.addf %512, %514 : vector<8x256xf32>
    %cst_394 = arith.constant 0.000000e+00 : f32
    %516 = vector.broadcast %cst_394 : f32 to vector<8x256xf32>
    %517 = arith.maximumf %515, %516 : vector<8x256xf32>
    %c0_395 = arith.constant 0 : index
    %c512 = arith.constant 512 : index
    %518 = vector.load %arg7[%c0_395, %c512] : memref<8x1536xf32, #tpu.memory_space<vmem>>, vector<8x256xf32>
    tpu.vector_store %arg7[%c0_395, %c512], %517 {strides = array<i32>} : memref<8x1536xf32, #tpu.memory_space<vmem>>, vector<8x256xf32>,
    %cst_396 = arith.constant 0.000000e+00 : f32
    %519 = vector.broadcast %cst_396 : f32 to vector<8x256xf32>
    %c0_397 = arith.constant 0 : index
    %c0_398 = arith.constant 0 : index
    %c0_399 = arith.constant 0 : index
    %520 = vector.load %arg1[%c0_397, %c0_398, %c0_399] : memref<3x8x384xf32, #tpu.memory_space<vmem>>, vector<1x8x256xf32>
    %521 = vector.shape_cast %520 : vector<1x8x256xf32> to vector<8x256xf32>
    %c0_400 = arith.constant 0 : index
    %c3_401 = arith.constant 3 : index
    %522 = memref.load %arg2[%c0_400, %c3_401] : memref<27x6xf32, #tpu.memory_space<smem>>
    %523 = vector.broadcast %522 : f32 to vector<8x256xf32>
    %524 = arith.mulf %521, %523 : vector<8x256xf32>
    %525 = arith.addf %519, %524 : vector<8x256xf32>
    %c0_402 = arith.constant 0 : index
    %c0_403 = arith.constant 0 : index
    %c1_404 = arith.constant 1 : index
    %526 = vector.load %arg1[%c0_402, %c0_403, %c1_404] : memref<3x8x384xf32, #tpu.memory_space<vmem>>, vector<1x8x256xf32>
    %527 = vector.shape_cast %526 : vector<1x8x256xf32> to vector<8x256xf32>
    %c1_405 = arith.constant 1 : index
    %c3_406 = arith.constant 3 : index
    %528 = memref.load %arg2[%c1_405, %c3_406] : memref<27x6xf32, #tpu.memory_space<smem>>
    %529 = vector.broadcast %528 : f32 to vector<8x256xf32>
    %530 = arith.mulf %527, %529 : vector<8x256xf32>
    %531 = arith.addf %525, %530 : vector<8x256xf32>
    %c0_407 = arith.constant 0 : index
    %c0_408 = arith.constant 0 : index
    %c2_409 = arith.constant 2 : index
    %532 = vector.load %arg1[%c0_407, %c0_408, %c2_409] : memref<3x8x384xf32, #tpu.memory_space<vmem>>, vector<1x8x256xf32>
    %533 = vector.shape_cast %532 : vector<1x8x256xf32> to vector<8x256xf32>
    %c2_410 = arith.constant 2 : index
    %c3_411 = arith.constant 3 : index
    %534 = memref.load %arg2[%c2_410, %c3_411] : memref<27x6xf32, #tpu.memory_space<smem>>
    %535 = vector.broadcast %534 : f32 to vector<8x256xf32>
    %536 = arith.mulf %533, %535 : vector<8x256xf32>
    %537 = arith.addf %531, %536 : vector<8x256xf32>
    %c0_412 = arith.constant 0 : index
    %c0_413 = arith.constant 0 : index
    %c15_414 = arith.constant 15 : index
    %538 = vector.load %arg1[%c0_412, %c0_413, %c15_414] : memref<3x8x384xf32, #tpu.memory_space<vmem>>, vector<1x8x256xf32>
    %539 = vector.shape_cast %538 : vector<1x8x256xf32> to vector<8x256xf32>
    %c3_415 = arith.constant 3 : index
    %c3_416 = arith.constant 3 : index
    %540 = memref.load %arg2[%c3_415, %c3_416] : memref<27x6xf32, #tpu.memory_space<smem>>
    %541 = vector.broadcast %540 : f32 to vector<8x256xf32>
    %542 = arith.mulf %539, %541 : vector<8x256xf32>
    %543 = arith.addf %537, %542 : vector<8x256xf32>
    %c0_417 = arith.constant 0 : index
    %c0_418 = arith.constant 0 : index
    %c16_419 = arith.constant 16 : index
    %544 = vector.load %arg1[%c0_417, %c0_418, %c16_419] : memref<3x8x384xf32, #tpu.memory_space<vmem>>, vector<1x8x256xf32>
    %545 = vector.shape_cast %544 : vector<1x8x256xf32> to vector<8x256xf32>
    %c4_420 = arith.constant 4 : index
    %c3_421 = arith.constant 3 : index
    %546 = memref.load %arg2[%c4_420, %c3_421] : memref<27x6xf32, #tpu.memory_space<smem>>
    %547 = vector.broadcast %546 : f32 to vector<8x256xf32>
    %548 = arith.mulf %545, %547 : vector<8x256xf32>
    %549 = arith.addf %543, %548 : vector<8x256xf32>
    %c0_422 = arith.constant 0 : index
    %c0_423 = arith.constant 0 : index
    %c17_424 = arith.constant 17 : index
    %550 = vector.load %arg1[%c0_422, %c0_423, %c17_424] : memref<3x8x384xf32, #tpu.memory_space<vmem>>, vector<1x8x256xf32>
    %551 = vector.shape_cast %550 : vector<1x8x256xf32> to vector<8x256xf32>
    %c5_425 = arith.constant 5 : index
    %c3_426 = arith.constant 3 : index
    %552 = memref.load %arg2[%c5_425, %c3_426] : memref<27x6xf32, #tpu.memory_space<smem>>
    %553 = vector.broadcast %552 : f32 to vector<8x256xf32>
    %554 = arith.mulf %551, %553 : vector<8x256xf32>
    %555 = arith.addf %549, %554 : vector<8x256xf32>
    %c0_427 = arith.constant 0 : index
    %c0_428 = arith.constant 0 : index
    %c30_429 = arith.constant 30 : index
    %556 = vector.load %arg1[%c0_427, %c0_428, %c30_429] : memref<3x8x384xf32, #tpu.memory_space<vmem>>, vector<1x8x256xf32>
    %557 = vector.shape_cast %556 : vector<1x8x256xf32> to vector<8x256xf32>
    %c6_430 = arith.constant 6 : index
    %c3_431 = arith.constant 3 : index
    %558 = memref.load %arg2[%c6_430, %c3_431] : memref<27x6xf32, #tpu.memory_space<smem>>
    %559 = vector.broadcast %558 : f32 to vector<8x256xf32>
    %560 = arith.mulf %557, %559 : vector<8x256xf32>
    %561 = arith.addf %555, %560 : vector<8x256xf32>
    %c0_432 = arith.constant 0 : index
    %c0_433 = arith.constant 0 : index
    %c31_434 = arith.constant 31 : index
    %562 = vector.load %arg1[%c0_432, %c0_433, %c31_434] : memref<3x8x384xf32, #tpu.memory_space<vmem>>, vector<1x8x256xf32>
    %563 = vector.shape_cast %562 : vector<1x8x256xf32> to vector<8x256xf32>
    %c7_435 = arith.constant 7 : index
    %c3_436 = arith.constant 3 : index
    %564 = memref.load %arg2[%c7_435, %c3_436] : memref<27x6xf32, #tpu.memory_space<smem>>
    %565 = vector.broadcast %564 : f32 to vector<8x256xf32>
    %566 = arith.mulf %563, %565 : vector<8x256xf32>
    %567 = arith.addf %561, %566 : vector<8x256xf32>
    %c0_437 = arith.constant 0 : index
    %c0_438 = arith.constant 0 : index
    %c32_439 = arith.constant 32 : index
    %568 = vector.load %arg1[%c0_437, %c0_438, %c32_439] : memref<3x8x384xf32, #tpu.memory_space<vmem>>, vector<1x8x256xf32>
    %569 = vector.shape_cast %568 : vector<1x8x256xf32> to vector<8x256xf32>
    %c8_440 = arith.constant 8 : index
    %c3_441 = arith.constant 3 : index
    %570 = memref.load %arg2[%c8_440, %c3_441] : memref<27x6xf32, #tpu.memory_space<smem>>
    %571 = vector.broadcast %570 : f32 to vector<8x256xf32>
    %572 = arith.mulf %569, %571 : vector<8x256xf32>
    %573 = arith.addf %567, %572 : vector<8x256xf32>
    %cst_442 = arith.constant 0.000000e+00 : f32
    %574 = vector.broadcast %cst_442 : f32 to vector<8x256xf32>
    %c1_443 = arith.constant 1 : index
    %c0_444 = arith.constant 0 : index
    %c0_445 = arith.constant 0 : index
    %575 = vector.load %arg1[%c1_443, %c0_444, %c0_445] : memref<3x8x384xf32, #tpu.memory_space<vmem>>, vector<1x8x256xf32>
    %576 = vector.shape_cast %575 : vector<1x8x256xf32> to vector<8x256xf32>
    %c9_446 = arith.constant 9 : index
    %c3_447 = arith.constant 3 : index
    %577 = memref.load %arg2[%c9_446, %c3_447] : memref<27x6xf32, #tpu.memory_space<smem>>
    %578 = vector.broadcast %577 : f32 to vector<8x256xf32>
    %579 = arith.mulf %576, %578 : vector<8x256xf32>
    %580 = arith.addf %574, %579 : vector<8x256xf32>
    %c1_448 = arith.constant 1 : index
    %c0_449 = arith.constant 0 : index
    %c1_450 = arith.constant 1 : index
    %581 = vector.load %arg1[%c1_448, %c0_449, %c1_450] : memref<3x8x384xf32, #tpu.memory_space<vmem>>, vector<1x8x256xf32>
    %582 = vector.shape_cast %581 : vector<1x8x256xf32> to vector<8x256xf32>
    %c10_451 = arith.constant 10 : index
    %c3_452 = arith.constant 3 : index
    %583 = memref.load %arg2[%c10_451, %c3_452] : memref<27x6xf32, #tpu.memory_space<smem>>
    %584 = vector.broadcast %583 : f32 to vector<8x256xf32>
    %585 = arith.mulf %582, %584 : vector<8x256xf32>
    %586 = arith.addf %580, %585 : vector<8x256xf32>
    %c1_453 = arith.constant 1 : index
    %c0_454 = arith.constant 0 : index
    %c2_455 = arith.constant 2 : index
    %587 = vector.load %arg1[%c1_453, %c0_454, %c2_455] : memref<3x8x384xf32, #tpu.memory_space<vmem>>, vector<1x8x256xf32>
    %588 = vector.shape_cast %587 : vector<1x8x256xf32> to vector<8x256xf32>
    %c11_456 = arith.constant 11 : index
    %c3_457 = arith.constant 3 : index
    %589 = memref.load %arg2[%c11_456, %c3_457] : memref<27x6xf32, #tpu.memory_space<smem>>
    %590 = vector.broadcast %589 : f32 to vector<8x256xf32>
    %591 = arith.mulf %588, %590 : vector<8x256xf32>
    %592 = arith.addf %586, %591 : vector<8x256xf32>
    %c1_458 = arith.constant 1 : index
    %c0_459 = arith.constant 0 : index
    %c15_460 = arith.constant 15 : index
    %593 = vector.load %arg1[%c1_458, %c0_459, %c15_460] : memref<3x8x384xf32, #tpu.memory_space<vmem>>, vector<1x8x256xf32>
    %594 = vector.shape_cast %593 : vector<1x8x256xf32> to vector<8x256xf32>
    %c12_461 = arith.constant 12 : index
    %c3_462 = arith.constant 3 : index
    %595 = memref.load %arg2[%c12_461, %c3_462] : memref<27x6xf32, #tpu.memory_space<smem>>
    %596 = vector.broadcast %595 : f32 to vector<8x256xf32>
    %597 = arith.mulf %594, %596 : vector<8x256xf32>
    %598 = arith.addf %592, %597 : vector<8x256xf32>
    %c1_463 = arith.constant 1 : index
    %c0_464 = arith.constant 0 : index
    %c16_465 = arith.constant 16 : index
    %599 = vector.load %arg1[%c1_463, %c0_464, %c16_465] : memref<3x8x384xf32, #tpu.memory_space<vmem>>, vector<1x8x256xf32>
    %600 = vector.shape_cast %599 : vector<1x8x256xf32> to vector<8x256xf32>
    %c13_466 = arith.constant 13 : index
    %c3_467 = arith.constant 3 : index
    %601 = memref.load %arg2[%c13_466, %c3_467] : memref<27x6xf32, #tpu.memory_space<smem>>
    %602 = vector.broadcast %601 : f32 to vector<8x256xf32>
    %603 = arith.mulf %600, %602 : vector<8x256xf32>
    %604 = arith.addf %598, %603 : vector<8x256xf32>
    %c1_468 = arith.constant 1 : index
    %c0_469 = arith.constant 0 : index
    %c17_470 = arith.constant 17 : index
    %605 = vector.load %arg1[%c1_468, %c0_469, %c17_470] : memref<3x8x384xf32, #tpu.memory_space<vmem>>, vector<1x8x256xf32>
    %606 = vector.shape_cast %605 : vector<1x8x256xf32> to vector<8x256xf32>
    %c14_471 = arith.constant 14 : index
    %c3_472 = arith.constant 3 : index
    %607 = memref.load %arg2[%c14_471, %c3_472] : memref<27x6xf32, #tpu.memory_space<smem>>
    %608 = vector.broadcast %607 : f32 to vector<8x256xf32>
    %609 = arith.mulf %606, %608 : vector<8x256xf32>
    %610 = arith.addf %604, %609 : vector<8x256xf32>
    %c1_473 = arith.constant 1 : index
    %c0_474 = arith.constant 0 : index
    %c30_475 = arith.constant 30 : index
    %611 = vector.load %arg1[%c1_473, %c0_474, %c30_475] : memref<3x8x384xf32, #tpu.memory_space<vmem>>, vector<1x8x256xf32>
    %612 = vector.shape_cast %611 : vector<1x8x256xf32> to vector<8x256xf32>
    %c15_476 = arith.constant 15 : index
    %c3_477 = arith.constant 3 : index
    %613 = memref.load %arg2[%c15_476, %c3_477] : memref<27x6xf32, #tpu.memory_space<smem>>
    %614 = vector.broadcast %613 : f32 to vector<8x256xf32>
    %615 = arith.mulf %612, %614 : vector<8x256xf32>
    %616 = arith.addf %610, %615 : vector<8x256xf32>
    %c1_478 = arith.constant 1 : index
    %c0_479 = arith.constant 0 : index
    %c31_480 = arith.constant 31 : index
    %617 = vector.load %arg1[%c1_478, %c0_479, %c31_480] : memref<3x8x384xf32, #tpu.memory_space<vmem>>, vector<1x8x256xf32>
    %618 = vector.shape_cast %617 : vector<1x8x256xf32> to vector<8x256xf32>
    %c16_481 = arith.constant 16 : index
    %c3_482 = arith.constant 3 : index
    %619 = memref.load %arg2[%c16_481, %c3_482] : memref<27x6xf32, #tpu.memory_space<smem>>
    %620 = vector.broadcast %619 : f32 to vector<8x256xf32>
    %621 = arith.mulf %618, %620 : vector<8x256xf32>
    %622 = arith.addf %616, %621 : vector<8x256xf32>
    %c1_483 = arith.constant 1 : index
    %c0_484 = arith.constant 0 : index
    %c32_485 = arith.constant 32 : index
    %623 = vector.load %arg1[%c1_483, %c0_484, %c32_485] : memref<3x8x384xf32, #tpu.memory_space<vmem>>, vector<1x8x256xf32>
    %624 = vector.shape_cast %623 : vector<1x8x256xf32> to vector<8x256xf32>
    %c17_486 = arith.constant 17 : index
    %c3_487 = arith.constant 3 : index
    %625 = memref.load %arg2[%c17_486, %c3_487] : memref<27x6xf32, #tpu.memory_space<smem>>
    %626 = vector.broadcast %625 : f32 to vector<8x256xf32>
    %627 = arith.mulf %624, %626 : vector<8x256xf32>
    %628 = arith.addf %622, %627 : vector<8x256xf32>
    %cst_488 = arith.constant 0.000000e+00 : f32
    %629 = vector.broadcast %cst_488 : f32 to vector<8x256xf32>
    %c2_489 = arith.constant 2 : index
    %c0_490 = arith.constant 0 : index
    %c0_491 = arith.constant 0 : index
    %630 = vector.load %arg1[%c2_489, %c0_490, %c0_491] : memref<3x8x384xf32, #tpu.memory_space<vmem>>, vector<1x8x256xf32>
    %631 = vector.shape_cast %630 : vector<1x8x256xf32> to vector<8x256xf32>
    %c18_492 = arith.constant 18 : index
    %c3_493 = arith.constant 3 : index
    %632 = memref.load %arg2[%c18_492, %c3_493] : memref<27x6xf32, #tpu.memory_space<smem>>
    %633 = vector.broadcast %632 : f32 to vector<8x256xf32>
    %634 = arith.mulf %631, %633 : vector<8x256xf32>
    %635 = arith.addf %629, %634 : vector<8x256xf32>
    %c2_494 = arith.constant 2 : index
    %c0_495 = arith.constant 0 : index
    %c1_496 = arith.constant 1 : index
    %636 = vector.load %arg1[%c2_494, %c0_495, %c1_496] : memref<3x8x384xf32, #tpu.memory_space<vmem>>, vector<1x8x256xf32>
    %637 = vector.shape_cast %636 : vector<1x8x256xf32> to vector<8x256xf32>
    %c19_497 = arith.constant 19 : index
    %c3_498 = arith.constant 3 : index
    %638 = memref.load %arg2[%c19_497, %c3_498] : memref<27x6xf32, #tpu.memory_space<smem>>
    %639 = vector.broadcast %638 : f32 to vector<8x256xf32>
    %640 = arith.mulf %637, %639 : vector<8x256xf32>
    %641 = arith.addf %635, %640 : vector<8x256xf32>
    %c2_499 = arith.constant 2 : index
    %c0_500 = arith.constant 0 : index
    %c2_501 = arith.constant 2 : index
    %642 = vector.load %arg1[%c2_499, %c0_500, %c2_501] : memref<3x8x384xf32, #tpu.memory_space<vmem>>, vector<1x8x256xf32>
    %643 = vector.shape_cast %642 : vector<1x8x256xf32> to vector<8x256xf32>
    %c20_502 = arith.constant 20 : index
    %c3_503 = arith.constant 3 : index
    %644 = memref.load %arg2[%c20_502, %c3_503] : memref<27x6xf32, #tpu.memory_space<smem>>
    %645 = vector.broadcast %644 : f32 to vector<8x256xf32>
    %646 = arith.mulf %643, %645 : vector<8x256xf32>
    %647 = arith.addf %641, %646 : vector<8x256xf32>
    %c2_504 = arith.constant 2 : index
    %c0_505 = arith.constant 0 : index
    %c15_506 = arith.constant 15 : index
    %648 = vector.load %arg1[%c2_504, %c0_505, %c15_506] : memref<3x8x384xf32, #tpu.memory_space<vmem>>, vector<1x8x256xf32>
    %649 = vector.shape_cast %648 : vector<1x8x256xf32> to vector<8x256xf32>
    %c21_507 = arith.constant 21 : index
    %c3_508 = arith.constant 3 : index
    %650 = memref.load %arg2[%c21_507, %c3_508] : memref<27x6xf32, #tpu.memory_space<smem>>
    %651 = vector.broadcast %650 : f32 to vector<8x256xf32>
    %652 = arith.mulf %649, %651 : vector<8x256xf32>
    %653 = arith.addf %647, %652 : vector<8x256xf32>
    %c2_509 = arith.constant 2 : index
    %c0_510 = arith.constant 0 : index
    %c16_511 = arith.constant 16 : index
    %654 = vector.load %arg1[%c2_509, %c0_510, %c16_511] : memref<3x8x384xf32, #tpu.memory_space<vmem>>, vector<1x8x256xf32>
    %655 = vector.shape_cast %654 : vector<1x8x256xf32> to vector<8x256xf32>
    %c22_512 = arith.constant 22 : index
    %c3_513 = arith.constant 3 : index
    %656 = memref.load %arg2[%c22_512, %c3_513] : memref<27x6xf32, #tpu.memory_space<smem>>
    %657 = vector.broadcast %656 : f32 to vector<8x256xf32>
    %658 = arith.mulf %655, %657 : vector<8x256xf32>
    %659 = arith.addf %653, %658 : vector<8x256xf32>
    %c2_514 = arith.constant 2 : index
    %c0_515 = arith.constant 0 : index
    %c17_516 = arith.constant 17 : index
    %660 = vector.load %arg1[%c2_514, %c0_515, %c17_516] : memref<3x8x384xf32, #tpu.memory_space<vmem>>, vector<1x8x256xf32>
    %661 = vector.shape_cast %660 : vector<1x8x256xf32> to vector<8x256xf32>
    %c23_517 = arith.constant 23 : index
    %c3_518 = arith.constant 3 : index
    %662 = memref.load %arg2[%c23_517, %c3_518] : memref<27x6xf32, #tpu.memory_space<smem>>
    %663 = vector.broadcast %662 : f32 to vector<8x256xf32>
    %664 = arith.mulf %661, %663 : vector<8x256xf32>
    %665 = arith.addf %659, %664 : vector<8x256xf32>
    %c2_519 = arith.constant 2 : index
    %c0_520 = arith.constant 0 : index
    %c30_521 = arith.constant 30 : index
    %666 = vector.load %arg1[%c2_519, %c0_520, %c30_521] : memref<3x8x384xf32, #tpu.memory_space<vmem>>, vector<1x8x256xf32>
    %667 = vector.shape_cast %666 : vector<1x8x256xf32> to vector<8x256xf32>
    %c24_522 = arith.constant 24 : index
    %c3_523 = arith.constant 3 : index
    %668 = memref.load %arg2[%c24_522, %c3_523] : memref<27x6xf32, #tpu.memory_space<smem>>
    %669 = vector.broadcast %668 : f32 to vector<8x256xf32>
    %670 = arith.mulf %667, %669 : vector<8x256xf32>
    %671 = arith.addf %665, %670 : vector<8x256xf32>
    %c2_524 = arith.constant 2 : index
    %c0_525 = arith.constant 0 : index
    %c31_526 = arith.constant 31 : index
    %672 = vector.load %arg1[%c2_524, %c0_525, %c31_526] : memref<3x8x384xf32, #tpu.memory_space<vmem>>, vector<1x8x256xf32>
    %673 = vector.shape_cast %672 : vector<1x8x256xf32> to vector<8x256xf32>
    %c25_527 = arith.constant 25 : index
    %c3_528 = arith.constant 3 : index
    %674 = memref.load %arg2[%c25_527, %c3_528] : memref<27x6xf32, #tpu.memory_space<smem>>
    %675 = vector.broadcast %674 : f32 to vector<8x256xf32>
    %676 = arith.mulf %673, %675 : vector<8x256xf32>
    %677 = arith.addf %671, %676 : vector<8x256xf32>
    %c2_529 = arith.constant 2 : index
    %c0_530 = arith.constant 0 : index
    %c32_531 = arith.constant 32 : index
    %678 = vector.load %arg1[%c2_529, %c0_530, %c32_531] : memref<3x8x384xf32, #tpu.memory_space<vmem>>, vector<1x8x256xf32>
    %679 = vector.shape_cast %678 : vector<1x8x256xf32> to vector<8x256xf32>
    %c26_532 = arith.constant 26 : index
    %c3_533 = arith.constant 3 : index
    %680 = memref.load %arg2[%c26_532, %c3_533] : memref<27x6xf32, #tpu.memory_space<smem>>
    %681 = vector.broadcast %680 : f32 to vector<8x256xf32>
    %682 = arith.mulf %679, %681 : vector<8x256xf32>
    %683 = arith.addf %677, %682 : vector<8x256xf32>
    %684 = arith.addf %573, %628 : vector<8x256xf32>
    %685 = arith.addf %684, %683 : vector<8x256xf32>
    %c0_534 = arith.constant 0 : index
    %c3_535 = arith.constant 3 : index
    %686 = memref.load %arg3[%c0_534, %c3_535] : memref<1x6xf32, #tpu.memory_space<smem>>
    %687 = vector.broadcast %686 : f32 to vector<8x256xf32>
    %688 = arith.addf %685, %687 : vector<8x256xf32>
    %cst_536 = arith.constant 0.000000e+00 : f32
    %689 = vector.broadcast %cst_536 : f32 to vector<8x256xf32>
    %690 = arith.maximumf %688, %689 : vector<8x256xf32>
    %c0_537 = arith.constant 0 : index
    %c768 = arith.constant 768 : index
    %691 = vector.load %arg7[%c0_537, %c768] : memref<8x1536xf32, #tpu.memory_space<vmem>>, vector<8x256xf32>
    tpu.vector_store %arg7[%c0_537, %c768], %690 {strides = array<i32>} : memref<8x1536xf32, #tpu.memory_space<vmem>>, vector<8x256xf32>,
    %cst_538 = arith.constant 0.000000e+00 : f32
    %692 = vector.broadcast %cst_538 : f32 to vector<8x256xf32>
    %c0_539 = arith.constant 0 : index
    %c0_540 = arith.constant 0 : index
    %c0_541 = arith.constant 0 : index
    %693 = vector.load %arg1[%c0_539, %c0_540, %c0_541] : memref<3x8x384xf32, #tpu.memory_space<vmem>>, vector<1x8x256xf32>
    %694 = vector.shape_cast %693 : vector<1x8x256xf32> to vector<8x256xf32>
    %c0_542 = arith.constant 0 : index
    %c4_543 = arith.constant 4 : index
    %695 = memref.load %arg2[%c0_542, %c4_543] : memref<27x6xf32, #tpu.memory_space<smem>>
    %696 = vector.broadcast %695 : f32 to vector<8x256xf32>
    %697 = arith.mulf %694, %696 : vector<8x256xf32>
    %698 = arith.addf %692, %697 : vector<8x256xf32>
    %c0_544 = arith.constant 0 : index
    %c0_545 = arith.constant 0 : index
    %c1_546 = arith.constant 1 : index
    %699 = vector.load %arg1[%c0_544, %c0_545, %c1_546] : memref<3x8x384xf32, #tpu.memory_space<vmem>>, vector<1x8x256xf32>
    %700 = vector.shape_cast %699 : vector<1x8x256xf32> to vector<8x256xf32>
    %c1_547 = arith.constant 1 : index
    %c4_548 = arith.constant 4 : index
    %701 = memref.load %arg2[%c1_547, %c4_548] : memref<27x6xf32, #tpu.memory_space<smem>>
    %702 = vector.broadcast %701 : f32 to vector<8x256xf32>
    %703 = arith.mulf %700, %702 : vector<8x256xf32>
    %704 = arith.addf %698, %703 : vector<8x256xf32>
    %c0_549 = arith.constant 0 : index
    %c0_550 = arith.constant 0 : index
    %c2_551 = arith.constant 2 : index
    %705 = vector.load %arg1[%c0_549, %c0_550, %c2_551] : memref<3x8x384xf32, #tpu.memory_space<vmem>>, vector<1x8x256xf32>
    %706 = vector.shape_cast %705 : vector<1x8x256xf32> to vector<8x256xf32>
    %c2_552 = arith.constant 2 : index
    %c4_553 = arith.constant 4 : index
    %707 = memref.load %arg2[%c2_552, %c4_553] : memref<27x6xf32, #tpu.memory_space<smem>>
    %708 = vector.broadcast %707 : f32 to vector<8x256xf32>
    %709 = arith.mulf %706, %708 : vector<8x256xf32>
    %710 = arith.addf %704, %709 : vector<8x256xf32>
    %c0_554 = arith.constant 0 : index
    %c0_555 = arith.constant 0 : index
    %c15_556 = arith.constant 15 : index
    %711 = vector.load %arg1[%c0_554, %c0_555, %c15_556] : memref<3x8x384xf32, #tpu.memory_space<vmem>>, vector<1x8x256xf32>
    %712 = vector.shape_cast %711 : vector<1x8x256xf32> to vector<8x256xf32>
    %c3_557 = arith.constant 3 : index
    %c4_558 = arith.constant 4 : index
    %713 = memref.load %arg2[%c3_557, %c4_558] : memref<27x6xf32, #tpu.memory_space<smem>>
    %714 = vector.broadcast %713 : f32 to vector<8x256xf32>
    %715 = arith.mulf %712, %714 : vector<8x256xf32>
    %716 = arith.addf %710, %715 : vector<8x256xf32>
    %c0_559 = arith.constant 0 : index
    %c0_560 = arith.constant 0 : index
    %c16_561 = arith.constant 16 : index
    %717 = vector.load %arg1[%c0_559, %c0_560, %c16_561] : memref<3x8x384xf32, #tpu.memory_space<vmem>>, vector<1x8x256xf32>
    %718 = vector.shape_cast %717 : vector<1x8x256xf32> to vector<8x256xf32>
    %c4_562 = arith.constant 4 : index
    %c4_563 = arith.constant 4 : index
    %719 = memref.load %arg2[%c4_562, %c4_563] : memref<27x6xf32, #tpu.memory_space<smem>>
    %720 = vector.broadcast %719 : f32 to vector<8x256xf32>
    %721 = arith.mulf %718, %720 : vector<8x256xf32>
    %722 = arith.addf %716, %721 : vector<8x256xf32>
    %c0_564 = arith.constant 0 : index
    %c0_565 = arith.constant 0 : index
    %c17_566 = arith.constant 17 : index
    %723 = vector.load %arg1[%c0_564, %c0_565, %c17_566] : memref<3x8x384xf32, #tpu.memory_space<vmem>>, vector<1x8x256xf32>
    %724 = vector.shape_cast %723 : vector<1x8x256xf32> to vector<8x256xf32>
    %c5_567 = arith.constant 5 : index
    %c4_568 = arith.constant 4 : index
    %725 = memref.load %arg2[%c5_567, %c4_568] : memref<27x6xf32, #tpu.memory_space<smem>>
    %726 = vector.broadcast %725 : f32 to vector<8x256xf32>
    %727 = arith.mulf %724, %726 : vector<8x256xf32>
    %728 = arith.addf %722, %727 : vector<8x256xf32>
    %c0_569 = arith.constant 0 : index
    %c0_570 = arith.constant 0 : index
    %c30_571 = arith.constant 30 : index
    %729 = vector.load %arg1[%c0_569, %c0_570, %c30_571] : memref<3x8x384xf32, #tpu.memory_space<vmem>>, vector<1x8x256xf32>
    %730 = vector.shape_cast %729 : vector<1x8x256xf32> to vector<8x256xf32>
    %c6_572 = arith.constant 6 : index
    %c4_573 = arith.constant 4 : index
    %731 = memref.load %arg2[%c6_572, %c4_573] : memref<27x6xf32, #tpu.memory_space<smem>>
    %732 = vector.broadcast %731 : f32 to vector<8x256xf32>
    %733 = arith.mulf %730, %732 : vector<8x256xf32>
    %734 = arith.addf %728, %733 : vector<8x256xf32>
    %c0_574 = arith.constant 0 : index
    %c0_575 = arith.constant 0 : index
    %c31_576 = arith.constant 31 : index
    %735 = vector.load %arg1[%c0_574, %c0_575, %c31_576] : memref<3x8x384xf32, #tpu.memory_space<vmem>>, vector<1x8x256xf32>
    %736 = vector.shape_cast %735 : vector<1x8x256xf32> to vector<8x256xf32>
    %c7_577 = arith.constant 7 : index
    %c4_578 = arith.constant 4 : index
    %737 = memref.load %arg2[%c7_577, %c4_578] : memref<27x6xf32, #tpu.memory_space<smem>>
    %738 = vector.broadcast %737 : f32 to vector<8x256xf32>
    %739 = arith.mulf %736, %738 : vector<8x256xf32>
    %740 = arith.addf %734, %739 : vector<8x256xf32>
    %c0_579 = arith.constant 0 : index
    %c0_580 = arith.constant 0 : index
    %c32_581 = arith.constant 32 : index
    %741 = vector.load %arg1[%c0_579, %c0_580, %c32_581] : memref<3x8x384xf32, #tpu.memory_space<vmem>>, vector<1x8x256xf32>
    %742 = vector.shape_cast %741 : vector<1x8x256xf32> to vector<8x256xf32>
    %c8_582 = arith.constant 8 : index
    %c4_583 = arith.constant 4 : index
    %743 = memref.load %arg2[%c8_582, %c4_583] : memref<27x6xf32, #tpu.memory_space<smem>>
    %744 = vector.broadcast %743 : f32 to vector<8x256xf32>
    %745 = arith.mulf %742, %744 : vector<8x256xf32>
    %746 = arith.addf %740, %745 : vector<8x256xf32>
    %cst_584 = arith.constant 0.000000e+00 : f32
    %747 = vector.broadcast %cst_584 : f32 to vector<8x256xf32>
    %c1_585 = arith.constant 1 : index
    %c0_586 = arith.constant 0 : index
    %c0_587 = arith.constant 0 : index
    %748 = vector.load %arg1[%c1_585, %c0_586, %c0_587] : memref<3x8x384xf32, #tpu.memory_space<vmem>>, vector<1x8x256xf32>
    %749 = vector.shape_cast %748 : vector<1x8x256xf32> to vector<8x256xf32>
    %c9_588 = arith.constant 9 : index
    %c4_589 = arith.constant 4 : index
    %750 = memref.load %arg2[%c9_588, %c4_589] : memref<27x6xf32, #tpu.memory_space<smem>>
    %751 = vector.broadcast %750 : f32 to vector<8x256xf32>
    %752 = arith.mulf %749, %751 : vector<8x256xf32>
    %753 = arith.addf %747, %752 : vector<8x256xf32>
    %c1_590 = arith.constant 1 : index
    %c0_591 = arith.constant 0 : index
    %c1_592 = arith.constant 1 : index
    %754 = vector.load %arg1[%c1_590, %c0_591, %c1_592] : memref<3x8x384xf32, #tpu.memory_space<vmem>>, vector<1x8x256xf32>
    %755 = vector.shape_cast %754 : vector<1x8x256xf32> to vector<8x256xf32>
    %c10_593 = arith.constant 10 : index
    %c4_594 = arith.constant 4 : index
    %756 = memref.load %arg2[%c10_593, %c4_594] : memref<27x6xf32, #tpu.memory_space<smem>>
    %757 = vector.broadcast %756 : f32 to vector<8x256xf32>
    %758 = arith.mulf %755, %757 : vector<8x256xf32>
    %759 = arith.addf %753, %758 : vector<8x256xf32>
    %c1_595 = arith.constant 1 : index
    %c0_596 = arith.constant 0 : index
    %c2_597 = arith.constant 2 : index
    %760 = vector.load %arg1[%c1_595, %c0_596, %c2_597] : memref<3x8x384xf32, #tpu.memory_space<vmem>>, vector<1x8x256xf32>
    %761 = vector.shape_cast %760 : vector<1x8x256xf32> to vector<8x256xf32>
    %c11_598 = arith.constant 11 : index
    %c4_599 = arith.constant 4 : index
    %762 = memref.load %arg2[%c11_598, %c4_599] : memref<27x6xf32, #tpu.memory_space<smem>>
    %763 = vector.broadcast %762 : f32 to vector<8x256xf32>
    %764 = arith.mulf %761, %763 : vector<8x256xf32>
    %765 = arith.addf %759, %764 : vector<8x256xf32>
    %c1_600 = arith.constant 1 : index
    %c0_601 = arith.constant 0 : index
    %c15_602 = arith.constant 15 : index
    %766 = vector.load %arg1[%c1_600, %c0_601, %c15_602] : memref<3x8x384xf32, #tpu.memory_space<vmem>>, vector<1x8x256xf32>
    %767 = vector.shape_cast %766 : vector<1x8x256xf32> to vector<8x256xf32>
    %c12_603 = arith.constant 12 : index
    %c4_604 = arith.constant 4 : index
    %768 = memref.load %arg2[%c12_603, %c4_604] : memref<27x6xf32, #tpu.memory_space<smem>>
    %769 = vector.broadcast %768 : f32 to vector<8x256xf32>
    %770 = arith.mulf %767, %769 : vector<8x256xf32>
    %771 = arith.addf %765, %770 : vector<8x256xf32>
    %c1_605 = arith.constant 1 : index
    %c0_606 = arith.constant 0 : index
    %c16_607 = arith.constant 16 : index
    %772 = vector.load %arg1[%c1_605, %c0_606, %c16_607] : memref<3x8x384xf32, #tpu.memory_space<vmem>>, vector<1x8x256xf32>
    %773 = vector.shape_cast %772 : vector<1x8x256xf32> to vector<8x256xf32>
    %c13_608 = arith.constant 13 : index
    %c4_609 = arith.constant 4 : index
    %774 = memref.load %arg2[%c13_608, %c4_609] : memref<27x6xf32, #tpu.memory_space<smem>>
    %775 = vector.broadcast %774 : f32 to vector<8x256xf32>
    %776 = arith.mulf %773, %775 : vector<8x256xf32>
    %777 = arith.addf %771, %776 : vector<8x256xf32>
    %c1_610 = arith.constant 1 : index
    %c0_611 = arith.constant 0 : index
    %c17_612 = arith.constant 17 : index
    %778 = vector.load %arg1[%c1_610, %c0_611, %c17_612] : memref<3x8x384xf32, #tpu.memory_space<vmem>>, vector<1x8x256xf32>
    %779 = vector.shape_cast %778 : vector<1x8x256xf32> to vector<8x256xf32>
    %c14_613 = arith.constant 14 : index
    %c4_614 = arith.constant 4 : index
    %780 = memref.load %arg2[%c14_613, %c4_614] : memref<27x6xf32, #tpu.memory_space<smem>>
    %781 = vector.broadcast %780 : f32 to vector<8x256xf32>
    %782 = arith.mulf %779, %781 : vector<8x256xf32>
    %783 = arith.addf %777, %782 : vector<8x256xf32>
    %c1_615 = arith.constant 1 : index
    %c0_616 = arith.constant 0 : index
    %c30_617 = arith.constant 30 : index
    %784 = vector.load %arg1[%c1_615, %c0_616, %c30_617] : memref<3x8x384xf32, #tpu.memory_space<vmem>>, vector<1x8x256xf32>
    %785 = vector.shape_cast %784 : vector<1x8x256xf32> to vector<8x256xf32>
    %c15_618 = arith.constant 15 : index
    %c4_619 = arith.constant 4 : index
    %786 = memref.load %arg2[%c15_618, %c4_619] : memref<27x6xf32, #tpu.memory_space<smem>>
    %787 = vector.broadcast %786 : f32 to vector<8x256xf32>
    %788 = arith.mulf %785, %787 : vector<8x256xf32>
    %789 = arith.addf %783, %788 : vector<8x256xf32>
    %c1_620 = arith.constant 1 : index
    %c0_621 = arith.constant 0 : index
    %c31_622 = arith.constant 31 : index
    %790 = vector.load %arg1[%c1_620, %c0_621, %c31_622] : memref<3x8x384xf32, #tpu.memory_space<vmem>>, vector<1x8x256xf32>
    %791 = vector.shape_cast %790 : vector<1x8x256xf32> to vector<8x256xf32>
    %c16_623 = arith.constant 16 : index
    %c4_624 = arith.constant 4 : index
    %792 = memref.load %arg2[%c16_623, %c4_624] : memref<27x6xf32, #tpu.memory_space<smem>>
    %793 = vector.broadcast %792 : f32 to vector<8x256xf32>
    %794 = arith.mulf %791, %793 : vector<8x256xf32>
    %795 = arith.addf %789, %794 : vector<8x256xf32>
    %c1_625 = arith.constant 1 : index
    %c0_626 = arith.constant 0 : index
    %c32_627 = arith.constant 32 : index
    %796 = vector.load %arg1[%c1_625, %c0_626, %c32_627] : memref<3x8x384xf32, #tpu.memory_space<vmem>>, vector<1x8x256xf32>
    %797 = vector.shape_cast %796 : vector<1x8x256xf32> to vector<8x256xf32>
    %c17_628 = arith.constant 17 : index
    %c4_629 = arith.constant 4 : index
    %798 = memref.load %arg2[%c17_628, %c4_629] : memref<27x6xf32, #tpu.memory_space<smem>>
    %799 = vector.broadcast %798 : f32 to vector<8x256xf32>
    %800 = arith.mulf %797, %799 : vector<8x256xf32>
    %801 = arith.addf %795, %800 : vector<8x256xf32>
    %cst_630 = arith.constant 0.000000e+00 : f32
    %802 = vector.broadcast %cst_630 : f32 to vector<8x256xf32>
    %c2_631 = arith.constant 2 : index
    %c0_632 = arith.constant 0 : index
    %c0_633 = arith.constant 0 : index
    %803 = vector.load %arg1[%c2_631, %c0_632, %c0_633] : memref<3x8x384xf32, #tpu.memory_space<vmem>>, vector<1x8x256xf32>
    %804 = vector.shape_cast %803 : vector<1x8x256xf32> to vector<8x256xf32>
    %c18_634 = arith.constant 18 : index
    %c4_635 = arith.constant 4 : index
    %805 = memref.load %arg2[%c18_634, %c4_635] : memref<27x6xf32, #tpu.memory_space<smem>>
    %806 = vector.broadcast %805 : f32 to vector<8x256xf32>
    %807 = arith.mulf %804, %806 : vector<8x256xf32>
    %808 = arith.addf %802, %807 : vector<8x256xf32>
    %c2_636 = arith.constant 2 : index
    %c0_637 = arith.constant 0 : index
    %c1_638 = arith.constant 1 : index
    %809 = vector.load %arg1[%c2_636, %c0_637, %c1_638] : memref<3x8x384xf32, #tpu.memory_space<vmem>>, vector<1x8x256xf32>
    %810 = vector.shape_cast %809 : vector<1x8x256xf32> to vector<8x256xf32>
    %c19_639 = arith.constant 19 : index
    %c4_640 = arith.constant 4 : index
    %811 = memref.load %arg2[%c19_639, %c4_640] : memref<27x6xf32, #tpu.memory_space<smem>>
    %812 = vector.broadcast %811 : f32 to vector<8x256xf32>
    %813 = arith.mulf %810, %812 : vector<8x256xf32>
    %814 = arith.addf %808, %813 : vector<8x256xf32>
    %c2_641 = arith.constant 2 : index
    %c0_642 = arith.constant 0 : index
    %c2_643 = arith.constant 2 : index
    %815 = vector.load %arg1[%c2_641, %c0_642, %c2_643] : memref<3x8x384xf32, #tpu.memory_space<vmem>>, vector<1x8x256xf32>
    %816 = vector.shape_cast %815 : vector<1x8x256xf32> to vector<8x256xf32>
    %c20_644 = arith.constant 20 : index
    %c4_645 = arith.constant 4 : index
    %817 = memref.load %arg2[%c20_644, %c4_645] : memref<27x6xf32, #tpu.memory_space<smem>>
    %818 = vector.broadcast %817 : f32 to vector<8x256xf32>
    %819 = arith.mulf %816, %818 : vector<8x256xf32>
    %820 = arith.addf %814, %819 : vector<8x256xf32>
    %c2_646 = arith.constant 2 : index
    %c0_647 = arith.constant 0 : index
    %c15_648 = arith.constant 15 : index
    %821 = vector.load %arg1[%c2_646, %c0_647, %c15_648] : memref<3x8x384xf32, #tpu.memory_space<vmem>>, vector<1x8x256xf32>
    %822 = vector.shape_cast %821 : vector<1x8x256xf32> to vector<8x256xf32>
    %c21_649 = arith.constant 21 : index
    %c4_650 = arith.constant 4 : index
    %823 = memref.load %arg2[%c21_649, %c4_650] : memref<27x6xf32, #tpu.memory_space<smem>>
    %824 = vector.broadcast %823 : f32 to vector<8x256xf32>
    %825 = arith.mulf %822, %824 : vector<8x256xf32>
    %826 = arith.addf %820, %825 : vector<8x256xf32>
    %c2_651 = arith.constant 2 : index
    %c0_652 = arith.constant 0 : index
    %c16_653 = arith.constant 16 : index
    %827 = vector.load %arg1[%c2_651, %c0_652, %c16_653] : memref<3x8x384xf32, #tpu.memory_space<vmem>>, vector<1x8x256xf32>
    %828 = vector.shape_cast %827 : vector<1x8x256xf32> to vector<8x256xf32>
    %c22_654 = arith.constant 22 : index
    %c4_655 = arith.constant 4 : index
    %829 = memref.load %arg2[%c22_654, %c4_655] : memref<27x6xf32, #tpu.memory_space<smem>>
    %830 = vector.broadcast %829 : f32 to vector<8x256xf32>
    %831 = arith.mulf %828, %830 : vector<8x256xf32>
    %832 = arith.addf %826, %831 : vector<8x256xf32>
    %c2_656 = arith.constant 2 : index
    %c0_657 = arith.constant 0 : index
    %c17_658 = arith.constant 17 : index
    %833 = vector.load %arg1[%c2_656, %c0_657, %c17_658] : memref<3x8x384xf32, #tpu.memory_space<vmem>>, vector<1x8x256xf32>
    %834 = vector.shape_cast %833 : vector<1x8x256xf32> to vector<8x256xf32>
    %c23_659 = arith.constant 23 : index
    %c4_660 = arith.constant 4 : index
    %835 = memref.load %arg2[%c23_659, %c4_660] : memref<27x6xf32, #tpu.memory_space<smem>>
    %836 = vector.broadcast %835 : f32 to vector<8x256xf32>
    %837 = arith.mulf %834, %836 : vector<8x256xf32>
    %838 = arith.addf %832, %837 : vector<8x256xf32>
    %c2_661 = arith.constant 2 : index
    %c0_662 = arith.constant 0 : index
    %c30_663 = arith.constant 30 : index
    %839 = vector.load %arg1[%c2_661, %c0_662, %c30_663] : memref<3x8x384xf32, #tpu.memory_space<vmem>>, vector<1x8x256xf32>
    %840 = vector.shape_cast %839 : vector<1x8x256xf32> to vector<8x256xf32>
    %c24_664 = arith.constant 24 : index
    %c4_665 = arith.constant 4 : index
    %841 = memref.load %arg2[%c24_664, %c4_665] : memref<27x6xf32, #tpu.memory_space<smem>>
    %842 = vector.broadcast %841 : f32 to vector<8x256xf32>
    %843 = arith.mulf %840, %842 : vector<8x256xf32>
    %844 = arith.addf %838, %843 : vector<8x256xf32>
    %c2_666 = arith.constant 2 : index
    %c0_667 = arith.constant 0 : index
    %c31_668 = arith.constant 31 : index
    %845 = vector.load %arg1[%c2_666, %c0_667, %c31_668] : memref<3x8x384xf32, #tpu.memory_space<vmem>>, vector<1x8x256xf32>
    %846 = vector.shape_cast %845 : vector<1x8x256xf32> to vector<8x256xf32>
    %c25_669 = arith.constant 25 : index
    %c4_670 = arith.constant 4 : index
    %847 = memref.load %arg2[%c25_669, %c4_670] : memref<27x6xf32, #tpu.memory_space<smem>>
    %848 = vector.broadcast %847 : f32 to vector<8x256xf32>
    %849 = arith.mulf %846, %848 : vector<8x256xf32>
    %850 = arith.addf %844, %849 : vector<8x256xf32>
    %c2_671 = arith.constant 2 : index
    %c0_672 = arith.constant 0 : index
    %c32_673 = arith.constant 32 : index
    %851 = vector.load %arg1[%c2_671, %c0_672, %c32_673] : memref<3x8x384xf32, #tpu.memory_space<vmem>>, vector<1x8x256xf32>
    %852 = vector.shape_cast %851 : vector<1x8x256xf32> to vector<8x256xf32>
    %c26_674 = arith.constant 26 : index
    %c4_675 = arith.constant 4 : index
    %853 = memref.load %arg2[%c26_674, %c4_675] : memref<27x6xf32, #tpu.memory_space<smem>>
    %854 = vector.broadcast %853 : f32 to vector<8x256xf32>
    %855 = arith.mulf %852, %854 : vector<8x256xf32>
    %856 = arith.addf %850, %855 : vector<8x256xf32>
    %857 = arith.addf %746, %801 : vector<8x256xf32>
    %858 = arith.addf %857, %856 : vector<8x256xf32>
    %c0_676 = arith.constant 0 : index
    %c4_677 = arith.constant 4 : index
    %859 = memref.load %arg3[%c0_676, %c4_677] : memref<1x6xf32, #tpu.memory_space<smem>>
    %860 = vector.broadcast %859 : f32 to vector<8x256xf32>
    %861 = arith.addf %858, %860 : vector<8x256xf32>
    %cst_678 = arith.constant 0.000000e+00 : f32
    %862 = vector.broadcast %cst_678 : f32 to vector<8x256xf32>
    %863 = arith.maximumf %861, %862 : vector<8x256xf32>
    %c0_679 = arith.constant 0 : index
    %c1024 = arith.constant 1024 : index
    %864 = vector.load %arg7[%c0_679, %c1024] : memref<8x1536xf32, #tpu.memory_space<vmem>>, vector<8x256xf32>
    tpu.vector_store %arg7[%c0_679, %c1024], %863 {strides = array<i32>} : memref<8x1536xf32, #tpu.memory_space<vmem>>, vector<8x256xf32>,
    %cst_680 = arith.constant 0.000000e+00 : f32
    %865 = vector.broadcast %cst_680 : f32 to vector<8x256xf32>
    %c0_681 = arith.constant 0 : index
    %c0_682 = arith.constant 0 : index
    %c0_683 = arith.constant 0 : index
    %866 = vector.load %arg1[%c0_681, %c0_682, %c0_683] : memref<3x8x384xf32, #tpu.memory_space<vmem>>, vector<1x8x256xf32>
    %867 = vector.shape_cast %866 : vector<1x8x256xf32> to vector<8x256xf32>
    %c0_684 = arith.constant 0 : index
    %c5_685 = arith.constant 5 : index
    %868 = memref.load %arg2[%c0_684, %c5_685] : memref<27x6xf32, #tpu.memory_space<smem>>
    %869 = vector.broadcast %868 : f32 to vector<8x256xf32>
    %870 = arith.mulf %867, %869 : vector<8x256xf32>
    %871 = arith.addf %865, %870 : vector<8x256xf32>
    %c0_686 = arith.constant 0 : index
    %c0_687 = arith.constant 0 : index
    %c1_688 = arith.constant 1 : index
    %872 = vector.load %arg1[%c0_686, %c0_687, %c1_688] : memref<3x8x384xf32, #tpu.memory_space<vmem>>, vector<1x8x256xf32>
    %873 = vector.shape_cast %872 : vector<1x8x256xf32> to vector<8x256xf32>
    %c1_689 = arith.constant 1 : index
    %c5_690 = arith.constant 5 : index
    %874 = memref.load %arg2[%c1_689, %c5_690] : memref<27x6xf32, #tpu.memory_space<smem>>
    %875 = vector.broadcast %874 : f32 to vector<8x256xf32>
    %876 = arith.mulf %873, %875 : vector<8x256xf32>
    %877 = arith.addf %871, %876 : vector<8x256xf32>
    %c0_691 = arith.constant 0 : index
    %c0_692 = arith.constant 0 : index
    %c2_693 = arith.constant 2 : index
    %878 = vector.load %arg1[%c0_691, %c0_692, %c2_693] : memref<3x8x384xf32, #tpu.memory_space<vmem>>, vector<1x8x256xf32>
    %879 = vector.shape_cast %878 : vector<1x8x256xf32> to vector<8x256xf32>
    %c2_694 = arith.constant 2 : index
    %c5_695 = arith.constant 5 : index
    %880 = memref.load %arg2[%c2_694, %c5_695] : memref<27x6xf32, #tpu.memory_space<smem>>
    %881 = vector.broadcast %880 : f32 to vector<8x256xf32>
    %882 = arith.mulf %879, %881 : vector<8x256xf32>
    %883 = arith.addf %877, %882 : vector<8x256xf32>
    %c0_696 = arith.constant 0 : index
    %c0_697 = arith.constant 0 : index
    %c15_698 = arith.constant 15 : index
    %884 = vector.load %arg1[%c0_696, %c0_697, %c15_698] : memref<3x8x384xf32, #tpu.memory_space<vmem>>, vector<1x8x256xf32>
    %885 = vector.shape_cast %884 : vector<1x8x256xf32> to vector<8x256xf32>
    %c3_699 = arith.constant 3 : index
    %c5_700 = arith.constant 5 : index
    %886 = memref.load %arg2[%c3_699, %c5_700] : memref<27x6xf32, #tpu.memory_space<smem>>
    %887 = vector.broadcast %886 : f32 to vector<8x256xf32>
    %888 = arith.mulf %885, %887 : vector<8x256xf32>
    %889 = arith.addf %883, %888 : vector<8x256xf32>
    %c0_701 = arith.constant 0 : index
    %c0_702 = arith.constant 0 : index
    %c16_703 = arith.constant 16 : index
    %890 = vector.load %arg1[%c0_701, %c0_702, %c16_703] : memref<3x8x384xf32, #tpu.memory_space<vmem>>, vector<1x8x256xf32>
    %891 = vector.shape_cast %890 : vector<1x8x256xf32> to vector<8x256xf32>
    %c4_704 = arith.constant 4 : index
    %c5_705 = arith.constant 5 : index
    %892 = memref.load %arg2[%c4_704, %c5_705] : memref<27x6xf32, #tpu.memory_space<smem>>
    %893 = vector.broadcast %892 : f32 to vector<8x256xf32>
    %894 = arith.mulf %891, %893 : vector<8x256xf32>
    %895 = arith.addf %889, %894 : vector<8x256xf32>
    %c0_706 = arith.constant 0 : index
    %c0_707 = arith.constant 0 : index
    %c17_708 = arith.constant 17 : index
    %896 = vector.load %arg1[%c0_706, %c0_707, %c17_708] : memref<3x8x384xf32, #tpu.memory_space<vmem>>, vector<1x8x256xf32>
    %897 = vector.shape_cast %896 : vector<1x8x256xf32> to vector<8x256xf32>
    %c5_709 = arith.constant 5 : index
    %c5_710 = arith.constant 5 : index
    %898 = memref.load %arg2[%c5_709, %c5_710] : memref<27x6xf32, #tpu.memory_space<smem>>
    %899 = vector.broadcast %898 : f32 to vector<8x256xf32>
    %900 = arith.mulf %897, %899 : vector<8x256xf32>
    %901 = arith.addf %895, %900 : vector<8x256xf32>
    %c0_711 = arith.constant 0 : index
    %c0_712 = arith.constant 0 : index
    %c30_713 = arith.constant 30 : index
    %902 = vector.load %arg1[%c0_711, %c0_712, %c30_713] : memref<3x8x384xf32, #tpu.memory_space<vmem>>, vector<1x8x256xf32>
    %903 = vector.shape_cast %902 : vector<1x8x256xf32> to vector<8x256xf32>
    %c6_714 = arith.constant 6 : index
    %c5_715 = arith.constant 5 : index
    %904 = memref.load %arg2[%c6_714, %c5_715] : memref<27x6xf32, #tpu.memory_space<smem>>
    %905 = vector.broadcast %904 : f32 to vector<8x256xf32>
    %906 = arith.mulf %903, %905 : vector<8x256xf32>
    %907 = arith.addf %901, %906 : vector<8x256xf32>
    %c0_716 = arith.constant 0 : index
    %c0_717 = arith.constant 0 : index
    %c31_718 = arith.constant 31 : index
    %908 = vector.load %arg1[%c0_716, %c0_717, %c31_718] : memref<3x8x384xf32, #tpu.memory_space<vmem>>, vector<1x8x256xf32>
    %909 = vector.shape_cast %908 : vector<1x8x256xf32> to vector<8x256xf32>
    %c7_719 = arith.constant 7 : index
    %c5_720 = arith.constant 5 : index
    %910 = memref.load %arg2[%c7_719, %c5_720] : memref<27x6xf32, #tpu.memory_space<smem>>
    %911 = vector.broadcast %910 : f32 to vector<8x256xf32>
    %912 = arith.mulf %909, %911 : vector<8x256xf32>
    %913 = arith.addf %907, %912 : vector<8x256xf32>
    %c0_721 = arith.constant 0 : index
    %c0_722 = arith.constant 0 : index
    %c32_723 = arith.constant 32 : index
    %914 = vector.load %arg1[%c0_721, %c0_722, %c32_723] : memref<3x8x384xf32, #tpu.memory_space<vmem>>, vector<1x8x256xf32>
    %915 = vector.shape_cast %914 : vector<1x8x256xf32> to vector<8x256xf32>
    %c8_724 = arith.constant 8 : index
    %c5_725 = arith.constant 5 : index
    %916 = memref.load %arg2[%c8_724, %c5_725] : memref<27x6xf32, #tpu.memory_space<smem>>
    %917 = vector.broadcast %916 : f32 to vector<8x256xf32>
    %918 = arith.mulf %915, %917 : vector<8x256xf32>
    %919 = arith.addf %913, %918 : vector<8x256xf32>
    %cst_726 = arith.constant 0.000000e+00 : f32
    %920 = vector.broadcast %cst_726 : f32 to vector<8x256xf32>
    %c1_727 = arith.constant 1 : index
    %c0_728 = arith.constant 0 : index
    %c0_729 = arith.constant 0 : index
    %921 = vector.load %arg1[%c1_727, %c0_728, %c0_729] : memref<3x8x384xf32, #tpu.memory_space<vmem>>, vector<1x8x256xf32>
    %922 = vector.shape_cast %921 : vector<1x8x256xf32> to vector<8x256xf32>
    %c9_730 = arith.constant 9 : index
    %c5_731 = arith.constant 5 : index
    %923 = memref.load %arg2[%c9_730, %c5_731] : memref<27x6xf32, #tpu.memory_space<smem>>
    %924 = vector.broadcast %923 : f32 to vector<8x256xf32>
    %925 = arith.mulf %922, %924 : vector<8x256xf32>
    %926 = arith.addf %920, %925 : vector<8x256xf32>
    %c1_732 = arith.constant 1 : index
    %c0_733 = arith.constant 0 : index
    %c1_734 = arith.constant 1 : index
    %927 = vector.load %arg1[%c1_732, %c0_733, %c1_734] : memref<3x8x384xf32, #tpu.memory_space<vmem>>, vector<1x8x256xf32>
    %928 = vector.shape_cast %927 : vector<1x8x256xf32> to vector<8x256xf32>
    %c10_735 = arith.constant 10 : index
    %c5_736 = arith.constant 5 : index
    %929 = memref.load %arg2[%c10_735, %c5_736] : memref<27x6xf32, #tpu.memory_space<smem>>
    %930 = vector.broadcast %929 : f32 to vector<8x256xf32>
    %931 = arith.mulf %928, %930 : vector<8x256xf32>
    %932 = arith.addf %926, %931 : vector<8x256xf32>
    %c1_737 = arith.constant 1 : index
    %c0_738 = arith.constant 0 : index
    %c2_739 = arith.constant 2 : index
    %933 = vector.load %arg1[%c1_737, %c0_738, %c2_739] : memref<3x8x384xf32, #tpu.memory_space<vmem>>, vector<1x8x256xf32>
    %934 = vector.shape_cast %933 : vector<1x8x256xf32> to vector<8x256xf32>
    %c11_740 = arith.constant 11 : index
    %c5_741 = arith.constant 5 : index
    %935 = memref.load %arg2[%c11_740, %c5_741] : memref<27x6xf32, #tpu.memory_space<smem>>
    %936 = vector.broadcast %935 : f32 to vector<8x256xf32>
    %937 = arith.mulf %934, %936 : vector<8x256xf32>
    %938 = arith.addf %932, %937 : vector<8x256xf32>
    %c1_742 = arith.constant 1 : index
    %c0_743 = arith.constant 0 : index
    %c15_744 = arith.constant 15 : index
    %939 = vector.load %arg1[%c1_742, %c0_743, %c15_744] : memref<3x8x384xf32, #tpu.memory_space<vmem>>, vector<1x8x256xf32>
    %940 = vector.shape_cast %939 : vector<1x8x256xf32> to vector<8x256xf32>
    %c12_745 = arith.constant 12 : index
    %c5_746 = arith.constant 5 : index
    %941 = memref.load %arg2[%c12_745, %c5_746] : memref<27x6xf32, #tpu.memory_space<smem>>
    %942 = vector.broadcast %941 : f32 to vector<8x256xf32>
    %943 = arith.mulf %940, %942 : vector<8x256xf32>
    %944 = arith.addf %938, %943 : vector<8x256xf32>
    %c1_747 = arith.constant 1 : index
    %c0_748 = arith.constant 0 : index
    %c16_749 = arith.constant 16 : index
    %945 = vector.load %arg1[%c1_747, %c0_748, %c16_749] : memref<3x8x384xf32, #tpu.memory_space<vmem>>, vector<1x8x256xf32>
    %946 = vector.shape_cast %945 : vector<1x8x256xf32> to vector<8x256xf32>
    %c13_750 = arith.constant 13 : index
    %c5_751 = arith.constant 5 : index
    %947 = memref.load %arg2[%c13_750, %c5_751] : memref<27x6xf32, #tpu.memory_space<smem>>
    %948 = vector.broadcast %947 : f32 to vector<8x256xf32>
    %949 = arith.mulf %946, %948 : vector<8x256xf32>
    %950 = arith.addf %944, %949 : vector<8x256xf32>
    %c1_752 = arith.constant 1 : index
    %c0_753 = arith.constant 0 : index
    %c17_754 = arith.constant 17 : index
    %951 = vector.load %arg1[%c1_752, %c0_753, %c17_754] : memref<3x8x384xf32, #tpu.memory_space<vmem>>, vector<1x8x256xf32>
    %952 = vector.shape_cast %951 : vector<1x8x256xf32> to vector<8x256xf32>
    %c14_755 = arith.constant 14 : index
    %c5_756 = arith.constant 5 : index
    %953 = memref.load %arg2[%c14_755, %c5_756] : memref<27x6xf32, #tpu.memory_space<smem>>
    %954 = vector.broadcast %953 : f32 to vector<8x256xf32>
    %955 = arith.mulf %952, %954 : vector<8x256xf32>
    %956 = arith.addf %950, %955 : vector<8x256xf32>
    %c1_757 = arith.constant 1 : index
    %c0_758 = arith.constant 0 : index
    %c30_759 = arith.constant 30 : index
    %957 = vector.load %arg1[%c1_757, %c0_758, %c30_759] : memref<3x8x384xf32, #tpu.memory_space<vmem>>, vector<1x8x256xf32>
    %958 = vector.shape_cast %957 : vector<1x8x256xf32> to vector<8x256xf32>
    %c15_760 = arith.constant 15 : index
    %c5_761 = arith.constant 5 : index
    %959 = memref.load %arg2[%c15_760, %c5_761] : memref<27x6xf32, #tpu.memory_space<smem>>
    %960 = vector.broadcast %959 : f32 to vector<8x256xf32>
    %961 = arith.mulf %958, %960 : vector<8x256xf32>
    %962 = arith.addf %956, %961 : vector<8x256xf32>
    %c1_762 = arith.constant 1 : index
    %c0_763 = arith.constant 0 : index
    %c31_764 = arith.constant 31 : index
    %963 = vector.load %arg1[%c1_762, %c0_763, %c31_764] : memref<3x8x384xf32, #tpu.memory_space<vmem>>, vector<1x8x256xf32>
    %964 = vector.shape_cast %963 : vector<1x8x256xf32> to vector<8x256xf32>
    %c16_765 = arith.constant 16 : index
    %c5_766 = arith.constant 5 : index
    %965 = memref.load %arg2[%c16_765, %c5_766] : memref<27x6xf32, #tpu.memory_space<smem>>
    %966 = vector.broadcast %965 : f32 to vector<8x256xf32>
    %967 = arith.mulf %964, %966 : vector<8x256xf32>
    %968 = arith.addf %962, %967 : vector<8x256xf32>
    %c1_767 = arith.constant 1 : index
    %c0_768 = arith.constant 0 : index
    %c32_769 = arith.constant 32 : index
    %969 = vector.load %arg1[%c1_767, %c0_768, %c32_769] : memref<3x8x384xf32, #tpu.memory_space<vmem>>, vector<1x8x256xf32>
    %970 = vector.shape_cast %969 : vector<1x8x256xf32> to vector<8x256xf32>
    %c17_770 = arith.constant 17 : index
    %c5_771 = arith.constant 5 : index
    %971 = memref.load %arg2[%c17_770, %c5_771] : memref<27x6xf32, #tpu.memory_space<smem>>
    %972 = vector.broadcast %971 : f32 to vector<8x256xf32>
    %973 = arith.mulf %970, %972 : vector<8x256xf32>
    %974 = arith.addf %968, %973 : vector<8x256xf32>
    %cst_772 = arith.constant 0.000000e+00 : f32
    %975 = vector.broadcast %cst_772 : f32 to vector<8x256xf32>
    %c2_773 = arith.constant 2 : index
    %c0_774 = arith.constant 0 : index
    %c0_775 = arith.constant 0 : index
    %976 = vector.load %arg1[%c2_773, %c0_774, %c0_775] : memref<3x8x384xf32, #tpu.memory_space<vmem>>, vector<1x8x256xf32>
    %977 = vector.shape_cast %976 : vector<1x8x256xf32> to vector<8x256xf32>
    %c18_776 = arith.constant 18 : index
    %c5_777 = arith.constant 5 : index
    %978 = memref.load %arg2[%c18_776, %c5_777] : memref<27x6xf32, #tpu.memory_space<smem>>
    %979 = vector.broadcast %978 : f32 to vector<8x256xf32>
    %980 = arith.mulf %977, %979 : vector<8x256xf32>
    %981 = arith.addf %975, %980 : vector<8x256xf32>
    %c2_778 = arith.constant 2 : index
    %c0_779 = arith.constant 0 : index
    %c1_780 = arith.constant 1 : index
    %982 = vector.load %arg1[%c2_778, %c0_779, %c1_780] : memref<3x8x384xf32, #tpu.memory_space<vmem>>, vector<1x8x256xf32>
    %983 = vector.shape_cast %982 : vector<1x8x256xf32> to vector<8x256xf32>
    %c19_781 = arith.constant 19 : index
    %c5_782 = arith.constant 5 : index
    %984 = memref.load %arg2[%c19_781, %c5_782] : memref<27x6xf32, #tpu.memory_space<smem>>
    %985 = vector.broadcast %984 : f32 to vector<8x256xf32>
    %986 = arith.mulf %983, %985 : vector<8x256xf32>
    %987 = arith.addf %981, %986 : vector<8x256xf32>
    %c2_783 = arith.constant 2 : index
    %c0_784 = arith.constant 0 : index
    %c2_785 = arith.constant 2 : index
    %988 = vector.load %arg1[%c2_783, %c0_784, %c2_785] : memref<3x8x384xf32, #tpu.memory_space<vmem>>, vector<1x8x256xf32>
    %989 = vector.shape_cast %988 : vector<1x8x256xf32> to vector<8x256xf32>
    %c20_786 = arith.constant 20 : index
    %c5_787 = arith.constant 5 : index
    %990 = memref.load %arg2[%c20_786, %c5_787] : memref<27x6xf32, #tpu.memory_space<smem>>
    %991 = vector.broadcast %990 : f32 to vector<8x256xf32>
    %992 = arith.mulf %989, %991 : vector<8x256xf32>
    %993 = arith.addf %987, %992 : vector<8x256xf32>
    %c2_788 = arith.constant 2 : index
    %c0_789 = arith.constant 0 : index
    %c15_790 = arith.constant 15 : index
    %994 = vector.load %arg1[%c2_788, %c0_789, %c15_790] : memref<3x8x384xf32, #tpu.memory_space<vmem>>, vector<1x8x256xf32>
    %995 = vector.shape_cast %994 : vector<1x8x256xf32> to vector<8x256xf32>
    %c21_791 = arith.constant 21 : index
    %c5_792 = arith.constant 5 : index
    %996 = memref.load %arg2[%c21_791, %c5_792] : memref<27x6xf32, #tpu.memory_space<smem>>
    %997 = vector.broadcast %996 : f32 to vector<8x256xf32>
    %998 = arith.mulf %995, %997 : vector<8x256xf32>
    %999 = arith.addf %993, %998 : vector<8x256xf32>
    %c2_793 = arith.constant 2 : index
    %c0_794 = arith.constant 0 : index
    %c16_795 = arith.constant 16 : index
    %1000 = vector.load %arg1[%c2_793, %c0_794, %c16_795] : memref<3x8x384xf32, #tpu.memory_space<vmem>>, vector<1x8x256xf32>
    %1001 = vector.shape_cast %1000 : vector<1x8x256xf32> to vector<8x256xf32>
    %c22_796 = arith.constant 22 : index
    %c5_797 = arith.constant 5 : index
    %1002 = memref.load %arg2[%c22_796, %c5_797] : memref<27x6xf32, #tpu.memory_space<smem>>
    %1003 = vector.broadcast %1002 : f32 to vector<8x256xf32>
    %1004 = arith.mulf %1001, %1003 : vector<8x256xf32>
    %1005 = arith.addf %999, %1004 : vector<8x256xf32>
    %c2_798 = arith.constant 2 : index
    %c0_799 = arith.constant 0 : index
    %c17_800 = arith.constant 17 : index
    %1006 = vector.load %arg1[%c2_798, %c0_799, %c17_800] : memref<3x8x384xf32, #tpu.memory_space<vmem>>, vector<1x8x256xf32>
    %1007 = vector.shape_cast %1006 : vector<1x8x256xf32> to vector<8x256xf32>
    %c23_801 = arith.constant 23 : index
    %c5_802 = arith.constant 5 : index
    %1008 = memref.load %arg2[%c23_801, %c5_802] : memref<27x6xf32, #tpu.memory_space<smem>>
    %1009 = vector.broadcast %1008 : f32 to vector<8x256xf32>
    %1010 = arith.mulf %1007, %1009 : vector<8x256xf32>
    %1011 = arith.addf %1005, %1010 : vector<8x256xf32>
    %c2_803 = arith.constant 2 : index
    %c0_804 = arith.constant 0 : index
    %c30_805 = arith.constant 30 : index
    %1012 = vector.load %arg1[%c2_803, %c0_804, %c30_805] : memref<3x8x384xf32, #tpu.memory_space<vmem>>, vector<1x8x256xf32>
    %1013 = vector.shape_cast %1012 : vector<1x8x256xf32> to vector<8x256xf32>
    %c24_806 = arith.constant 24 : index
    %c5_807 = arith.constant 5 : index
    %1014 = memref.load %arg2[%c24_806, %c5_807] : memref<27x6xf32, #tpu.memory_space<smem>>
    %1015 = vector.broadcast %1014 : f32 to vector<8x256xf32>
    %1016 = arith.mulf %1013, %1015 : vector<8x256xf32>
    %1017 = arith.addf %1011, %1016 : vector<8x256xf32>
    %c2_808 = arith.constant 2 : index
    %c0_809 = arith.constant 0 : index
    %c31_810 = arith.constant 31 : index
    %1018 = vector.load %arg1[%c2_808, %c0_809, %c31_810] : memref<3x8x384xf32, #tpu.memory_space<vmem>>, vector<1x8x256xf32>
    %1019 = vector.shape_cast %1018 : vector<1x8x256xf32> to vector<8x256xf32>
    %c25_811 = arith.constant 25 : index
    %c5_812 = arith.constant 5 : index
    %1020 = memref.load %arg2[%c25_811, %c5_812] : memref<27x6xf32, #tpu.memory_space<smem>>
    %1021 = vector.broadcast %1020 : f32 to vector<8x256xf32>
    %1022 = arith.mulf %1019, %1021 : vector<8x256xf32>
    %1023 = arith.addf %1017, %1022 : vector<8x256xf32>
    %c2_813 = arith.constant 2 : index
    %c0_814 = arith.constant 0 : index
    %c32_815 = arith.constant 32 : index
    %1024 = vector.load %arg1[%c2_813, %c0_814, %c32_815] : memref<3x8x384xf32, #tpu.memory_space<vmem>>, vector<1x8x256xf32>
    %1025 = vector.shape_cast %1024 : vector<1x8x256xf32> to vector<8x256xf32>
    %c26_816 = arith.constant 26 : index
    %c5_817 = arith.constant 5 : index
    %1026 = memref.load %arg2[%c26_816, %c5_817] : memref<27x6xf32, #tpu.memory_space<smem>>
    %1027 = vector.broadcast %1026 : f32 to vector<8x256xf32>
    %1028 = arith.mulf %1025, %1027 : vector<8x256xf32>
    %1029 = arith.addf %1023, %1028 : vector<8x256xf32>
    %1030 = arith.addf %919, %974 : vector<8x256xf32>
    %1031 = arith.addf %1030, %1029 : vector<8x256xf32>
    %c0_818 = arith.constant 0 : index
    %c5_819 = arith.constant 5 : index
    %1032 = memref.load %arg3[%c0_818, %c5_819] : memref<1x6xf32, #tpu.memory_space<smem>>
    %1033 = vector.broadcast %1032 : f32 to vector<8x256xf32>
    %1034 = arith.addf %1031, %1033 : vector<8x256xf32>
    %cst_820 = arith.constant 0.000000e+00 : f32
    %1035 = vector.broadcast %cst_820 : f32 to vector<8x256xf32>
    %1036 = arith.maximumf %1034, %1035 : vector<8x256xf32>
    %c0_821 = arith.constant 0 : index
    %c1280 = arith.constant 1280 : index
    %1037 = vector.load %arg7[%c0_821, %c1280] : memref<8x1536xf32, #tpu.memory_space<vmem>>, vector<8x256xf32>
    tpu.vector_store %arg7[%c0_821, %c1280], %1036 {strides = array<i32>} : memref<8x1536xf32, #tpu.memory_space<vmem>>, vector<8x256xf32>,
    %c0_822 = arith.constant 0 : index
    %c0_823 = arith.constant 0 : index
    %1038 = vector.load %arg7[%c0_822, %c0_823] : memref<8x1536xf32, #tpu.memory_space<vmem>>, vector<8x1536xf32>
    %c0_824 = arith.constant 0 : index
    %c0_825 = arith.constant 0 : index
    %1039 = vector.load %arg4[%c0_824, %c0_825] : memref<1536x128xf32, #tpu.memory_space<vmem>>, vector<1536x128xf32>
    %cst_826 = arith.constant dense<0.000000e+00> : vector<8x128xf32>
    %1040 = tpu.matmul %1038, %1039, %cst_826 {dimension_numbers = #tpu.dot_dimension_numbers<[1], [0], [0], [1], [0, 0, 1, 1], [], []>} : vector<8x1536xf32>, vector<1536x128xf32>, vector<8x128xf32> -> vector<8x128xf32>
    %c0_827 = arith.constant 0 : index
    %c0_828 = arith.constant 0 : index
    %1041 = vector.load %arg5[%c0_827, %c0_828] : memref<1x128xf32, #tpu.memory_space<vmem>>, vector<1x128xf32>
    %1042 = vector.broadcast %1041 : vector<1x128xf32> to vector<8x128xf32>
    %1043 = arith.addf %1040, %1042 : vector<8x128xf32>
    %cst_829 = arith.constant 0.000000e+00 : f32
    %1044 = vector.broadcast %cst_829 : f32 to vector<8x128xf32>
    %1045 = arith.maximumf %1043, %1044 : vector<8x128xf32>
    %c0_830 = arith.constant 0 : index
    %c0_831 = arith.constant 0 : index
    %1046 = vector.load %arg6[%c0_830, %c0_831] : memref<8x128xf32, #tpu.memory_space<vmem>>, vector<8x128xf32>
    tpu.vector_store %arg6[%c0_830, %c0_831], %1045 {strides = array<i32>} : memref<8x128xf32, #tpu.memory_space<vmem>>, vector<8x128xf32>,
    return
  }
  func.func @transform_0(%arg0: i32) -> (i32, i32, i32) {
    %c0_i32 = arith.constant 0 : i32
    %c0_i32_0 = arith.constant 0 : i32
    %c0_i32_1 = arith.constant 0 : i32
    return %c0_i32, %arg0, %c0_i32_0 : i32, i32, i32
  }
  func.func @transform_1(%arg0: i32) -> (i32, i32) {
    %c0_i32 = arith.constant 0 : i32
    %c0_i32_0 = arith.constant 0 : i32
    %c0_i32_1 = arith.constant 0 : i32
    return %c0_i32, %c0_i32_0 : i32, i32
  }
  func.func @transform_2(%arg0: i32) -> (i32, i32) {
    %c0_i32 = arith.constant 0 : i32
    %c0_i32_0 = arith.constant 0 : i32
    %c0_i32_1 = arith.constant 0 : i32
    return %c0_i32, %c0_i32_0 : i32, i32
  }
  func.func @transform_3(%arg0: i32) -> (i32, i32) {
    %c0_i32 = arith.constant 0 : i32
    %c0_i32_0 = arith.constant 0 : i32
    %c0_i32_1 = arith.constant 0 : i32
    return %c0_i32, %c0_i32_0 : i32, i32
  }
  func.func @transform_4(%arg0: i32) -> (i32, i32) {
    %c0_i32 = arith.constant 0 : i32
    %c0_i32_0 = arith.constant 0 : i32
    %c0_i32_1 = arith.constant 0 : i32
    return %c0_i32, %c0_i32_0 : i32, i32
  }
  func.func @transform_5(%arg0: i32) -> (i32, i32) {
    %c0_i32 = arith.constant 0 : i32
    %c0_i32_0 = arith.constant 0 : i32
    return %arg0, %c0_i32 : i32, i32
  }
}

</mosaic_0001>

<llo_original>
// kernel: tpu_custom_call.1
$region0: #{tpu_custom_call.1}
  #allocation0 [shape = 'u32[]', space=smem, size = 0x4, offset = 0x4, fixed_abs, tag = 'smem constant byte address 0x4 - core index']
  #allocation1 [shape = 'u32[144,128]{1,0:T(1,128)}', space=vmem, size = 0x12000, scoped, tag = 'internal scratch']
  #allocation2 [shape = 'f32[8,1536]{1,0:T(8,128)}', space=vmem, size = 0xc000, scoped, tag = 'scratch operand']
  %s0 = inlined_call_operand.hbm [shape: f32[3,16,384], index: 0, kind: input, shape index: {}]
  %s1 = inlined_call_operand.vmem [shape: f32[27,6], index: 1, kind: input, shape index: {}]
  %s2 = inlined_call_operand.vmem [shape: f32[1,6], index: 2, kind: input, shape index: {}]
  %s3 = inlined_call_operand.hbm [shape: f32[1536,128], index: 3, kind: input, shape index: {}]
  %s4 = inlined_call_operand.vmem [shape: f32[1,128], index: 4, kind: input, shape index: {}]
  %s5 = inlined_call_operand.hbm [shape: f32[16,128], index: 5, kind: output, shape index: {}]
  %s6 = sld [smem:[#allocation0]]
  $region69: #{tpu_custom_call.1} parent=0
    _
  %s8 = ssub.s32 1, %s6
  %s9 = scalar_select 0, %s8, %s6
  $region1: #{tpu_custom_call.1} parent=0
    #allocation3 [shape = 'u8[73728]{0}', space=vmem, size = 0x12000, scoped, tag = 'input window, operand 0']
    #allocation4 [shape = 's32[2]{0}', space=sflag, size = 0x8, scoped, tag = 'scoped memory for tpu_custom_call.1']
    #allocation5 [shape = 's32[2]{0}', space=sflag, size = 0x8, scoped, tag = 'scoped memory for tpu_custom_call.1']
    #allocation6 [shape = 's32[2]{0}', space=sflag, size = 0x8, scoped, tag = 'scoped memory for tpu_custom_call.1']
    #allocation7 [shape = 'u8[16384]{0}', space=smem, size = 0x4000, scoped, tag = 'input window, operand 1, single buffered']
    #allocation8 [shape = 'u8[512]{0}', space=smem, size = 0x200, scoped, tag = 'input window, operand 2, single buffered']
    #allocation9 [shape = 's32[1]{0}', space=sflag, size = 0x4, scoped, tag = 'scoped memory for tpu_custom_call.1']
    #allocation10 [shape = 'u8[786432]{0}', space=vmem, size = 0xc0000, scoped, tag = 'input window, operand 3, single buffered']
    #allocation11 [shape = 's32[1]{0}', space=sflag, size = 0x4, scoped, tag = 'scoped memory for tpu_custom_call.1']
    #allocation12 [shape = 'u8[8192]{0}', space=vmem, size = 0x2000, scoped, tag = 'output window, operand 0']
    %10 = vsyncpa [#allocation4], 0
    %s11 = scalar_lea.sflag [#allocation4], 1
    %12 = vsyncpa %s11, 0
    %13 = vsyncpa [#allocation6], 0
    %14 = vsyncpa [#allocation9], 0
    %15 = vsyncpa [#allocation11], 0
    %16 = vsyncpa [#allocation5], 0
    %s17 = scalar_lea.sflag [#allocation5], 1
    %18 = vsyncpa %s17, 0
    loop: start=0, step=1, limit=4
    $region2: #{tpu_custom_call.1} parent=1 // loop_pre_header
      _
    $region3: #{tpu_custom_call.1} parent=1 // loop_header
      %s20 = sphi 0, %s24
      %p21 = scmp.ge.s32.totalorder %s20, 4
      %s30 = sphi 0, %s32
      %s33 = sphi 0, %s30
      %s34 = sphi 0, %s33
      %s50 = sphi 0, %s34
      %s54 = sphi 0, %s54
      %s56 = sphi 0, %s54
      %s57 = sphi 0, %s56
      %s71 = sphi 0, %s57
      %s75 = sphi 0, %s75
      %s77 = sphi 0, %s75
      %s78 = sphi 0, %s77
      %s92 = sphi 0, %s78
      %s96 = sphi 0, %s96
      %s98 = sphi 0, %s96
      %s99 = sphi 0, %s98
      %s113 = sphi 0, %s99
      %s117 = sphi 0, %s117
      %s119 = sphi 0, %s117
      %s120 = sphi 0, %s119
      %s134 = sphi 0, %s120
      %s140 = sphi 0, %s142
      %s143 = sphi 0, %s140
      %s144 = sphi 0, %s143
      %s160 = sphi 0, %s144
    $region4: #{tpu_custom_call.1} parent=1 // loop_header_branch
      %23 = sbr.rel (%p21) target = $region8
    $region5: #{tpu_custom_call.1} parent=1 // loop_body
      %s25 = ssub.s32 %s20, 1
      %s26 = ssub.s32 %s20, 2
      %s27 = sadd.s32 %s20, 1
      %s28 = ssub.s32 %s20, %s27
      %p29 = scmp.eq.s32.totalorder %s28, 0
      %s31 = sadd.s32 %s30, 1
      %s32 = scalar_select %p29, %s30, %s31
      %p35 = pneg %p29
      %p36 = scmp.eq.s32.totalorder %s20, 1
      %p37 = por %p35, %p36
      %p38 = scmp.ne.s32.totalorder %s30, %s33
      %p39 = scmp.eq.s32.totalorder %s20, 0
      %p40 = por %p38, %p39
      %p41 = scmp.ne.s32.totalorder %s30, %s33
      %p42 = scmp.eq.s32.totalorder %s25, 1
      %p43 = por %p41, %p42
      %p44 = scmp.ne.s32.totalorder %s33, %s34
      %p45 = scmp.eq.s32.totalorder %s25, 0
      %p46 = por %p44, %p45
      %p47 = scmp.ne.s32.totalorder %s33, %s34
      %p48 = scmp.eq.s32.totalorder %s26, 1
      %p49 = por %p47, %p48
      %p51 = scmp.ne.s32.totalorder %s34, %s50
      %p52 = scmp.eq.s32.totalorder %s26, 0
      %p53 = por %p51, %p52
      %s55 = sadd.s32 %s54, 1
      %p58 = scmp.eq.s32.totalorder %s20, 1
      %p59 = scmp.ne.s32.totalorder %s54, %s56
      %p60 = scmp.eq.s32.totalorder %s20, 0
      %p61 = por %p59, %p60
      %p62 = scmp.ne.s32.totalorder %s54, %s56
      %p63 = scmp.eq.s32.totalorder %s25, 1
      %p64 = por %p62, %p63
      %p65 = scmp.ne.s32.totalorder %s56, %s57
      %p66 = scmp.eq.s32.totalorder %s25, 0
      %p67 = por %p65, %p66
      %p68 = scmp.ne.s32.totalorder %s56, %s57
      %p69 = scmp.eq.s32.totalorder %s26, 1
      %p70 = por %p68, %p69
      %p72 = scmp.ne.s32.totalorder %s57, %s71
      %p73 = scmp.eq.s32.totalorder %s26, 0
      %p74 = por %p72, %p73
      %s76 = sadd.s32 %s75, 1
      %p79 = scmp.eq.s32.totalorder %s20, 1
      %p80 = scmp.ne.s32.totalorder %s75, %s77
      %p81 = scmp.eq.s32.totalorder %s20, 0
      %p82 = por %p80, %p81
      %p83 = scmp.ne.s32.totalorder %s75, %s77
      %p84 = scmp.eq.s32.totalorder %s25, 1
      %p85 = por %p83, %p84
      %p86 = scmp.ne.s32.totalorder %s77, %s78
      %p87 = scmp.eq.s32.totalorder %s25, 0
      %p88 = por %p86, %p87
      %p89 = scmp.ne.s32.totalorder %s77, %s78
      %p90 = scmp.eq.s32.totalorder %s26, 1
      %p91 = por %p89, %p90
      %p93 = scmp.ne.s32.totalorder %s78, %s92
      %p94 = scmp.eq.s32.totalorder %s26, 0
      %p95 = por %p93, %p94
      %s97 = sadd.s32 %s96, 1
      %p100 = scmp.eq.s32.totalorder %s20, 1
      %p101 = scmp.ne.s32.totalorder %s96, %s98
      %p102 = scmp.eq.s32.totalorder %s20, 0
      %p103 = por %p101, %p102
      %p104 = scmp.ne.s32.totalorder %s96, %s98
      %p105 = scmp.eq.s32.totalorder %s25, 1
      %p106 = por %p104, %p105
      %p107 = scmp.ne.s32.totalorder %s98, %s99
      %p108 = scmp.eq.s32.totalorder %s25, 0
      %p109 = por %p107, %p108
      %p110 = scmp.ne.s32.totalorder %s98, %s99
      %p111 = scmp.eq.s32.totalorder %s26, 1
      %p112 = por %p110, %p111
      %p114 = scmp.ne.s32.totalorder %s99, %s113
      %p115 = scmp.eq.s32.totalorder %s26, 0
      %p116 = por %p114, %p115
      %s118 = sadd.s32 %s117, 1
      %p121 = scmp.eq.s32.totalorder %s20, 1
      %p122 = scmp.ne.s32.totalorder %s117, %s119
      %p123 = scmp.eq.s32.totalorder %s20, 0
      %p124 = por %p122, %p123
      %p125 = scmp.ne.s32.totalorder %s117, %s119
      %p126 = scmp.eq.s32.totalorder %s25, 1
      %p127 = por %p125, %p126
      %p128 = scmp.ne.s32.totalorder %s119, %s120
      %p129 = scmp.eq.s32.totalorder %s25, 0
      %p130 = por %p128, %p129
      %p131 = scmp.ne.s32.totalorder %s119, %s120
      %p132 = scmp.eq.s32.totalorder %s26, 1
      %p133 = por %p131, %p132
      %p135 = scmp.ne.s32.totalorder %s120, %s134
      %p136 = scmp.eq.s32.totalorder %s26, 0
      %p137 = por %p135, %p136
      %s138 = ssub.s32 %s20, %s27
      %p139 = scmp.eq.s32.totalorder %s138, 0
      %s141 = sadd.s32 %s140, 1
      %s142 = scalar_select %p139, %s140, %s141
      %p145 = pneg %p139
      %p146 = scmp.eq.s32.totalorder %s20, 1
      %p147 = por %p145, %p146
      %p148 = scmp.ne.s32.totalorder %s140, %s143
      %p149 = scmp.eq.s32.totalorder %s20, 0
      %p150 = por %p148, %p149
      %p151 = scmp.ne.s32.totalorder %s140, %s143
      %p152 = scmp.eq.s32.totalorder %s25, 1
      %p153 = por %p151, %p152
      %p154 = scmp.ne.s32.totalorder %s143, %s144
      %p155 = scmp.eq.s32.totalorder %s25, 0
      %p156 = por %p154, %p155
      %p157 = scmp.ne.s32.totalorder %s143, %s144
      %p158 = scmp.eq.s32.totalorder %s26, 1
      %p159 = por %p157, %p158
      %p161 = scmp.ne.s32.totalorder %s144, %s160
      %p162 = scmp.eq.s32.totalorder %s26, 0
      %p163 = por %p161, %p162
      %p164 = scmp.le.s32.totalorder 1, %s20
      %p165 = scmp.lt.s32.totalorder %s20, 3
      %p166 = pnand %p164, %p165
      %p167 = pneg %p166
      // Predicated region
      $region9: #{tpu_custom_call.1} parent=5 // pred_check
        _
      $region10: #{tpu_custom_call.1} parent=5 // pred_check_branch
        %169 = sbr.rel (%p166) target = $region12
      $region11: #{tpu_custom_call.1} parent=5 // pred_region
        %s170 = ssub.s32 %s20, 1
        // Predicated region
        $region13: #{tpu_custom_call.1} parent=11 // pred_check
          %p171 = pneg %p67
        $region14: #{tpu_custom_call.1} parent=11 // pred_check_branch
          %173 = sbr.rel (%p171) target = $region16
        $region15: #{tpu_custom_call.1} parent=11 // pred_region
          %s175 = ssub.s32 512, 512
          %176 = vsyncadd [#allocation6], %s175
          %s177 = sshll.u32 %s1, 4
          %s178 = int_to_ptr.vmem [resolvable:$true] %s177
          %183 = dma.vmem_to_smem %s178, 512, [#allocation7], [#allocation6], 128, 128, 8
        $region16: #{tpu_custom_call.1} parent=11 // pred_fallthru
          _
        // Predicated region
        $region17: #{tpu_custom_call.1} parent=11 // pred_check
          %p184 = pneg %p88
        $region18: #{tpu_custom_call.1} parent=11 // pred_check_branch
          %186 = sbr.rel (%p184) target = $region20
        $region19: #{tpu_custom_call.1} parent=11 // pred_region
          %s188 = ssub.s32 16, 16
          %189 = vsyncadd [#allocation9], %s188
          %s191 = sshll.u32 %s2, 4
          %s192 = int_to_ptr.vmem [resolvable:$true] %s191
          %194 = dma.vmem_to_smem %s192, 16, [#allocation8], [#allocation9]
        $region20: #{tpu_custom_call.1} parent=11 // pred_fallthru
          _
        // Predicated region
        $region21: #{tpu_custom_call.1} parent=11 // pred_check
          %p195 = pneg %p109
        $region22: #{tpu_custom_call.1} parent=11 // pred_check_branch
          %197 = sbr.rel (%p195) target = $region24
        $region23: #{tpu_custom_call.1} parent=11 // pred_region
          %s199 = ssub.s32 24576, 24576
          %200 = vsyncadd [#allocation11], %s199
          %s201 = sshll.u32 [#allocation10], 4
          %s202 = int_to_ptr.vmem [resolvable:$true] %s201
          %207 = dma.hbm_to_vmem [thread:$0]  %s3, 24576, %s202, [#allocation11], 128, 128, 8
        $region24: #{tpu_custom_call.1} parent=11 // pred_fallthru
          _
        // Predicated region
        $region25: #{tpu_custom_call.1} parent=11 // pred_check
          %p208 = pneg %p130
        $region26: #{tpu_custom_call.1} parent=11 // pred_check_branch
          %210 = sbr.rel (%p208) target = $region28
        $region27: #{tpu_custom_call.1} parent=11 // pred_region
          _
        $region28: #{tpu_custom_call.1} parent=11 // pred_fallthru
          _
      $region12: #{tpu_custom_call.1} parent=5 // pred_fallthru
        _
      %p211 = scmp.lt.s32.totalorder %s20, 2
      // Predicated region
      $region29: #{tpu_custom_call.1} parent=5 // pred_check
        %p212 = pneg %p211
      $region30: #{tpu_custom_call.1} parent=5 // pred_check_branch
        %214 = sbr.rel (%p212) target = $region32
      $region31: #{tpu_custom_call.1} parent=5 // pred_region
        // Predicated region
        $region33: #{tpu_custom_call.1} parent=31 // pred_check
          %p215 = pneg %p40
        $region34: #{tpu_custom_call.1} parent=31 // pred_check_branch
          %217 = sbr.rel (%p215) target = $region36
        $region35: #{tpu_custom_call.1} parent=31 // pred_region
          %s218 = sand.u32 %s30, 1
          %s219 = scalar_lea.sflag [#allocation4], %s218
          %s220 = sand.u32 %s30, 1
          %s221 = smul.addr %s220, 72
          %s222 = scalar_lea.vmem [#allocation3], %s221
          %s224 = ssub.s32 1152, 1152
          %225 = vsyncadd %s219, %s224
          %s226 = smul.addr %s20, 3
          %s227 = smul.addr %s226, 128
          %s228 = scalar_lea.hbm %s0, %s227
          %s229 = sshll.u32 %s222, 4
          %s230 = int_to_ptr.vmem [resolvable:$true] %s229
          %235 = dma.hbm_to_vmem [thread:$0]  %s228, 1152, %s230, %s219, 768, 384, 24
        $region36: #{tpu_custom_call.1} parent=31 // pred_fallthru
          _
      $region32: #{tpu_custom_call.1} parent=5 // pred_fallthru
        _
      %p236 = scmp.le.s32.totalorder 1, %s20
      %p237 = scmp.lt.s32.totalorder %s20, 3
      %p238 = pnand %p236, %p237
      %p239 = pneg %p238
      // Predicated region
      $region37: #{tpu_custom_call.1} parent=5 // pred_check
        _
      $region38: #{tpu_custom_call.1} parent=5 // pred_check_branch
        %241 = sbr.rel (%p238) target = $region40
      $region39: #{tpu_custom_call.1} parent=5 // pred_region
        %s242 = ssub.s32 %s20, 1
        %s243 = sand.u32 %s33, 1
        %s244 = scalar_lea.sflag [#allocation4], %s243
        %s245 = sand.u32 %s33, 1
        %s246 = smul.addr %s245, 72
        %s247 = scalar_lea.vmem [#allocation3], %s246
        // Predicated region
        $region41: #{tpu_custom_call.1} parent=39 // pred_check
          %p248 = pneg %p46
        $region42: #{tpu_custom_call.1} parent=39 // pred_check_branch
          %250 = sbr.rel (%p248) target = $region44
        $region43: #{tpu_custom_call.1} parent=39 // pred_region
          %251 = dma.done %s244, 1152
        $region44: #{tpu_custom_call.1} parent=39 // pred_fallthru
          _
        // Predicated region
        $region45: #{tpu_custom_call.1} parent=39 // pred_check
          %p252 = pneg %p67
        $region46: #{tpu_custom_call.1} parent=39 // pred_check_branch
          %254 = sbr.rel (%p252) target = $region48
        $region47: #{tpu_custom_call.1} parent=39 // pred_region
          %255 = dma.done [#allocation6], 512
        $region48: #{tpu_custom_call.1} parent=39 // pred_fallthru
          _
        // Predicated region
        $region49: #{tpu_custom_call.1} parent=39 // pred_check
          %p256 = pneg %p88
        $region50: #{tpu_custom_call.1} parent=39 // pred_check_branch
          %258 = sbr.rel (%p256) target = $region52
        $region51: #{tpu_custom_call.1} parent=39 // pred_region
          %259 = dma.done [#allocation9], 16
        $region52: #{tpu_custom_call.1} parent=39 // pred_fallthru
          _
        // Predicated region
        $region53: #{tpu_custom_call.1} parent=39 // pred_check
          %p260 = pneg %p109
        $region54: #{tpu_custom_call.1} parent=39 // pred_check_branch
          %262 = sbr.rel (%p260) target = $region56
        $region55: #{tpu_custom_call.1} parent=39 // pred_region
          %263 = dma.done [#allocation11], 24576
        $region56: #{tpu_custom_call.1} parent=39 // pred_fallthru
          _
        %264 = sfence
        %s265 = sand.u32 %s33, 1
        %s266 = scalar_lea.sflag [#allocation4], %s265
        %s267 = sand.u32 %s33, 1
        %s268 = smul.addr %s267, 72
        %s269 = scalar_lea.vmem [#allocation3], %s268
        %p270 = pneg %p46
        %p271 = pneg %p43
        %p272 = pneg %p67
        %p273 = pneg %p64
        %p274 = pneg %p88
        %p275 = pneg %p85
        %p276 = pneg %p109
        %p277 = pneg %p106
        %p278 = pneg %p130
        %p279 = pneg %p127
        %p280 = pneg %p156
        %p281 = pneg %p153
        %s282 = sand.u32 %s143, 1
        %s283 = scalar_lea.sflag [#allocation5], %s282
        %s284 = sand.u32 %s143, 1
        %s285 = smul.addr %s284, 8
        %s286 = scalar_lea.vmem [#allocation12], %s285
        %v287 = vld [vmem:[%s247] sm:$0xff]
        %v288 = vld [vmem:[%s247 + $0x8] sm:$0xff]
        %s289 = sld [smem:[#allocation7]]
        %v290 = vstv %s289
        %v291 = vmul.f32 %v287, %v290
        %v292 = vmul.f32 %v288, %v290
        %v293 = vadd.f32 %v291, 0.0
        %v294 = vadd.f32 %v292, 0.0
        %v295 = vld [vmem:[%s247] sm:$0xff]
        %v296 = vld [vmem:[%s247 + $0x8] sm:$0xff]
        %v297 = vld [vmem:[%s247 + $0x10] sm:$0xff]
        %s298 = sld [smem:[#allocation7 + $0x80]]
        %v299 = vstv %s298
        %v300 = vmul.f32 %v295, %v299
        %v301 = vmul.f32 %v296, %v299
        %v302 = vmul.f32 %v297, %v299
        %306 = vrot.lane.b32.xlu0 %v300, 127
        %v307 = vpop.permute.xlu0 %306
        %308 = vrot.lane.b32.xlu0 %v301, 127
        %v309 = vpop.permute.xlu0 %308
        %310 = vrot.lane.b32.xlu0 %v302, 127
        %v311 = vpop.permute.xlu0 %310
        %vm312 = vcmask 1039360
        %v313 = vsel %vm312, %v307, %v309
        %v314 = vsel %vm312, %v309, %v311
        %v317 = vadd.f32 %v293, %v313
        %v318 = vadd.f32 %v294, %v314
        %s319 = sld [smem:[#allocation7 + $0x100]]
        %v320 = vstv %s319
        %v321 = vmul.f32 %v295, %v320
        %v322 = vmul.f32 %v296, %v320
        %v323 = vmul.f32 %v297, %v320
        %327 = vrot.lane.b32.xlu0 %v321, 126
        %v328 = vpop.permute.xlu0 %327
        %329 = vrot.lane.b32.xlu0 %v322, 126
        %v330 = vpop.permute.xlu0 %329
        %331 = vrot.lane.b32.xlu0 %v323, 126
        %v332 = vpop.permute.xlu0 %331
        %vm333 = vcmask 1031168
        %v334 = vsel %vm333, %v328, %v330
        %v335 = vsel %vm333, %v330, %v332
        %v338 = vadd.f32 %v317, %v334
        %v339 = vadd.f32 %v318, %v335
        %s340 = sld [smem:[#allocation7 + $0x180]]
        %v341 = vstv %s340
        %v342 = vmul.f32 %v295, %v341
        %v343 = vmul.f32 %v296, %v341
        %v344 = vmul.f32 %v297, %v341
        %348 = vrot.lane.b32.xlu0 %v342, 113
        %v349 = vpop.permute.xlu0 %348
        %350 = vrot.lane.b32.xlu0 %v343, 113
        %v351 = vpop.permute.xlu0 %350
        %352 = vrot.lane.b32.xlu0 %v344, 113
        %v353 = vpop.permute.xlu0 %352
        %vm354 = vcmask 924672
        %v355 = vsel %vm354, %v349, %v351
        %v356 = vsel %vm354, %v351, %v353
        %v359 = vadd.f32 %v338, %v355
        %v360 = vadd.f32 %v339, %v356
        %s361 = sld [smem:[#allocation7 + $0x200]]
        %v362 = vstv %s361
        %v363 = vmul.f32 %v295, %v362
        %v364 = vmul.f32 %v296, %v362
        %v365 = vmul.f32 %v297, %v362
        %369 = vrot.lane.b32.xlu0 %v363, 112
        %v370 = vpop.permute.xlu0 %369
        %371 = vrot.lane.b32.xlu0 %v364, 112
        %v372 = vpop.permute.xlu0 %371
        %373 = vrot.lane.b32.xlu0 %v365, 112
        %v374 = vpop.permute.xlu0 %373
        %vm375 = vcmask 916480
        %v376 = vsel %vm375, %v370, %v372
        %v377 = vsel %vm375, %v372, %v374
        %v380 = vadd.f32 %v359, %v376
        %v381 = vadd.f32 %v360, %v377
        %s382 = sld [smem:[#allocation7 + $0x280]]
        %v383 = vstv %s382
        %v384 = vmul.f32 %v295, %v383
        %v385 = vmul.f32 %v296, %v383
        %v386 = vmul.f32 %v297, %v383
        %390 = vrot.lane.b32.xlu0 %v384, 111
        %v391 = vpop.permute.xlu0 %390
        %392 = vrot.lane.b32.xlu0 %v385, 111
        %v393 = vpop.permute.xlu0 %392
        %394 = vrot.lane.b32.xlu0 %v386, 111
        %v395 = vpop.permute.xlu0 %394
        %vm396 = vcmask 908288
        %v397 = vsel %vm396, %v391, %v393
        %v398 = vsel %vm396, %v393, %v395
        %v401 = vadd.f32 %v380, %v397
        %v402 = vadd.f32 %v381, %v398
        %s403 = sld [smem:[#allocation7 + $0x300]]
        %v404 = vstv %s403
        %v405 = vmul.f32 %v295, %v404
        %v406 = vmul.f32 %v296, %v404
        %v407 = vmul.f32 %v297, %v404
        %411 = vrot.lane.b32.xlu0 %v405, 98
        %v412 = vpop.permute.xlu0 %411
        %413 = vrot.lane.b32.xlu0 %v406, 98
        %v414 = vpop.permute.xlu0 %413
        %415 = vrot.lane.b32.xlu0 %v407, 98
        %v416 = vpop.permute.xlu0 %415
        %vm417 = vcmask 801792
        %v418 = vsel %vm417, %v412, %v414
        %v419 = vsel %vm417, %v414, %v416
        %v422 = vadd.f32 %v401, %v418
        %v423 = vadd.f32 %v402, %v419
        %s424 = sld [smem:[#allocation7 + $0x380]]
        %v425 = vstv %s424
        %v426 = vmul.f32 %v295, %v425
        %v427 = vmul.f32 %v296, %v425
        %v428 = vmul.f32 %v297, %v425
        %432 = vrot.lane.b32.xlu0 %v426, 97
        %v433 = vpop.permute.xlu0 %432
        %434 = vrot.lane.b32.xlu0 %v427, 97
        %v435 = vpop.permute.xlu0 %434
        %436 = vrot.lane.b32.xlu0 %v428, 97
        %v437 = vpop.permute.xlu0 %436
        %vm438 = vcmask 793600
        %v439 = vsel %vm438, %v433, %v435
        %v440 = vsel %vm438, %v435, %v437
        %v443 = vadd.f32 %v422, %v439
        %v444 = vadd.f32 %v423, %v440
        %s445 = sld [smem:[#allocation7 + $0x400]]
        %v446 = vstv %s445
        %v447 = vmul.f32 %v295, %v446
        %v448 = vmul.f32 %v296, %v446
        %v449 = vmul.f32 %v297, %v446
        %453 = vrot.lane.b32.xlu0 %v447, 96
        %v454 = vpop.permute.xlu0 %453
        %455 = vrot.lane.b32.xlu0 %v448, 96
        %v456 = vpop.permute.xlu0 %455
        %457 = vrot.lane.b32.xlu0 %v449, 96
        %v458 = vpop.permute.xlu0 %457
        %vm459 = vcmask 785408
        %v460 = vsel %vm459, %v454, %v456
        %v461 = vsel %vm459, %v456, %v458
        %v464 = vadd.f32 %v443, %v460
        %v465 = vadd.f32 %v444, %v461
        %s466 = scalar_lea.vmem %s247, 24 [#allocation3]
        %v467 = vld [vmem:[%s466] sm:$0xff]
        %v468 = vld [vmem:[%s466 + $0x8] sm:$0xff]
        %s469 = sld [smem:[#allocation7 + $0x480]]
        %v470 = vstv %s469
        %v471 = vmul.f32 %v467, %v470
        %v472 = vmul.f32 %v468, %v470
        %v473 = vadd.f32 %v471, 0.0
        %v474 = vadd.f32 %v472, 0.0
        %v475 = vld [vmem:[%s466] sm:$0xff]
        %v476 = vld [vmem:[%s466 + $0x8] sm:$0xff]
        %v477 = vld [vmem:[%s466 + $0x10] sm:$0xff]
        %s478 = sld [smem:[#allocation7 + $0x500]]
        %v479 = vstv %s478
        %v480 = vmul.f32 %v475, %v479
        %v481 = vmul.f32 %v476, %v479
        %v482 = vmul.f32 %v477, %v479
        %486 = vrot.lane.b32.xlu0 %v480, 127
        %v487 = vpop.permute.xlu0 %486
        %488 = vrot.lane.b32.xlu0 %v481, 127
        %v489 = vpop.permute.xlu0 %488
        %490 = vrot.lane.b32.xlu0 %v482, 127
        %v491 = vpop.permute.xlu0 %490
        %v492 = vsel %vm312, %v487, %v489
        %v493 = vsel %vm312, %v489, %v491
        %v496 = vadd.f32 %v473, %v492
        %v497 = vadd.f32 %v474, %v493
        %s498 = sld [smem:[#allocation7 + $0x580]]
        %v499 = vstv %s498
        %v500 = vmul.f32 %v475, %v499
        %v501 = vmul.f32 %v476, %v499
        %v502 = vmul.f32 %v477, %v499
        %506 = vrot.lane.b32.xlu0 %v500, 126
        %v507 = vpop.permute.xlu0 %506
        %508 = vrot.lane.b32.xlu0 %v501, 126
        %v509 = vpop.permute.xlu0 %508
        %510 = vrot.lane.b32.xlu0 %v502, 126
        %v511 = vpop.permute.xlu0 %510
        %v512 = vsel %vm333, %v507, %v509
        %v513 = vsel %vm333, %v509, %v511
        %v516 = vadd.f32 %v496, %v512
        %v517 = vadd.f32 %v497, %v513
        %s518 = sld [smem:[#allocation7 + $0x600]]
        %v519 = vstv %s518
        %v520 = vmul.f32 %v475, %v519
        %v521 = vmul.f32 %v476, %v519
        %v522 = vmul.f32 %v477, %v519
        %526 = vrot.lane.b32.xlu0 %v520, 113
        %v527 = vpop.permute.xlu0 %526
        %528 = vrot.lane.b32.xlu0 %v521, 113
        %v529 = vpop.permute.xlu0 %528
        %530 = vrot.lane.b32.xlu0 %v522, 113
        %v531 = vpop.permute.xlu0 %530
        %v532 = vsel %vm354, %v527, %v529
        %v533 = vsel %vm354, %v529, %v531
        %v536 = vadd.f32 %v516, %v532
        %v537 = vadd.f32 %v517, %v533
        %s538 = sld [smem:[#allocation7 + $0x680]]
        %v539 = vstv %s538
        %v540 = vmul.f32 %v475, %v539
        %v541 = vmul.f32 %v476, %v539
        %v542 = vmul.f32 %v477, %v539
        %546 = vrot.lane.b32.xlu0 %v540, 112
        %v547 = vpop.permute.xlu0 %546
        %548 = vrot.lane.b32.xlu0 %v541, 112
        %v549 = vpop.permute.xlu0 %548
        %550 = vrot.lane.b32.xlu0 %v542, 112
        %v551 = vpop.permute.xlu0 %550
        %v552 = vsel %vm375, %v547, %v549
        %v553 = vsel %vm375, %v549, %v551
        %v556 = vadd.f32 %v536, %v552
        %v557 = vadd.f32 %v537, %v553
        %s558 = sld [smem:[#allocation7 + $0x700]]
        %v559 = vstv %s558
        %v560 = vmul.f32 %v475, %v559
        %v561 = vmul.f32 %v476, %v559
        %v562 = vmul.f32 %v477, %v559
        %566 = vrot.lane.b32.xlu0 %v560, 111
        %v567 = vpop.permute.xlu0 %566
        %568 = vrot.lane.b32.xlu0 %v561, 111
        %v569 = vpop.permute.xlu0 %568
        %570 = vrot.lane.b32.xlu0 %v562, 111
        %v571 = vpop.permute.xlu0 %570
        %v572 = vsel %vm396, %v567, %v569
        %v573 = vsel %vm396, %v569, %v571
        %v576 = vadd.f32 %v556, %v572
        %v577 = vadd.f32 %v557, %v573
        %s578 = sld [smem:[#allocation7 + $0x780]]
        %v579 = vstv %s578
        %v580 = vmul.f32 %v475, %v579
        %v581 = vmul.f32 %v476, %v579
        %v582 = vmul.f32 %v477, %v579
        %586 = vrot.lane.b32.xlu0 %v580, 98
        %v587 = vpop.permute.xlu0 %586
        %588 = vrot.lane.b32.xlu0 %v581, 98
        %v589 = vpop.permute.xlu0 %588
        %590 = vrot.lane.b32.xlu0 %v582, 98
        %v591 = vpop.permute.xlu0 %590
        %v592 = vsel %vm417, %v587, %v589
        %v593 = vsel %vm417, %v589, %v591
        %v596 = vadd.f32 %v576, %v592
        %v597 = vadd.f32 %v577, %v593
        %s598 = sld [smem:[#allocation7 + $0x800]]
        %v599 = vstv %s598
        %v600 = vmul.f32 %v475, %v599
        %v601 = vmul.f32 %v476, %v599
        %v602 = vmul.f32 %v477, %v599
        %606 = vrot.lane.b32.xlu0 %v600, 97
        %v607 = vpop.permute.xlu0 %606
        %608 = vrot.lane.b32.xlu0 %v601, 97
        %v609 = vpop.permute.xlu0 %608
        %610 = vrot.lane.b32.xlu0 %v602, 97
        %v611 = vpop.permute.xlu0 %610
        %v612 = vsel %vm438, %v607, %v609
        %v613 = vsel %vm438, %v609, %v611
        %v616 = vadd.f32 %v596, %v612
        %v617 = vadd.f32 %v597, %v613
        %s618 = sld [smem:[#allocation7 + $0x880]]
        %v619 = vstv %s618
        %v620 = vmul.f32 %v475, %v619
        %v621 = vmul.f32 %v476, %v619
        %v622 = vmul.f32 %v477, %v619
        %626 = vrot.lane.b32.xlu0 %v620, 96
        %v627 = vpop.permute.xlu0 %626
        %628 = vrot.lane.b32.xlu0 %v621, 96
        %v629 = vpop.permute.xlu0 %628
        %630 = vrot.lane.b32.xlu0 %v622, 96
        %v631 = vpop.permute.xlu0 %630
        %v632 = vsel %vm459, %v627, %v629
        %v633 = vsel %vm459, %v629, %v631
        %v636 = vadd.f32 %v616, %v632
        %v637 = vadd.f32 %v617, %v633
        %s638 = scalar_lea.vmem %s247, 48 [#allocation3]
        %v639 = vld [vmem:[%s638] sm:$0xff]
        %v640 = vld [vmem:[%s638 + $0x8] sm:$0xff]
        %s641 = sld [smem:[#allocation7 + $0x900]]
        %v642 = vstv %s641
        %v643 = vmul.f32 %v639, %v642
        %v644 = vmul.f32 %v640, %v642
        %v645 = vadd.f32 %v643, 0.0
        %v646 = vadd.f32 %v644, 0.0
        %v647 = vld [vmem:[%s638] sm:$0xff]
        %v648 = vld [vmem:[%s638 + $0x8] sm:$0xff]
        %v649 = vld [vmem:[%s638 + $0x10] sm:$0xff]
        %s650 = sld [smem:[#allocation7 + $0x980]]
        %v651 = vstv %s650
        %v652 = vmul.f32 %v647, %v651
        %v653 = vmul.f32 %v648, %v651
        %v654 = vmul.f32 %v649, %v651
        %658 = vrot.lane.b32.xlu0 %v652, 127
        %v659 = vpop.permute.xlu0 %658
        %660 = vrot.lane.b32.xlu0 %v653, 127
        %v661 = vpop.permute.xlu0 %660
        %662 = vrot.lane.b32.xlu0 %v654, 127
        %v663 = vpop.permute.xlu0 %662
        %v664 = vsel %vm312, %v659, %v661
        %v665 = vsel %vm312, %v661, %v663
        %v668 = vadd.f32 %v645, %v664
        %v669 = vadd.f32 %v646, %v665
        %s670 = sld [smem:[#allocation7 + $0xa00]]
        %v671 = vstv %s670
        %v672 = vmul.f32 %v647, %v671
        %v673 = vmul.f32 %v648, %v671
        %v674 = vmul.f32 %v649, %v671
        %678 = vrot.lane.b32.xlu0 %v672, 126
        %v679 = vpop.permute.xlu0 %678
        %680 = vrot.lane.b32.xlu0 %v673, 126
        %v681 = vpop.permute.xlu0 %680
        %682 = vrot.lane.b32.xlu0 %v674, 126
        %v683 = vpop.permute.xlu0 %682
        %v684 = vsel %vm333, %v679, %v681
        %v685 = vsel %vm333, %v681, %v683
        %v688 = vadd.f32 %v668, %v684
        %v689 = vadd.f32 %v669, %v685
        %s690 = sld [smem:[#allocation7 + $0xa80]]
        %v691 = vstv %s690
        %v692 = vmul.f32 %v647, %v691
        %v693 = vmul.f32 %v648, %v691
        %v694 = vmul.f32 %v649, %v691
        %698 = vrot.lane.b32.xlu0 %v692, 113
        %v699 = vpop.permute.xlu0 %698
        %700 = vrot.lane.b32.xlu0 %v693, 113
        %v701 = vpop.permute.xlu0 %700
        %702 = vrot.lane.b32.xlu0 %v694, 113
        %v703 = vpop.permute.xlu0 %702
        %v704 = vsel %vm354, %v699, %v701
        %v705 = vsel %vm354, %v701, %v703
        %v708 = vadd.f32 %v688, %v704
        %v709 = vadd.f32 %v689, %v705
        %s710 = sld [smem:[#allocation7 + $0xb00]]
        %v711 = vstv %s710
        %v712 = vmul.f32 %v647, %v711
        %v713 = vmul.f32 %v648, %v711
        %v714 = vmul.f32 %v649, %v711
        %718 = vrot.lane.b32.xlu0 %v712, 112
        %v719 = vpop.permute.xlu0 %718
        %720 = vrot.lane.b32.xlu0 %v713, 112
        %v721 = vpop.permute.xlu0 %720
        %722 = vrot.lane.b32.xlu0 %v714, 112
        %v723 = vpop.permute.xlu0 %722
        %v724 = vsel %vm375, %v719, %v721
        %v725 = vsel %vm375, %v721, %v723
        %v728 = vadd.f32 %v708, %v724
        %v729 = vadd.f32 %v709, %v725
        %s730 = sld [smem:[#allocation7 + $0xb80]]
        %v731 = vstv %s730
        %v732 = vmul.f32 %v647, %v731
        %v733 = vmul.f32 %v648, %v731
        %v734 = vmul.f32 %v649, %v731
        %738 = vrot.lane.b32.xlu0 %v732, 111
        %v739 = vpop.permute.xlu0 %738
        %740 = vrot.lane.b32.xlu0 %v733, 111
        %v741 = vpop.permute.xlu0 %740
        %742 = vrot.lane.b32.xlu0 %v734, 111
        %v743 = vpop.permute.xlu0 %742
        %v744 = vsel %vm396, %v739, %v741
        %v745 = vsel %vm396, %v741, %v743
        %v748 = vadd.f32 %v728, %v744
        %v749 = vadd.f32 %v729, %v745
        %s750 = sld [smem:[#allocation7 + $0xc00]]
        %v751 = vstv %s750
        %v752 = vmul.f32 %v647, %v751
        %v753 = vmul.f32 %v648, %v751
        %v754 = vmul.f32 %v649, %v751
        %758 = vrot.lane.b32.xlu0 %v752, 98
        %v759 = vpop.permute.xlu0 %758
        %760 = vrot.lane.b32.xlu0 %v753, 98
        %v761 = vpop.permute.xlu0 %760
        %762 = vrot.lane.b32.xlu0 %v754, 98
        %v763 = vpop.permute.xlu0 %762
        %v764 = vsel %vm417, %v759, %v761
        %v765 = vsel %vm417, %v761, %v763
        %v768 = vadd.f32 %v748, %v764
        %v769 = vadd.f32 %v749, %v765
        %s770 = sld [smem:[#allocation7 + $0xc80]]
        %v771 = vstv %s770
        %v772 = vmul.f32 %v647, %v771
        %v773 = vmul.f32 %v648, %v771
        %v774 = vmul.f32 %v649, %v771
        %778 = vrot.lane.b32.xlu0 %v772, 97
        %v779 = vpop.permute.xlu0 %778
        %780 = vrot.lane.b32.xlu0 %v773, 97
        %v781 = vpop.permute.xlu0 %780
        %782 = vrot.lane.b32.xlu0 %v774, 97
        %v783 = vpop.permute.xlu0 %782
        %v784 = vsel %vm438, %v779, %v781
        %v785 = vsel %vm438, %v781, %v783
        %v788 = vadd.f32 %v768, %v784
        %v789 = vadd.f32 %v769, %v785
        %s790 = sld [smem:[#allocation7 + $0xd00]]
        %v791 = vstv %s790
        %v792 = vmul.f32 %v647, %v791
        %v793 = vmul.f32 %v648, %v791
        %v794 = vmul.f32 %v649, %v791
        %798 = vrot.lane.b32.xlu0 %v792, 96
        %v799 = vpop.permute.xlu0 %798
        %800 = vrot.lane.b32.xlu0 %v793, 96
        %v801 = vpop.permute.xlu0 %800
        %802 = vrot.lane.b32.xlu0 %v794, 96
        %v803 = vpop.permute.xlu0 %802
        %v804 = vsel %vm459, %v799, %v801
        %v805 = vsel %vm459, %v801, %v803
        %v808 = vadd.f32 %v788, %v804
        %v809 = vadd.f32 %v789, %v805
        %v810 = vadd.f32 %v464, %v636
        %v811 = vadd.f32 %v465, %v637
        %v812 = vadd.f32 %v810, %v808
        %v813 = vadd.f32 %v811, %v809
        %s814 = sld [smem:[#allocation8]]
        %v815 = vstv %s814
        %v816 = vadd.f32 %v812, %v815
        %v817 = vadd.f32 %v813, %v815
        %v818 = vmax.f32 %v816, 0.0
        %v819 = vmax.f32 %v817, 0.0
        %820 = vst [vmem:[#allocation2] sm:$0xff] %v818
        %821 = vst [vmem:[#allocation2 + $0x8] sm:$0xff] %v819
        %v822 = vld [vmem:[%s247] sm:$0xff]
        %v823 = vld [vmem:[%s247 + $0x8] sm:$0xff]
        %s824 = sld [smem:[#allocation7 + $0x1]]
        %v825 = vstv %s824
        %v826 = vmul.f32 %v822, %v825
        %v827 = vmul.f32 %v823, %v825
        %v828 = vadd.f32 %v826, 0.0
        %v829 = vadd.f32 %v827, 0.0
        %v830 = vld [vmem:[%s247] sm:$0xff]
        %v831 = vld [vmem:[%s247 + $0x8] sm:$0xff]
        %v832 = vld [vmem:[%s247 + $0x10] sm:$0xff]
        %s833 = sld [smem:[#allocation7 + $0x81]]
        %v834 = vstv %s833
        %v835 = vmul.f32 %v830, %v834
        %v836 = vmul.f32 %v831, %v834
        %v837 = vmul.f32 %v832, %v834
        %841 = vrot.lane.b32.xlu0 %v835, 127
        %v842 = vpop.permute.xlu0 %841
        %843 = vrot.lane.b32.xlu0 %v836, 127
        %v844 = vpop.permute.xlu0 %843
        %845 = vrot.lane.b32.xlu0 %v837, 127
        %v846 = vpop.permute.xlu0 %845
        %v847 = vsel %vm312, %v842, %v844
        %v848 = vsel %vm312, %v844, %v846
        %v851 = vadd.f32 %v828, %v847
        %v852 = vadd.f32 %v829, %v848
        %s853 = sld [smem:[#allocation7 + $0x101]]
        %v854 = vstv %s853
        %v855 = vmul.f32 %v830, %v854
        %v856 = vmul.f32 %v831, %v854
        %v857 = vmul.f32 %v832, %v854
        %861 = vrot.lane.b32.xlu0 %v855, 126
        %v862 = vpop.permute.xlu0 %861
        %863 = vrot.lane.b32.xlu0 %v856, 126
        %v864 = vpop.permute.xlu0 %863
        %865 = vrot.lane.b32.xlu0 %v857, 126
        %v866 = vpop.permute.xlu0 %865
        %v867 = vsel %vm333, %v862, %v864
        %v868 = vsel %vm333, %v864, %v866
        %v871 = vadd.f32 %v851, %v867
        %v872 = vadd.f32 %v852, %v868
        %s873 = sld [smem:[#allocation7 + $0x181]]
        %v874 = vstv %s873
        %v875 = vmul.f32 %v830, %v874
        %v876 = vmul.f32 %v831, %v874
        %v877 = vmul.f32 %v832, %v874
        %881 = vrot.lane.b32.xlu0 %v875, 113
        %v882 = vpop.permute.xlu0 %881
        %883 = vrot.lane.b32.xlu0 %v876, 113
        %v884 = vpop.permute.xlu0 %883
        %885 = vrot.lane.b32.xlu0 %v877, 113
        %v886 = vpop.permute.xlu0 %885
        %v887 = vsel %vm354, %v882, %v884
        %v888 = vsel %vm354, %v884, %v886
        %v891 = vadd.f32 %v871, %v887
        %v892 = vadd.f32 %v872, %v888
        %s893 = sld [smem:[#allocation7 + $0x201]]
        %v894 = vstv %s893
        %v895 = vmul.f32 %v830, %v894
        %v896 = vmul.f32 %v831, %v894
        %v897 = vmul.f32 %v832, %v894
        %901 = vrot.lane.b32.xlu0 %v895, 112
        %v902 = vpop.permute.xlu0 %901
        %903 = vrot.lane.b32.xlu0 %v896, 112
        %v904 = vpop.permute.xlu0 %903
        %905 = vrot.lane.b32.xlu0 %v897, 112
        %v906 = vpop.permute.xlu0 %905
        %v907 = vsel %vm375, %v902, %v904
        %v908 = vsel %vm375, %v904, %v906
        %v911 = vadd.f32 %v891, %v907
        %v912 = vadd.f32 %v892, %v908
        %s913 = sld [smem:[#allocation7 + $0x281]]
        %v914 = vstv %s913
        %v915 = vmul.f32 %v830, %v914
        %v916 = vmul.f32 %v831, %v914
        %v917 = vmul.f32 %v832, %v914
        %921 = vrot.lane.b32.xlu0 %v915, 111
        %v922 = vpop.permute.xlu0 %921
        %923 = vrot.lane.b32.xlu0 %v916, 111
        %v924 = vpop.permute.xlu0 %923
        %925 = vrot.lane.b32.xlu0 %v917, 111
        %v926 = vpop.permute.xlu0 %925
        %v927 = vsel %vm396, %v922, %v924
        %v928 = vsel %vm396, %v924, %v926
        %v931 = vadd.f32 %v911, %v927
        %v932 = vadd.f32 %v912, %v928
        %s933 = sld [smem:[#allocation7 + $0x301]]
        %v934 = vstv %s933
        %v935 = vmul.f32 %v830, %v934
        %v936 = vmul.f32 %v831, %v934
        %v937 = vmul.f32 %v832, %v934
        %941 = vrot.lane.b32.xlu0 %v935, 98
        %v942 = vpop.permute.xlu0 %941
        %943 = vrot.lane.b32.xlu0 %v936, 98
        %v944 = vpop.permute.xlu0 %943
        %945 = vrot.lane.b32.xlu0 %v937, 98
        %v946 = vpop.permute.xlu0 %945
        %v947 = vsel %vm417, %v942, %v944
        %v948 = vsel %vm417, %v944, %v946
        %v951 = vadd.f32 %v931, %v947
        %v952 = vadd.f32 %v932, %v948
        %s953 = sld [smem:[#allocation7 + $0x381]]
        %v954 = vstv %s953
        %v955 = vmul.f32 %v830, %v954
        %v956 = vmul.f32 %v831, %v954
        %v957 = vmul.f32 %v832, %v954
        %961 = vrot.lane.b32.xlu0 %v955, 97
        %v962 = vpop.permute.xlu0 %961
        %963 = vrot.lane.b32.xlu0 %v956, 97
        %v964 = vpop.permute.xlu0 %963
        %965 = vrot.lane.b32.xlu0 %v957, 97
        %v966 = vpop.permute.xlu0 %965
        %v967 = vsel %vm438, %v962, %v964
        %v968 = vsel %vm438, %v964, %v966
        %v971 = vadd.f32 %v951, %v967
        %v972 = vadd.f32 %v952, %v968
        %s973 = sld [smem:[#allocation7 + $0x401]]
        %v974 = vstv %s973
        %v975 = vmul.f32 %v830, %v974
        %v976 = vmul.f32 %v831, %v974
        %v977 = vmul.f32 %v832, %v974
        %981 = vrot.lane.b32.xlu0 %v975, 96
        %v982 = vpop.permute.xlu0 %981
        %983 = vrot.lane.b32.xlu0 %v976, 96
        %v984 = vpop.permute.xlu0 %983
        %985 = vrot.lane.b32.xlu0 %v977, 96
        %v986 = vpop.permute.xlu0 %985
        %v987 = vsel %vm459, %v982, %v984
        %v988 = vsel %vm459, %v984, %v986
        %v991 = vadd.f32 %v971, %v987
        %v992 = vadd.f32 %v972, %v988
        %v993 = vld [vmem:[%s466] sm:$0xff]
        %v994 = vld [vmem:[%s466 + $0x8] sm:$0xff]
        %s995 = sld [smem:[#allocation7 + $0x481]]
        %v996 = vstv %s995
        %v997 = vmul.f32 %v993, %v996
        %v998 = vmul.f32 %v994, %v996
        %v999 = vadd.f32 %v997, 0.0
        %v1000 = vadd.f32 %v998, 0.0
        %v1001 = vld [vmem:[%s466] sm:$0xff]
        %v1002 = vld [vmem:[%s466 + $0x8] sm:$0xff]
        %v1003 = vld [vmem:[%s466 + $0x10] sm:$0xff]
        %s1004 = sld [smem:[#allocation7 + $0x501]]
        %v1005 = vstv %s1004
        %v1006 = vmul.f32 %v1001, %v1005
        %v1007 = vmul.f32 %v1002, %v1005
        %v1008 = vmul.f32 %v1003, %v1005
        %1012 = vrot.lane.b32.xlu0 %v1006, 127
        %v1013 = vpop.permute.xlu0 %1012
        %1014 = vrot.lane.b32.xlu0 %v1007, 127
        %v1015 = vpop.permute.xlu0 %1014
        %1016 = vrot.lane.b32.xlu0 %v1008, 127
        %v1017 = vpop.permute.xlu0 %1016
        %v1018 = vsel %vm312, %v1013, %v1015
        %v1019 = vsel %vm312, %v1015, %v1017
        %v1022 = vadd.f32 %v999, %v1018
        %v1023 = vadd.f32 %v1000, %v1019
        %s1024 = sld [smem:[#allocation7 + $0x581]]
        %v1025 = vstv %s1024
        %v1026 = vmul.f32 %v1001, %v1025
        %v1027 = vmul.f32 %v1002, %v1025
        %v1028 = vmul.f32 %v1003, %v1025
        %1032 = vrot.lane.b32.xlu0 %v1026, 126
        %v1033 = vpop.permute.xlu0 %1032
        %1034 = vrot.lane.b32.xlu0 %v1027, 126
        %v1035 = vpop.permute.xlu0 %1034
        %1036 = vrot.lane.b32.xlu0 %v1028, 126
        %v1037 = vpop.permute.xlu0 %1036
        %v1038 = vsel %vm333, %v1033, %v1035
        %v1039 = vsel %vm333, %v1035, %v1037
        %v1042 = vadd.f32 %v1022, %v1038
        %v1043 = vadd.f32 %v1023, %v1039
        %s1044 = sld [smem:[#allocation7 + $0x601]]
        %v1045 = vstv %s1044
        %v1046 = vmul.f32 %v1001, %v1045
        %v1047 = vmul.f32 %v1002, %v1045
        %v1048 = vmul.f32 %v1003, %v1045
        %1052 = vrot.lane.b32.xlu0 %v1046, 113
        %v1053 = vpop.permute.xlu0 %1052
        %1054 = vrot.lane.b32.xlu0 %v1047, 113
        %v1055 = vpop.permute.xlu0 %1054
        %1056 = vrot.lane.b32.xlu0 %v1048, 113
        %v1057 = vpop.permute.xlu0 %1056
        %v1058 = vsel %vm354, %v1053, %v1055
        %v1059 = vsel %vm354, %v1055, %v1057
        %v1062 = vadd.f32 %v1042, %v1058
        %v1063 = vadd.f32 %v1043, %v1059
        %s1064 = sld [smem:[#allocation7 + $0x681]]
        %v1065 = vstv %s1064
        %v1066 = vmul.f32 %v1001, %v1065
        %v1067 = vmul.f32 %v1002, %v1065
        %v1068 = vmul.f32 %v1003, %v1065
        %1072 = vrot.lane.b32.xlu0 %v1066, 112
        %v1073 = vpop.permute.xlu0 %1072
        %1074 = vrot.lane.b32.xlu0 %v1067, 112
        %v1075 = vpop.permute.xlu0 %1074
        %1076 = vrot.lane.b32.xlu0 %v1068, 112
        %v1077 = vpop.permute.xlu0 %1076
        %v1078 = vsel %vm375, %v1073, %v1075
        %v1079 = vsel %vm375, %v1075, %v1077
        %v1082 = vadd.f32 %v1062, %v1078
        %v1083 = vadd.f32 %v1063, %v1079
        %s1084 = sld [smem:[#allocation7 + $0x701]]
        %v1085 = vstv %s1084
        %v1086 = vmul.f32 %v1001, %v1085
        %v1087 = vmul.f32 %v1002, %v1085
        %v1088 = vmul.f32 %v1003, %v1085
        %1092 = vrot.lane.b32.xlu0 %v1086, 111
        %v1093 = vpop.permute.xlu0 %1092
        %1094 = vrot.lane.b32.xlu0 %v1087, 111
        %v1095 = vpop.permute.xlu0 %1094
        %1096 = vrot.lane.b32.xlu0 %v1088, 111
        %v1097 = vpop.permute.xlu0 %1096
        %v1098 = vsel %vm396, %v1093, %v1095
        %v1099 = vsel %vm396, %v1095, %v1097
        %v1102 = vadd.f32 %v1082, %v1098
        %v1103 = vadd.f32 %v1083, %v1099
        %s1104 = sld [smem:[#allocation7 + $0x781]]
        %v1105 = vstv %s1104
        %v1106 = vmul.f32 %v1001, %v1105
        %v1107 = vmul.f32 %v1002, %v1105
        %v1108 = vmul.f32 %v1003, %v1105
        %1112 = vrot.lane.b32.xlu0 %v1106, 98
        %v1113 = vpop.permute.xlu0 %1112
        %1114 = vrot.lane.b32.xlu0 %v1107, 98
        %v1115 = vpop.permute.xlu0 %1114
        %1116 = vrot.lane.b32.xlu0 %v1108, 98
        %v1117 = vpop.permute.xlu0 %1116
        %v1118 = vsel %vm417, %v1113, %v1115
        %v1119 = vsel %vm417, %v1115, %v1117
        %v1122 = vadd.f32 %v1102, %v1118
        %v1123 = vadd.f32 %v1103, %v1119
        %s1124 = sld [smem:[#allocation7 + $0x801]]
        %v1125 = vstv %s1124
        %v1126 = vmul.f32 %v1001, %v1125
        %v1127 = vmul.f32 %v1002, %v1125
        %v1128 = vmul.f32 %v1003, %v1125
        %1132 = vrot.lane.b32.xlu0 %v1126, 97
        %v1133 = vpop.permute.xlu0 %1132
        %1134 = vrot.lane.b32.xlu0 %v1127, 97
        %v1135 = vpop.permute.xlu0 %1134
        %1136 = vrot.lane.b32.xlu0 %v1128, 97
        %v1137 = vpop.permute.xlu0 %1136
        %v1138 = vsel %vm438, %v1133, %v1135
        %v1139 = vsel %vm438, %v1135, %v1137
        %v1142 = vadd.f32 %v1122, %v1138
        %v1143 = vadd.f32 %v1123, %v1139
        %s1144 = sld [smem:[#allocation7 + $0x881]]
        %v1145 = vstv %s1144
        %v1146 = vmul.f32 %v1001, %v1145
        %v1147 = vmul.f32 %v1002, %v1145
        %v1148 = vmul.f32 %v1003, %v1145
        %1152 = vrot.lane.b32.xlu0 %v1146, 96
        %v1153 = vpop.permute.xlu0 %1152
        %1154 = vrot.lane.b32.xlu0 %v1147, 96
        %v1155 = vpop.permute.xlu0 %1154
        %1156 = vrot.lane.b32.xlu0 %v1148, 96
        %v1157 = vpop.permute.xlu0 %1156
        %v1158 = vsel %vm459, %v1153, %v1155
        %v1159 = vsel %vm459, %v1155, %v1157
        %v1162 = vadd.f32 %v1142, %v1158
        %v1163 = vadd.f32 %v1143, %v1159
        %v1164 = vld [vmem:[%s638] sm:$0xff]
        %v1165 = vld [vmem:[%s638 + $0x8] sm:$0xff]
        %s1166 = sld [smem:[#allocation7 + $0x901]]
        %v1167 = vstv %s1166
        %v1168 = vmul.f32 %v1164, %v1167
        %v1169 = vmul.f32 %v1165, %v1167
        %v1170 = vadd.f32 %v1168, 0.0
        %v1171 = vadd.f32 %v1169, 0.0
        %v1172 = vld [vmem:[%s638] sm:$0xff]
        %v1173 = vld [vmem:[%s638 + $0x8] sm:$0xff]
        %v1174 = vld [vmem:[%s638 + $0x10] sm:$0xff]
        %s1175 = sld [smem:[#allocation7 + $0x981]]
        %v1176 = vstv %s1175
        %v1177 = vmul.f32 %v1172, %v1176
        %v1178 = vmul.f32 %v1173, %v1176
        %v1179 = vmul.f32 %v1174, %v1176
        %1183 = vrot.lane.b32.xlu0 %v1177, 127
        %v1184 = vpop.permute.xlu0 %1183
        %1185 = vrot.lane.b32.xlu0 %v1178, 127
        %v1186 = vpop.permute.xlu0 %1185
        %1187 = vrot.lane.b32.xlu0 %v1179, 127
        %v1188 = vpop.permute.xlu0 %1187
        %v1189 = vsel %vm312, %v1184, %v1186
        %v1190 = vsel %vm312, %v1186, %v1188
        %v1193 = vadd.f32 %v1170, %v1189
        %v1194 = vadd.f32 %v1171, %v1190
        %s1195 = sld [smem:[#allocation7 + $0xa01]]
        %v1196 = vstv %s1195
        %v1197 = vmul.f32 %v1172, %v1196
        %v1198 = vmul.f32 %v1173, %v1196
        %v1199 = vmul.f32 %v1174, %v1196
        %1203 = vrot.lane.b32.xlu0 %v1197, 126
        %v1204 = vpop.permute.xlu0 %1203
        %1205 = vrot.lane.b32.xlu0 %v1198, 126
        %v1206 = vpop.permute.xlu0 %1205
        %1207 = vrot.lane.b32.xlu0 %v1199, 126
        %v1208 = vpop.permute.xlu0 %1207
        %v1209 = vsel %vm333, %v1204, %v1206
        %v1210 = vsel %vm333, %v1206, %v1208
        %v1213 = vadd.f32 %v1193, %v1209
        %v1214 = vadd.f32 %v1194, %v1210
        %s1215 = sld [smem:[#allocation7 + $0xa81]]
        %v1216 = vstv %s1215
        %v1217 = vmul.f32 %v1172, %v1216
        %v1218 = vmul.f32 %v1173, %v1216
        %v1219 = vmul.f32 %v1174, %v1216
        %1223 = vrot.lane.b32.xlu0 %v1217, 113
        %v1224 = vpop.permute.xlu0 %1223
        %1225 = vrot.lane.b32.xlu0 %v1218, 113
        %v1226 = vpop.permute.xlu0 %1225
        %1227 = vrot.lane.b32.xlu0 %v1219, 113
        %v1228 = vpop.permute.xlu0 %1227
        %v1229 = vsel %vm354, %v1224, %v1226
        %v1230 = vsel %vm354, %v1226, %v1228
        %v1233 = vadd.f32 %v1213, %v1229
        %v1234 = vadd.f32 %v1214, %v1230
        %s1235 = sld [smem:[#allocation7 + $0xb01]]
        %v1236 = vstv %s1235
        %v1237 = vmul.f32 %v1172, %v1236
        %v1238 = vmul.f32 %v1173, %v1236
        %v1239 = vmul.f32 %v1174, %v1236
        %1243 = vrot.lane.b32.xlu0 %v1237, 112
        %v1244 = vpop.permute.xlu0 %1243
        %1245 = vrot.lane.b32.xlu0 %v1238, 112
        %v1246 = vpop.permute.xlu0 %1245
        %1247 = vrot.lane.b32.xlu0 %v1239, 112
        %v1248 = vpop.permute.xlu0 %1247
        %v1249 = vsel %vm375, %v1244, %v1246
        %v1250 = vsel %vm375, %v1246, %v1248
        %v1253 = vadd.f32 %v1233, %v1249
        %v1254 = vadd.f32 %v1234, %v1250
        %s1255 = sld [smem:[#allocation7 + $0xb81]]
        %v1256 = vstv %s1255
        %v1257 = vmul.f32 %v1172, %v1256
        %v1258 = vmul.f32 %v1173, %v1256
        %v1259 = vmul.f32 %v1174, %v1256
        %1263 = vrot.lane.b32.xlu0 %v1257, 111
        %v1264 = vpop.permute.xlu0 %1263
        %1265 = vrot.lane.b32.xlu0 %v1258, 111
        %v1266 = vpop.permute.xlu0 %1265
        %1267 = vrot.lane.b32.xlu0 %v1259, 111
        %v1268 = vpop.permute.xlu0 %1267
        %v1269 = vsel %vm396, %v1264, %v1266
        %v1270 = vsel %vm396, %v1266, %v1268
        %v1273 = vadd.f32 %v1253, %v1269
        %v1274 = vadd.f32 %v1254, %v1270
        %s1275 = sld [smem:[#allocation7 + $0xc01]]
        %v1276 = vstv %s1275
        %v1277 = vmul.f32 %v1172, %v1276
        %v1278 = vmul.f32 %v1173, %v1276
        %v1279 = vmul.f32 %v1174, %v1276
        %1283 = vrot.lane.b32.xlu0 %v1277, 98
        %v1284 = vpop.permute.xlu0 %1283
        %1285 = vrot.lane.b32.xlu0 %v1278, 98
        %v1286 = vpop.permute.xlu0 %1285
        %1287 = vrot.lane.b32.xlu0 %v1279, 98
        %v1288 = vpop.permute.xlu0 %1287
        %v1289 = vsel %vm417, %v1284, %v1286
        %v1290 = vsel %vm417, %v1286, %v1288
        %v1293 = vadd.f32 %v1273, %v1289
        %v1294 = vadd.f32 %v1274, %v1290
        %s1295 = sld [smem:[#allocation7 + $0xc81]]
        %v1296 = vstv %s1295
        %v1297 = vmul.f32 %v1172, %v1296
        %v1298 = vmul.f32 %v1173, %v1296
        %v1299 = vmul.f32 %v1174, %v1296
        %1303 = vrot.lane.b32.xlu0 %v1297, 97
        %v1304 = vpop.permute.xlu0 %1303
        %1305 = vrot.lane.b32.xlu0 %v1298, 97
        %v1306 = vpop.permute.xlu0 %1305
        %1307 = vrot.lane.b32.xlu0 %v1299, 97
        %v1308 = vpop.permute.xlu0 %1307
        %v1309 = vsel %vm438, %v1304, %v1306
        %v1310 = vsel %vm438, %v1306, %v1308
        %v1313 = vadd.f32 %v1293, %v1309
        %v1314 = vadd.f32 %v1294, %v1310
        %s1315 = sld [smem:[#allocation7 + $0xd01]]
        %v1316 = vstv %s1315
        %v1317 = vmul.f32 %v1172, %v1316
        %v1318 = vmul.f32 %v1173, %v1316
        %v1319 = vmul.f32 %v1174, %v1316
        %1323 = vrot.lane.b32.xlu0 %v1317, 96
        %v1324 = vpop.permute.xlu0 %1323
        %1325 = vrot.lane.b32.xlu0 %v1318, 96
        %v1326 = vpop.permute.xlu0 %1325
        %1327 = vrot.lane.b32.xlu0 %v1319, 96
        %v1328 = vpop.permute.xlu0 %1327
        %v1329 = vsel %vm459, %v1324, %v1326
        %v1330 = vsel %vm459, %v1326, %v1328
        %v1333 = vadd.f32 %v1313, %v1329
        %v1334 = vadd.f32 %v1314, %v1330
        %v1335 = vadd.f32 %v991, %v1162
        %v1336 = vadd.f32 %v992, %v1163
        %v1337 = vadd.f32 %v1335, %v1333
        %v1338 = vadd.f32 %v1336, %v1334
        %s1339 = sld [smem:[#allocation8 + $0x1]]
        %v1340 = vstv %s1339
        %v1341 = vadd.f32 %v1337, %v1340
        %v1342 = vadd.f32 %v1338, %v1340
        %v1343 = vmax.f32 %v1341, 0.0
        %v1344 = vmax.f32 %v1342, 0.0
        %1345 = vst [vmem:[#allocation2 + $0x10] sm:$0xff] %v1343
        %1346 = vst [vmem:[#allocation2 + $0x18] sm:$0xff] %v1344
        %v1347 = vld [vmem:[%s247] sm:$0xff]
        %v1348 = vld [vmem:[%s247 + $0x8] sm:$0xff]
        %s1349 = sld [smem:[#allocation7 + $0x2]]
        %v1350 = vstv %s1349
        %v1351 = vmul.f32 %v1347, %v1350
        %v1352 = vmul.f32 %v1348, %v1350
        %v1353 = vadd.f32 %v1351, 0.0
        %v1354 = vadd.f32 %v1352, 0.0
        %v1355 = vld [vmem:[%s247] sm:$0xff]
        %v1356 = vld [vmem:[%s247 + $0x8] sm:$0xff]
        %v1357 = vld [vmem:[%s247 + $0x10] sm:$0xff]
        %s1358 = sld [smem:[#allocation7 + $0x82]]
        %v1359 = vstv %s1358
        %v1360 = vmul.f32 %v1355, %v1359
        %v1361 = vmul.f32 %v1356, %v1359
        %v1362 = vmul.f32 %v1357, %v1359
        %1366 = vrot.lane.b32.xlu0 %v1360, 127
        %v1367 = vpop.permute.xlu0 %1366
        %1368 = vrot.lane.b32.xlu0 %v1361, 127
        %v1369 = vpop.permute.xlu0 %1368
        %1370 = vrot.lane.b32.xlu0 %v1362, 127
        %v1371 = vpop.permute.xlu0 %1370
        %v1372 = vsel %vm312, %v1367, %v1369
        %v1373 = vsel %vm312, %v1369, %v1371
        %v1376 = vadd.f32 %v1353, %v1372
        %v1377 = vadd.f32 %v1354, %v1373
        %s1378 = sld [smem:[#allocation7 + $0x102]]
        %v1379 = vstv %s1378
        %v1380 = vmul.f32 %v1355, %v1379
        %v1381 = vmul.f32 %v1356, %v1379
        %v1382 = vmul.f32 %v1357, %v1379
        %1386 = vrot.lane.b32.xlu0 %v1380, 126
        %v1387 = vpop.permute.xlu0 %1386
        %1388 = vrot.lane.b32.xlu0 %v1381, 126
        %v1389 = vpop.permute.xlu0 %1388
        %1390 = vrot.lane.b32.xlu0 %v1382, 126
        %v1391 = vpop.permute.xlu0 %1390
        %v1392 = vsel %vm333, %v1387, %v1389
        %v1393 = vsel %vm333, %v1389, %v1391
        %v1396 = vadd.f32 %v1376, %v1392
        %v1397 = vadd.f32 %v1377, %v1393
        %s1398 = sld [smem:[#allocation7 + $0x182]]
        %v1399 = vstv %s1398
        %v1400 = vmul.f32 %v1355, %v1399
        %v1401 = vmul.f32 %v1356, %v1399
        %v1402 = vmul.f32 %v1357, %v1399
        %1406 = vrot.lane.b32.xlu0 %v1400, 113
        %v1407 = vpop.permute.xlu0 %1406
        %1408 = vrot.lane.b32.xlu0 %v1401, 113
        %v1409 = vpop.permute.xlu0 %1408
        %1410 = vrot.lane.b32.xlu0 %v1402, 113
        %v1411 = vpop.permute.xlu0 %1410
        %v1412 = vsel %vm354, %v1407, %v1409
        %v1413 = vsel %vm354, %v1409, %v1411
        %v1416 = vadd.f32 %v1396, %v1412
        %v1417 = vadd.f32 %v1397, %v1413
        %s1418 = sld [smem:[#allocation7 + $0x202]]
        %v1419 = vstv %s1418
        %v1420 = vmul.f32 %v1355, %v1419
        %v1421 = vmul.f32 %v1356, %v1419
        %v1422 = vmul.f32 %v1357, %v1419
        %1426 = vrot.lane.b32.xlu0 %v1420, 112
        %v1427 = vpop.permute.xlu0 %1426
        %1428 = vrot.lane.b32.xlu0 %v1421, 112
        %v1429 = vpop.permute.xlu0 %1428
        %1430 = vrot.lane.b32.xlu0 %v1422, 112
        %v1431 = vpop.permute.xlu0 %1430
        %v1432 = vsel %vm375, %v1427, %v1429
        %v1433 = vsel %vm375, %v1429, %v1431
        %v1436 = vadd.f32 %v1416, %v1432
        %v1437 = vadd.f32 %v1417, %v1433
        %s1438 = sld [smem:[#allocation7 + $0x282]]
        %v1439 = vstv %s1438
        %v1440 = vmul.f32 %v1355, %v1439
        %v1441 = vmul.f32 %v1356, %v1439
        %v1442 = vmul.f32 %v1357, %v1439
        %1446 = vrot.lane.b32.xlu0 %v1440, 111
        %v1447 = vpop.permute.xlu0 %1446
        %1448 = vrot.lane.b32.xlu0 %v1441, 111
        %v1449 = vpop.permute.xlu0 %1448
        %1450 = vrot.lane.b32.xlu0 %v1442, 111
        %v1451 = vpop.permute.xlu0 %1450
        %v1452 = vsel %vm396, %v1447, %v1449
        %v1453 = vsel %vm396, %v1449, %v1451
        %v1456 = vadd.f32 %v1436, %v1452
        %v1457 = vadd.f32 %v1437, %v1453
        %s1458 = sld [smem:[#allocation7 + $0x302]]
        %v1459 = vstv %s1458
        %v1460 = vmul.f32 %v1355, %v1459
        %v1461 = vmul.f32 %v1356, %v1459
        %v1462 = vmul.f32 %v1357, %v1459
        %1466 = vrot.lane.b32.xlu0 %v1460, 98
        %v1467 = vpop.permute.xlu0 %1466
        %1468 = vrot.lane.b32.xlu0 %v1461, 98
        %v1469 = vpop.permute.xlu0 %1468
        %1470 = vrot.lane.b32.xlu0 %v1462, 98
        %v1471 = vpop.permute.xlu0 %1470
        %v1472 = vsel %vm417, %v1467, %v1469
        %v1473 = vsel %vm417, %v1469, %v1471
        %v1476 = vadd.f32 %v1456, %v1472
        %v1477 = vadd.f32 %v1457, %v1473
        %s1478 = sld [smem:[#allocation7 + $0x382]]
        %v1479 = vstv %s1478
        %v1480 = vmul.f32 %v1355, %v1479
        %v1481 = vmul.f32 %v1356, %v1479
        %v1482 = vmul.f32 %v1357, %v1479
        %1486 = vrot.lane.b32.xlu0 %v1480, 97
        %v1487 = vpop.permute.xlu0 %1486
        %1488 = vrot.lane.b32.xlu0 %v1481, 97
        %v1489 = vpop.permute.xlu0 %1488
        %1490 = vrot.lane.b32.xlu0 %v1482, 97
        %v1491 = vpop.permute.xlu0 %1490
        %v1492 = vsel %vm438, %v1487, %v1489
        %v1493 = vsel %vm438, %v1489, %v1491
        %v1496 = vadd.f32 %v1476, %v1492
        %v1497 = vadd.f32 %v1477, %v1493
        %s1498 = sld [smem:[#allocation7 + $0x402]]
        %v1499 = vstv %s1498
        %v1500 = vmul.f32 %v1355, %v1499
        %v1501 = vmul.f32 %v1356, %v1499
        %v1502 = vmul.f32 %v1357, %v1499
        %1506 = vrot.lane.b32.xlu0 %v1500, 96
        %v1507 = vpop.permute.xlu0 %1506
        %1508 = vrot.lane.b32.xlu0 %v1501, 96
        %v1509 = vpop.permute.xlu0 %1508
        %1510 = vrot.lane.b32.xlu0 %v1502, 96
        %v1511 = vpop.permute.xlu0 %1510
        %v1512 = vsel %vm459, %v1507, %v1509
        %v1513 = vsel %vm459, %v1509, %v1511
        %v1516 = vadd.f32 %v1496, %v1512
        %v1517 = vadd.f32 %v1497, %v1513
        %v1518 = vld [vmem:[%s466] sm:$0xff]
        %v1519 = vld [vmem:[%s466 + $0x8] sm:$0xff]
        %s1520 = sld [smem:[#allocation7 + $0x482]]
        %v1521 = vstv %s1520
        %v1522 = vmul.f32 %v1518, %v1521
        %v1523 = vmul.f32 %v1519, %v1521
        %v1524 = vadd.f32 %v1522, 0.0
        %v1525 = vadd.f32 %v1523, 0.0
        %v1526 = vld [vmem:[%s466] sm:$0xff]
        %v1527 = vld [vmem:[%s466 + $0x8] sm:$0xff]
        %v1528 = vld [vmem:[%s466 + $0x10] sm:$0xff]
        %s1529 = sld [smem:[#allocation7 + $0x502]]
        %v1530 = vstv %s1529
        %v1531 = vmul.f32 %v1526, %v1530
        %v1532 = vmul.f32 %v1527, %v1530
        %v1533 = vmul.f32 %v1528, %v1530
        %1537 = vrot.lane.b32.xlu0 %v1531, 127
        %v1538 = vpop.permute.xlu0 %1537
        %1539 = vrot.lane.b32.xlu0 %v1532, 127
        %v1540 = vpop.permute.xlu0 %1539
        %1541 = vrot.lane.b32.xlu0 %v1533, 127
        %v1542 = vpop.permute.xlu0 %1541
        %v1543 = vsel %vm312, %v1538, %v1540
        %v1544 = vsel %vm312, %v1540, %v1542
        %v1547 = vadd.f32 %v1524, %v1543
        %v1548 = vadd.f32 %v1525, %v1544
        %s1549 = sld [smem:[#allocation7 + $0x582]]
        %v1550 = vstv %s1549
        %v1551 = vmul.f32 %v1526, %v1550
        %v1552 = vmul.f32 %v1527, %v1550
        %v1553 = vmul.f32 %v1528, %v1550
        %1557 = vrot.lane.b32.xlu0 %v1551, 126
        %v1558 = vpop.permute.xlu0 %1557
        %1559 = vrot.lane.b32.xlu0 %v1552, 126
        %v1560 = vpop.permute.xlu0 %1559
        %1561 = vrot.lane.b32.xlu0 %v1553, 126
        %v1562 = vpop.permute.xlu0 %1561
        %v1563 = vsel %vm333, %v1558, %v1560
        %v1564 = vsel %vm333, %v1560, %v1562
        %v1567 = vadd.f32 %v1547, %v1563
        %v1568 = vadd.f32 %v1548, %v1564
        %s1569 = sld [smem:[#allocation7 + $0x602]]
        %v1570 = vstv %s1569
        %v1571 = vmul.f32 %v1526, %v1570
        %v1572 = vmul.f32 %v1527, %v1570
        %v1573 = vmul.f32 %v1528, %v1570
        %1577 = vrot.lane.b32.xlu0 %v1571, 113
        %v1578 = vpop.permute.xlu0 %1577
        %1579 = vrot.lane.b32.xlu0 %v1572, 113
        %v1580 = vpop.permute.xlu0 %1579
        %1581 = vrot.lane.b32.xlu0 %v1573, 113
        %v1582 = vpop.permute.xlu0 %1581
        %v1583 = vsel %vm354, %v1578, %v1580
        %v1584 = vsel %vm354, %v1580, %v1582
        %v1587 = vadd.f32 %v1567, %v1583
        %v1588 = vadd.f32 %v1568, %v1584
        %s1589 = sld [smem:[#allocation7 + $0x682]]
        %v1590 = vstv %s1589
        %v1591 = vmul.f32 %v1526, %v1590
        %v1592 = vmul.f32 %v1527, %v1590
        %v1593 = vmul.f32 %v1528, %v1590
        %1597 = vrot.lane.b32.xlu0 %v1591, 112
        %v1598 = vpop.permute.xlu0 %1597
        %1599 = vrot.lane.b32.xlu0 %v1592, 112
        %v1600 = vpop.permute.xlu0 %1599
        %1601 = vrot.lane.b32.xlu0 %v1593, 112
        %v1602 = vpop.permute.xlu0 %1601
        %v1603 = vsel %vm375, %v1598, %v1600
        %v1604 = vsel %vm375, %v1600, %v1602
        %v1607 = vadd.f32 %v1587, %v1603
        %v1608 = vadd.f32 %v1588, %v1604
        %s1609 = sld [smem:[#allocation7 + $0x702]]
        %v1610 = vstv %s1609
        %v1611 = vmul.f32 %v1526, %v1610
        %v1612 = vmul.f32 %v1527, %v1610
        %v1613 = vmul.f32 %v1528, %v1610
        %1617 = vrot.lane.b32.xlu0 %v1611, 111
        %v1618 = vpop.permute.xlu0 %1617
        %1619 = vrot.lane.b32.xlu0 %v1612, 111
        %v1620 = vpop.permute.xlu0 %1619
        %1621 = vrot.lane.b32.xlu0 %v1613, 111
        %v1622 = vpop.permute.xlu0 %1621
        %v1623 = vsel %vm396, %v1618, %v1620
        %v1624 = vsel %vm396, %v1620, %v1622
        %v1627 = vadd.f32 %v1607, %v1623
        %v1628 = vadd.f32 %v1608, %v1624
        %s1629 = sld [smem:[#allocation7 + $0x782]]
        %v1630 = vstv %s1629
        %v1631 = vmul.f32 %v1526, %v1630
        %v1632 = vmul.f32 %v1527, %v1630
        %v1633 = vmul.f32 %v1528, %v1630
        %1637 = vrot.lane.b32.xlu0 %v1631, 98
        %v1638 = vpop.permute.xlu0 %1637
        %1639 = vrot.lane.b32.xlu0 %v1632, 98
        %v1640 = vpop.permute.xlu0 %1639
        %1641 = vrot.lane.b32.xlu0 %v1633, 98
        %v1642 = vpop.permute.xlu0 %1641
        %v1643 = vsel %vm417, %v1638, %v1640
        %v1644 = vsel %vm417, %v1640, %v1642
        %v1647 = vadd.f32 %v1627, %v1643
        %v1648 = vadd.f32 %v1628, %v1644
        %s1649 = sld [smem:[#allocation7 + $0x802]]
        %v1650 = vstv %s1649
        %v1651 = vmul.f32 %v1526, %v1650
        %v1652 = vmul.f32 %v1527, %v1650
        %v1653 = vmul.f32 %v1528, %v1650
        %1657 = vrot.lane.b32.xlu0 %v1651, 97
        %v1658 = vpop.permute.xlu0 %1657
        %1659 = vrot.lane.b32.xlu0 %v1652, 97
        %v1660 = vpop.permute.xlu0 %1659
        %1661 = vrot.lane.b32.xlu0 %v1653, 97
        %v1662 = vpop.permute.xlu0 %1661
        %v1663 = vsel %vm438, %v1658, %v1660
        %v1664 = vsel %vm438, %v1660, %v1662
        %v1667 = vadd.f32 %v1647, %v1663
        %v1668 = vadd.f32 %v1648, %v1664
        %s1669 = sld [smem:[#allocation7 + $0x882]]
        %v1670 = vstv %s1669
        %v1671 = vmul.f32 %v1526, %v1670
        %v1672 = vmul.f32 %v1527, %v1670
        %v1673 = vmul.f32 %v1528, %v1670
        %1677 = vrot.lane.b32.xlu0 %v1671, 96
        %v1678 = vpop.permute.xlu0 %1677
        %1679 = vrot.lane.b32.xlu0 %v1672, 96
        %v1680 = vpop.permute.xlu0 %1679
        %1681 = vrot.lane.b32.xlu0 %v1673, 96
        %v1682 = vpop.permute.xlu0 %1681
        %v1683 = vsel %vm459, %v1678, %v1680
        %v1684 = vsel %vm459, %v1680, %v1682
        %v1687 = vadd.f32 %v1667, %v1683
        %v1688 = vadd.f32 %v1668, %v1684
        %v1689 = vld [vmem:[%s638] sm:$0xff]
        %v1690 = vld [vmem:[%s638 + $0x8] sm:$0xff]
        %s1691 = sld [smem:[#allocation7 + $0x902]]
        %v1692 = vstv %s1691
        %v1693 = vmul.f32 %v1689, %v1692
        %v1694 = vmul.f32 %v1690, %v1692
        %v1695 = vadd.f32 %v1693, 0.0
        %v1696 = vadd.f32 %v1694, 0.0
        %v1697 = vld [vmem:[%s638] sm:$0xff]
        %v1698 = vld [vmem:[%s638 + $0x8] sm:$0xff]
        %v1699 = vld [vmem:[%s638 + $0x10] sm:$0xff]
        %s1700 = sld [smem:[#allocation7 + $0x982]]
        %v1701 = vstv %s1700
        %v1702 = vmul.f32 %v1697, %v1701
        %v1703 = vmul.f32 %v1698, %v1701
        %v1704 = vmul.f32 %v1699, %v1701
        %1708 = vrot.lane.b32.xlu0 %v1702, 127
        %v1709 = vpop.permute.xlu0 %1708
        %1710 = vrot.lane.b32.xlu0 %v1703, 127
        %v1711 = vpop.permute.xlu0 %1710
        %1712 = vrot.lane.b32.xlu0 %v1704, 127
        %v1713 = vpop.permute.xlu0 %1712
        %v1714 = vsel %vm312, %v1709, %v1711
        %v1715 = vsel %vm312, %v1711, %v1713
        %v1718 = vadd.f32 %v1695, %v1714
        %v1719 = vadd.f32 %v1696, %v1715
        %s1720 = sld [smem:[#allocation7 + $0xa02]]
        %v1721 = vstv %s1720
        %v1722 = vmul.f32 %v1697, %v1721
        %v1723 = vmul.f32 %v1698, %v1721
        %v1724 = vmul.f32 %v1699, %v1721
        %1728 = vrot.lane.b32.xlu0 %v1722, 126
        %v1729 = vpop.permute.xlu0 %1728
        %1730 = vrot.lane.b32.xlu0 %v1723, 126
        %v1731 = vpop.permute.xlu0 %1730
        %1732 = vrot.lane.b32.xlu0 %v1724, 126
        %v1733 = vpop.permute.xlu0 %1732
        %v1734 = vsel %vm333, %v1729, %v1731
        %v1735 = vsel %vm333, %v1731, %v1733
        %v1738 = vadd.f32 %v1718, %v1734
        %v1739 = vadd.f32 %v1719, %v1735
        %s1740 = sld [smem:[#allocation7 + $0xa82]]
        %v1741 = vstv %s1740
        %v1742 = vmul.f32 %v1697, %v1741
        %v1743 = vmul.f32 %v1698, %v1741
        %v1744 = vmul.f32 %v1699, %v1741
        %1748 = vrot.lane.b32.xlu0 %v1742, 113
        %v1749 = vpop.permute.xlu0 %1748
        %1750 = vrot.lane.b32.xlu0 %v1743, 113
        %v1751 = vpop.permute.xlu0 %1750
        %1752 = vrot.lane.b32.xlu0 %v1744, 113
        %v1753 = vpop.permute.xlu0 %1752
        %v1754 = vsel %vm354, %v1749, %v1751
        %v1755 = vsel %vm354, %v1751, %v1753
        %v1758 = vadd.f32 %v1738, %v1754
        %v1759 = vadd.f32 %v1739, %v1755
        %s1760 = sld [smem:[#allocation7 + $0xb02]]
        %v1761 = vstv %s1760
        %v1762 = vmul.f32 %v1697, %v1761
        %v1763 = vmul.f32 %v1698, %v1761
        %v1764 = vmul.f32 %v1699, %v1761
        %1768 = vrot.lane.b32.xlu0 %v1762, 112
        %v1769 = vpop.permute.xlu0 %1768
        %1770 = vrot.lane.b32.xlu0 %v1763, 112
        %v1771 = vpop.permute.xlu0 %1770
        %1772 = vrot.lane.b32.xlu0 %v1764, 112
        %v1773 = vpop.permute.xlu0 %1772
        %v1774 = vsel %vm375, %v1769, %v1771
        %v1775 = vsel %vm375, %v1771, %v1773
        %v1778 = vadd.f32 %v1758, %v1774
        %v1779 = vadd.f32 %v1759, %v1775
        %s1780 = sld [smem:[#allocation7 + $0xb82]]
        %v1781 = vstv %s1780
        %v1782 = vmul.f32 %v1697, %v1781
        %v1783 = vmul.f32 %v1698, %v1781
        %v1784 = vmul.f32 %v1699, %v1781
        %1788 = vrot.lane.b32.xlu0 %v1782, 111
        %v1789 = vpop.permute.xlu0 %1788
        %1790 = vrot.lane.b32.xlu0 %v1783, 111
        %v1791 = vpop.permute.xlu0 %1790
        %1792 = vrot.lane.b32.xlu0 %v1784, 111
        %v1793 = vpop.permute.xlu0 %1792
        %v1794 = vsel %vm396, %v1789, %v1791
        %v1795 = vsel %vm396, %v1791, %v1793
        %v1798 = vadd.f32 %v1778, %v1794
        %v1799 = vadd.f32 %v1779, %v1795
        %s1800 = sld [smem:[#allocation7 + $0xc02]]
        %v1801 = vstv %s1800
        %v1802 = vmul.f32 %v1697, %v1801
        %v1803 = vmul.f32 %v1698, %v1801
        %v1804 = vmul.f32 %v1699, %v1801
        %1808 = vrot.lane.b32.xlu0 %v1802, 98
        %v1809 = vpop.permute.xlu0 %1808
        %1810 = vrot.lane.b32.xlu0 %v1803, 98
        %v1811 = vpop.permute.xlu0 %1810
        %1812 = vrot.lane.b32.xlu0 %v1804, 98
        %v1813 = vpop.permute.xlu0 %1812
        %v1814 = vsel %vm417, %v1809, %v1811
        %v1815 = vsel %vm417, %v1811, %v1813
        %v1818 = vadd.f32 %v1798, %v1814
        %v1819 = vadd.f32 %v1799, %v1815
        %s1820 = sld [smem:[#allocation7 + $0xc82]]
        %v1821 = vstv %s1820
        %v1822 = vmul.f32 %v1697, %v1821
        %v1823 = vmul.f32 %v1698, %v1821
        %v1824 = vmul.f32 %v1699, %v1821
        %1828 = vrot.lane.b32.xlu0 %v1822, 97
        %v1829 = vpop.permute.xlu0 %1828
        %1830 = vrot.lane.b32.xlu0 %v1823, 97
        %v1831 = vpop.permute.xlu0 %1830
        %1832 = vrot.lane.b32.xlu0 %v1824, 97
        %v1833 = vpop.permute.xlu0 %1832
        %v1834 = vsel %vm438, %v1829, %v1831
        %v1835 = vsel %vm438, %v1831, %v1833
        %v1838 = vadd.f32 %v1818, %v1834
        %v1839 = vadd.f32 %v1819, %v1835
        %s1840 = sld [smem:[#allocation7 + $0xd02]]
        %v1841 = vstv %s1840
        %v1842 = vmul.f32 %v1697, %v1841
        %v1843 = vmul.f32 %v1698, %v1841
        %v1844 = vmul.f32 %v1699, %v1841
        %1848 = vrot.lane.b32.xlu0 %v1842, 96
        %v1849 = vpop.permute.xlu0 %1848
        %1850 = vrot.lane.b32.xlu0 %v1843, 96
        %v1851 = vpop.permute.xlu0 %1850
        %1852 = vrot.lane.b32.xlu0 %v1844, 96
        %v1853 = vpop.permute.xlu0 %1852
        %v1854 = vsel %vm459, %v1849, %v1851
        %v1855 = vsel %vm459, %v1851, %v1853
        %v1858 = vadd.f32 %v1838, %v1854
        %v1859 = vadd.f32 %v1839, %v1855
        %v1860 = vadd.f32 %v1516, %v1687
        %v1861 = vadd.f32 %v1517, %v1688
        %v1862 = vadd.f32 %v1860, %v1858
        %v1863 = vadd.f32 %v1861, %v1859
        %s1864 = sld [smem:[#allocation8 + $0x2]]
        %v1865 = vstv %s1864
        %v1866 = vadd.f32 %v1862, %v1865
        %v1867 = vadd.f32 %v1863, %v1865
        %v1868 = vmax.f32 %v1866, 0.0
        %v1869 = vmax.f32 %v1867, 0.0
        %1870 = vst [vmem:[#allocation2 + $0x20] sm:$0xff] %v1868
        %1871 = vst [vmem:[#allocation2 + $0x28] sm:$0xff] %v1869
        %v1872 = vld [vmem:[%s247] sm:$0xff]
        %v1873 = vld [vmem:[%s247 + $0x8] sm:$0xff]
        %s1874 = sld [smem:[#allocation7 + $0x3]]
        %v1875 = vstv %s1874
        %v1876 = vmul.f32 %v1872, %v1875
        %v1877 = vmul.f32 %v1873, %v1875
        %v1878 = vadd.f32 %v1876, 0.0
        %v1879 = vadd.f32 %v1877, 0.0
        %v1880 = vld [vmem:[%s247] sm:$0xff]
        %v1881 = vld [vmem:[%s247 + $0x8] sm:$0xff]
        %v1882 = vld [vmem:[%s247 + $0x10] sm:$0xff]
        %s1883 = sld [smem:[#allocation7 + $0x83]]
        %v1884 = vstv %s1883
        %v1885 = vmul.f32 %v1880, %v1884
        %v1886 = vmul.f32 %v1881, %v1884
        %v1887 = vmul.f32 %v1882, %v1884
        %1891 = vrot.lane.b32.xlu0 %v1885, 127
        %v1892 = vpop.permute.xlu0 %1891
        %1893 = vrot.lane.b32.xlu0 %v1886, 127
        %v1894 = vpop.permute.xlu0 %1893
        %1895 = vrot.lane.b32.xlu0 %v1887, 127
        %v1896 = vpop.permute.xlu0 %1895
        %v1897 = vsel %vm312, %v1892, %v1894
        %v1898 = vsel %vm312, %v1894, %v1896
        %v1901 = vadd.f32 %v1878, %v1897
        %v1902 = vadd.f32 %v1879, %v1898
        %s1903 = sld [smem:[#allocation7 + $0x103]]
        %v1904 = vstv %s1903
        %v1905 = vmul.f32 %v1880, %v1904
        %v1906 = vmul.f32 %v1881, %v1904
        %v1907 = vmul.f32 %v1882, %v1904
        %1911 = vrot.lane.b32.xlu0 %v1905, 126
        %v1912 = vpop.permute.xlu0 %1911
        %1913 = vrot.lane.b32.xlu0 %v1906, 126
        %v1914 = vpop.permute.xlu0 %1913
        %1915 = vrot.lane.b32.xlu0 %v1907, 126
        %v1916 = vpop.permute.xlu0 %1915
        %v1917 = vsel %vm333, %v1912, %v1914
        %v1918 = vsel %vm333, %v1914, %v1916
        %v1921 = vadd.f32 %v1901, %v1917
        %v1922 = vadd.f32 %v1902, %v1918
        %s1923 = sld [smem:[#allocation7 + $0x183]]
        %v1924 = vstv %s1923
        %v1925 = vmul.f32 %v1880, %v1924
        %v1926 = vmul.f32 %v1881, %v1924
        %v1927 = vmul.f32 %v1882, %v1924
        %1931 = vrot.lane.b32.xlu0 %v1925, 113
        %v1932 = vpop.permute.xlu0 %1931
        %1933 = vrot.lane.b32.xlu0 %v1926, 113
        %v1934 = vpop.permute.xlu0 %1933
        %1935 = vrot.lane.b32.xlu0 %v1927, 113
        %v1936 = vpop.permute.xlu0 %1935
        %v1937 = vsel %vm354, %v1932, %v1934
        %v1938 = vsel %vm354, %v1934, %v1936
        %v1941 = vadd.f32 %v1921, %v1937
        %v1942 = vadd.f32 %v1922, %v1938
        %s1943 = sld [smem:[#allocation7 + $0x203]]
        %v1944 = vstv %s1943
        %v1945 = vmul.f32 %v1880, %v1944
        %v1946 = vmul.f32 %v1881, %v1944
        %v1947 = vmul.f32 %v1882, %v1944
        %1951 = vrot.lane.b32.xlu0 %v1945, 112
        %v1952 = vpop.permute.xlu0 %1951
        %1953 = vrot.lane.b32.xlu0 %v1946, 112
        %v1954 = vpop.permute.xlu0 %1953
        %1955 = vrot.lane.b32.xlu0 %v1947, 112
        %v1956 = vpop.permute.xlu0 %1955
        %v1957 = vsel %vm375, %v1952, %v1954
        %v1958 = vsel %vm375, %v1954, %v1956
        %v1961 = vadd.f32 %v1941, %v1957
        %v1962 = vadd.f32 %v1942, %v1958
        %s1963 = sld [smem:[#allocation7 + $0x283]]
        %v1964 = vstv %s1963
        %v1965 = vmul.f32 %v1880, %v1964
        %v1966 = vmul.f32 %v1881, %v1964
        %v1967 = vmul.f32 %v1882, %v1964
        %1971 = vrot.lane.b32.xlu0 %v1965, 111
        %v1972 = vpop.permute.xlu0 %1971
        %1973 = vrot.lane.b32.xlu0 %v1966, 111
        %v1974 = vpop.permute.xlu0 %1973
        %1975 = vrot.lane.b32.xlu0 %v1967, 111
        %v1976 = vpop.permute.xlu0 %1975
        %v1977 = vsel %vm396, %v1972, %v1974
        %v1978 = vsel %vm396, %v1974, %v1976
        %v1981 = vadd.f32 %v1961, %v1977
        %v1982 = vadd.f32 %v1962, %v1978
        %s1983 = sld [smem:[#allocation7 + $0x303]]
        %v1984 = vstv %s1983
        %v1985 = vmul.f32 %v1880, %v1984
        %v1986 = vmul.f32 %v1881, %v1984
        %v1987 = vmul.f32 %v1882, %v1984
        %1991 = vrot.lane.b32.xlu0 %v1985, 98
        %v1992 = vpop.permute.xlu0 %1991
        %1993 = vrot.lane.b32.xlu0 %v1986, 98
        %v1994 = vpop.permute.xlu0 %1993
        %1995 = vrot.lane.b32.xlu0 %v1987, 98
        %v1996 = vpop.permute.xlu0 %1995
        %v1997 = vsel %vm417, %v1992, %v1994
        %v1998 = vsel %vm417, %v1994, %v1996
        %v2001 = vadd.f32 %v1981, %v1997
        %v2002 = vadd.f32 %v1982, %v1998
        %s2003 = sld [smem:[#allocation7 + $0x383]]
        %v2004 = vstv %s2003
        %v2005 = vmul.f32 %v1880, %v2004
        %v2006 = vmul.f32 %v1881, %v2004
        %v2007 = vmul.f32 %v1882, %v2004
        %2011 = vrot.lane.b32.xlu0 %v2005, 97
        %v2012 = vpop.permute.xlu0 %2011
        %2013 = vrot.lane.b32.xlu0 %v2006, 97
        %v2014 = vpop.permute.xlu0 %2013
        %2015 = vrot.lane.b32.xlu0 %v2007, 97
        %v2016 = vpop.permute.xlu0 %2015
        %v2017 = vsel %vm438, %v2012, %v2014
        %v2018 = vsel %vm438, %v2014, %v2016
        %v2021 = vadd.f32 %v2001, %v2017
        %v2022 = vadd.f32 %v2002, %v2018
        %s2023 = sld [smem:[#allocation7 + $0x403]]
        %v2024 = vstv %s2023
        %v2025 = vmul.f32 %v1880, %v2024
        %v2026 = vmul.f32 %v1881, %v2024
        %v2027 = vmul.f32 %v1882, %v2024
        %2031 = vrot.lane.b32.xlu0 %v2025, 96
        %v2032 = vpop.permute.xlu0 %2031
        %2033 = vrot.lane.b32.xlu0 %v2026, 96
        %v2034 = vpop.permute.xlu0 %2033
        %2035 = vrot.lane.b32.xlu0 %v2027, 96
        %v2036 = vpop.permute.xlu0 %2035
        %v2037 = vsel %vm459, %v2032, %v2034
        %v2038 = vsel %vm459, %v2034, %v2036
        %v2041 = vadd.f32 %v2021, %v2037
        %v2042 = vadd.f32 %v2022, %v2038
        %v2043 = vld [vmem:[%s466] sm:$0xff]
        %v2044 = vld [vmem:[%s466 + $0x8] sm:$0xff]
        %s2045 = sld [smem:[#allocation7 + $0x483]]
        %v2046 = vstv %s2045
        %v2047 = vmul.f32 %v2043, %v2046
        %v2048 = vmul.f32 %v2044, %v2046
        %v2049 = vadd.f32 %v2047, 0.0
        %v2050 = vadd.f32 %v2048, 0.0
        %v2051 = vld [vmem:[%s466] sm:$0xff]
        %v2052 = vld [vmem:[%s466 + $0x8] sm:$0xff]
        %v2053 = vld [vmem:[%s466 + $0x10] sm:$0xff]
        %s2054 = sld [smem:[#allocation7 + $0x503]]
        %v2055 = vstv %s2054
        %v2056 = vmul.f32 %v2051, %v2055
        %v2057 = vmul.f32 %v2052, %v2055
        %v2058 = vmul.f32 %v2053, %v2055
        %2062 = vrot.lane.b32.xlu0 %v2056, 127
        %v2063 = vpop.permute.xlu0 %2062
        %2064 = vrot.lane.b32.xlu0 %v2057, 127
        %v2065 = vpop.permute.xlu0 %2064
        %2066 = vrot.lane.b32.xlu0 %v2058, 127
        %v2067 = vpop.permute.xlu0 %2066
        %v2068 = vsel %vm312, %v2063, %v2065
        %v2069 = vsel %vm312, %v2065, %v2067
        %v2072 = vadd.f32 %v2049, %v2068
        %v2073 = vadd.f32 %v2050, %v2069
        %s2074 = sld [smem:[#allocation7 + $0x583]]
        %v2075 = vstv %s2074
        %v2076 = vmul.f32 %v2051, %v2075
        %v2077 = vmul.f32 %v2052, %v2075
        %v2078 = vmul.f32 %v2053, %v2075
        %2082 = vrot.lane.b32.xlu0 %v2076, 126
        %v2083 = vpop.permute.xlu0 %2082
        %2084 = vrot.lane.b32.xlu0 %v2077, 126
        %v2085 = vpop.permute.xlu0 %2084
        %2086 = vrot.lane.b32.xlu0 %v2078, 126
        %v2087 = vpop.permute.xlu0 %2086
        %v2088 = vsel %vm333, %v2083, %v2085
        %v2089 = vsel %vm333, %v2085, %v2087
        %v2092 = vadd.f32 %v2072, %v2088
        %v2093 = vadd.f32 %v2073, %v2089
        %s2094 = sld [smem:[#allocation7 + $0x603]]
        %v2095 = vstv %s2094
        %v2096 = vmul.f32 %v2051, %v2095
        %v2097 = vmul.f32 %v2052, %v2095
        %v2098 = vmul.f32 %v2053, %v2095
        %2102 = vrot.lane.b32.xlu0 %v2096, 113
        %v2103 = vpop.permute.xlu0 %2102
        %2104 = vrot.lane.b32.xlu0 %v2097, 113
        %v2105 = vpop.permute.xlu0 %2104
        %2106 = vrot.lane.b32.xlu0 %v2098, 113
        %v2107 = vpop.permute.xlu0 %2106
        %v2108 = vsel %vm354, %v2103, %v2105
        %v2109 = vsel %vm354, %v2105, %v2107
        %v2112 = vadd.f32 %v2092, %v2108
        %v2113 = vadd.f32 %v2093, %v2109
        %s2114 = sld [smem:[#allocation7 + $0x683]]
        %v2115 = vstv %s2114
        %v2116 = vmul.f32 %v2051, %v2115
        %v2117 = vmul.f32 %v2052, %v2115
        %v2118 = vmul.f32 %v2053, %v2115
        %2122 = vrot.lane.b32.xlu0 %v2116, 112
        %v2123 = vpop.permute.xlu0 %2122
        %2124 = vrot.lane.b32.xlu0 %v2117, 112
        %v2125 = vpop.permute.xlu0 %2124
        %2126 = vrot.lane.b32.xlu0 %v2118, 112
        %v2127 = vpop.permute.xlu0 %2126
        %v2128 = vsel %vm375, %v2123, %v2125
        %v2129 = vsel %vm375, %v2125, %v2127
        %v2132 = vadd.f32 %v2112, %v2128
        %v2133 = vadd.f32 %v2113, %v2129
        %s2134 = sld [smem:[#allocation7 + $0x703]]
        %v2135 = vstv %s2134
        %v2136 = vmul.f32 %v2051, %v2135
        %v2137 = vmul.f32 %v2052, %v2135
        %v2138 = vmul.f32 %v2053, %v2135
        %2142 = vrot.lane.b32.xlu0 %v2136, 111
        %v2143 = vpop.permute.xlu0 %2142
        %2144 = vrot.lane.b32.xlu0 %v2137, 111
        %v2145 = vpop.permute.xlu0 %2144
        %2146 = vrot.lane.b32.xlu0 %v2138, 111
        %v2147 = vpop.permute.xlu0 %2146
        %v2148 = vsel %vm396, %v2143, %v2145
        %v2149 = vsel %vm396, %v2145, %v2147
        %v2152 = vadd.f32 %v2132, %v2148
        %v2153 = vadd.f32 %v2133, %v2149
        %s2154 = sld [smem:[#allocation7 + $0x783]]
        %v2155 = vstv %s2154
        %v2156 = vmul.f32 %v2051, %v2155
        %v2157 = vmul.f32 %v2052, %v2155
        %v2158 = vmul.f32 %v2053, %v2155
        %2162 = vrot.lane.b32.xlu0 %v2156, 98
        %v2163 = vpop.permute.xlu0 %2162
        %2164 = vrot.lane.b32.xlu0 %v2157, 98
        %v2165 = vpop.permute.xlu0 %2164
        %2166 = vrot.lane.b32.xlu0 %v2158, 98
        %v2167 = vpop.permute.xlu0 %2166
        %v2168 = vsel %vm417, %v2163, %v2165
        %v2169 = vsel %vm417, %v2165, %v2167
        %v2172 = vadd.f32 %v2152, %v2168
        %v2173 = vadd.f32 %v2153, %v2169
        %s2174 = sld [smem:[#allocation7 + $0x803]]
        %v2175 = vstv %s2174
        %v2176 = vmul.f32 %v2051, %v2175
        %v2177 = vmul.f32 %v2052, %v2175
        %v2178 = vmul.f32 %v2053, %v2175
        %2182 = vrot.lane.b32.xlu0 %v2176, 97
        %v2183 = vpop.permute.xlu0 %2182
        %2184 = vrot.lane.b32.xlu0 %v2177, 97
        %v2185 = vpop.permute.xlu0 %2184
        %2186 = vrot.lane.b32.xlu0 %v2178, 97
        %v2187 = vpop.permute.xlu0 %2186
        %v2188 = vsel %vm438, %v2183, %v2185
        %v2189 = vsel %vm438, %v2185, %v2187
        %v2192 = vadd.f32 %v2172, %v2188
        %v2193 = vadd.f32 %v2173, %v2189
        %s2194 = sld [smem:[#allocation7 + $0x883]]
        %v2195 = vstv %s2194
        %v2196 = vmul.f32 %v2051, %v2195
        %v2197 = vmul.f32 %v2052, %v2195
        %v2198 = vmul.f32 %v2053, %v2195
        %2202 = vrot.lane.b32.xlu0 %v2196, 96
        %v2203 = vpop.permute.xlu0 %2202
        %2204 = vrot.lane.b32.xlu0 %v2197, 96
        %v2205 = vpop.permute.xlu0 %2204
        %2206 = vrot.lane.b32.xlu0 %v2198, 96
        %v2207 = vpop.permute.xlu0 %2206
        %v2208 = vsel %vm459, %v2203, %v2205
        %v2209 = vsel %vm459, %v2205, %v2207
        %v2212 = vadd.f32 %v2192, %v2208
        %v2213 = vadd.f32 %v2193, %v2209
        %v2214 = vld [vmem:[%s638] sm:$0xff]
        %v2215 = vld [vmem:[%s638 + $0x8] sm:$0xff]
        %s2216 = sld [smem:[#allocation7 + $0x903]]
        %v2217 = vstv %s2216
        %v2218 = vmul.f32 %v2214, %v2217
        %v2219 = vmul.f32 %v2215, %v2217
        %v2220 = vadd.f32 %v2218, 0.0
        %v2221 = vadd.f32 %v2219, 0.0
        %v2222 = vld [vmem:[%s638] sm:$0xff]
        %v2223 = vld [vmem:[%s638 + $0x8] sm:$0xff]
        %v2224 = vld [vmem:[%s638 + $0x10] sm:$0xff]
        %s2225 = sld [smem:[#allocation7 + $0x983]]
        %v2226 = vstv %s2225
        %v2227 = vmul.f32 %v2222, %v2226
        %v2228 = vmul.f32 %v2223, %v2226
        %v2229 = vmul.f32 %v2224, %v2226
        %2233 = vrot.lane.b32.xlu0 %v2227, 127
        %v2234 = vpop.permute.xlu0 %2233
        %2235 = vrot.lane.b32.xlu0 %v2228, 127
        %v2236 = vpop.permute.xlu0 %2235
        %2237 = vrot.lane.b32.xlu0 %v2229, 127
        %v2238 = vpop.permute.xlu0 %2237
        %v2239 = vsel %vm312, %v2234, %v2236
        %v2240 = vsel %vm312, %v2236, %v2238
        %v2243 = vadd.f32 %v2220, %v2239
        %v2244 = vadd.f32 %v2221, %v2240
        %s2245 = sld [smem:[#allocation7 + $0xa03]]
        %v2246 = vstv %s2245
        %v2247 = vmul.f32 %v2222, %v2246
        %v2248 = vmul.f32 %v2223, %v2246
        %v2249 = vmul.f32 %v2224, %v2246
        %2253 = vrot.lane.b32.xlu0 %v2247, 126
        %v2254 = vpop.permute.xlu0 %2253
        %2255 = vrot.lane.b32.xlu0 %v2248, 126
        %v2256 = vpop.permute.xlu0 %2255
        %2257 = vrot.lane.b32.xlu0 %v2249, 126
        %v2258 = vpop.permute.xlu0 %2257
        %v2259 = vsel %vm333, %v2254, %v2256
        %v2260 = vsel %vm333, %v2256, %v2258
        %v2263 = vadd.f32 %v2243, %v2259
        %v2264 = vadd.f32 %v2244, %v2260
        %s2265 = sld [smem:[#allocation7 + $0xa83]]
        %v2266 = vstv %s2265
        %v2267 = vmul.f32 %v2222, %v2266
        %v2268 = vmul.f32 %v2223, %v2266
        %v2269 = vmul.f32 %v2224, %v2266
        %2273 = vrot.lane.b32.xlu0 %v2267, 113
        %v2274 = vpop.permute.xlu0 %2273
        %2275 = vrot.lane.b32.xlu0 %v2268, 113
        %v2276 = vpop.permute.xlu0 %2275
        %2277 = vrot.lane.b32.xlu0 %v2269, 113
        %v2278 = vpop.permute.xlu0 %2277
        %v2279 = vsel %vm354, %v2274, %v2276
        %v2280 = vsel %vm354, %v2276, %v2278
        %v2283 = vadd.f32 %v2263, %v2279
        %v2284 = vadd.f32 %v2264, %v2280
        %s2285 = sld [smem:[#allocation7 + $0xb03]]
        %v2286 = vstv %s2285
        %v2287 = vmul.f32 %v2222, %v2286
        %v2288 = vmul.f32 %v2223, %v2286
        %v2289 = vmul.f32 %v2224, %v2286
        %2293 = vrot.lane.b32.xlu0 %v2287, 112
        %v2294 = vpop.permute.xlu0 %2293
        %2295 = vrot.lane.b32.xlu0 %v2288, 112
        %v2296 = vpop.permute.xlu0 %2295
        %2297 = vrot.lane.b32.xlu0 %v2289, 112
        %v2298 = vpop.permute.xlu0 %2297
        %v2299 = vsel %vm375, %v2294, %v2296
        %v2300 = vsel %vm375, %v2296, %v2298
        %v2303 = vadd.f32 %v2283, %v2299
        %v2304 = vadd.f32 %v2284, %v2300
        %s2305 = sld [smem:[#allocation7 + $0xb83]]
        %v2306 = vstv %s2305
        %v2307 = vmul.f32 %v2222, %v2306
        %v2308 = vmul.f32 %v2223, %v2306
        %v2309 = vmul.f32 %v2224, %v2306
        %2313 = vrot.lane.b32.xlu0 %v2307, 111
        %v2314 = vpop.permute.xlu0 %2313
        %2315 = vrot.lane.b32.xlu0 %v2308, 111
        %v2316 = vpop.permute.xlu0 %2315
        %2317 = vrot.lane.b32.xlu0 %v2309, 111
        %v2318 = vpop.permute.xlu0 %2317
        %v2319 = vsel %vm396, %v2314, %v2316
        %v2320 = vsel %vm396, %v2316, %v2318
        %v2323 = vadd.f32 %v2303, %v2319
        %v2324 = vadd.f32 %v2304, %v2320
        %s2325 = sld [smem:[#allocation7 + $0xc03]]
        %v2326 = vstv %s2325
        %v2327 = vmul.f32 %v2222, %v2326
        %v2328 = vmul.f32 %v2223, %v2326
        %v2329 = vmul.f32 %v2224, %v2326
        %2333 = vrot.lane.b32.xlu0 %v2327, 98
        %v2334 = vpop.permute.xlu0 %2333
        %2335 = vrot.lane.b32.xlu0 %v2328, 98
        %v2336 = vpop.permute.xlu0 %2335
        %2337 = vrot.lane.b32.xlu0 %v2329, 98
        %v2338 = vpop.permute.xlu0 %2337
        %v2339 = vsel %vm417, %v2334, %v2336
        %v2340 = vsel %vm417, %v2336, %v2338
        %v2343 = vadd.f32 %v2323, %v2339
        %v2344 = vadd.f32 %v2324, %v2340
        %s2345 = sld [smem:[#allocation7 + $0xc83]]
        %v2346 = vstv %s2345
        %v2347 = vmul.f32 %v2222, %v2346
        %v2348 = vmul.f32 %v2223, %v2346
        %v2349 = vmul.f32 %v2224, %v2346
        %2353 = vrot.lane.b32.xlu0 %v2347, 97
        %v2354 = vpop.permute.xlu0 %2353
        %2355 = vrot.lane.b32.xlu0 %v2348, 97
        %v2356 = vpop.permute.xlu0 %2355
        %2357 = vrot.lane.b32.xlu0 %v2349, 97
        %v2358 = vpop.permute.xlu0 %2357
        %v2359 = vsel %vm438, %v2354, %v2356
        %v2360 = vsel %vm438, %v2356, %v2358
        %v2363 = vadd.f32 %v2343, %v2359
        %v2364 = vadd.f32 %v2344, %v2360
        %s2365 = sld [smem:[#allocation7 + $0xd03]]
        %v2366 = vstv %s2365
        %v2367 = vmul.f32 %v2222, %v2366
        %v2368 = vmul.f32 %v2223, %v2366
        %v2369 = vmul.f32 %v2224, %v2366
        %2373 = vrot.lane.b32.xlu0 %v2367, 96
        %v2374 = vpop.permute.xlu0 %2373
        %2375 = vrot.lane.b32.xlu0 %v2368, 96
        %v2376 = vpop.permute.xlu0 %2375
        %2377 = vrot.lane.b32.xlu0 %v2369, 96
        %v2378 = vpop.permute.xlu0 %2377
        %v2379 = vsel %vm459, %v2374, %v2376
        %v2380 = vsel %vm459, %v2376, %v2378
        %v2383 = vadd.f32 %v2363, %v2379
        %v2384 = vadd.f32 %v2364, %v2380
        %v2385 = vadd.f32 %v2041, %v2212
        %v2386 = vadd.f32 %v2042, %v2213
        %v2387 = vadd.f32 %v2385, %v2383
        %v2388 = vadd.f32 %v2386, %v2384
        %s2389 = sld [smem:[#allocation8 + $0x3]]
        %v2390 = vstv %s2389
        %v2391 = vadd.f32 %v2387, %v2390
        %v2392 = vadd.f32 %v2388, %v2390
        %v2393 = vmax.f32 %v2391, 0.0
        %v2394 = vmax.f32 %v2392, 0.0
        %2395 = vst [vmem:[#allocation2 + $0x30] sm:$0xff] %v2393
        %2396 = vst [vmem:[#allocation2 + $0x38] sm:$0xff] %v2394
        %v2397 = vld [vmem:[%s247] sm:$0xff]
        %v2398 = vld [vmem:[%s247 + $0x8] sm:$0xff]
        %s2399 = sld [smem:[#allocation7 + $0x4]]
        %v2400 = vstv %s2399
        %v2401 = vmul.f32 %v2397, %v2400
        %v2402 = vmul.f32 %v2398, %v2400
        %v2403 = vadd.f32 %v2401, 0.0
        %v2404 = vadd.f32 %v2402, 0.0
        %v2405 = vld [vmem:[%s247] sm:$0xff]
        %v2406 = vld [vmem:[%s247 + $0x8] sm:$0xff]
        %v2407 = vld [vmem:[%s247 + $0x10] sm:$0xff]
        %s2408 = sld [smem:[#allocation7 + $0x84]]
        %v2409 = vstv %s2408
        %v2410 = vmul.f32 %v2405, %v2409
        %v2411 = vmul.f32 %v2406, %v2409
        %v2412 = vmul.f32 %v2407, %v2409
        %2416 = vrot.lane.b32.xlu0 %v2410, 127
        %v2417 = vpop.permute.xlu0 %2416
        %2418 = vrot.lane.b32.xlu0 %v2411, 127
        %v2419 = vpop.permute.xlu0 %2418
        %2420 = vrot.lane.b32.xlu0 %v2412, 127
        %v2421 = vpop.permute.xlu0 %2420
        %v2422 = vsel %vm312, %v2417, %v2419
        %v2423 = vsel %vm312, %v2419, %v2421
        %v2426 = vadd.f32 %v2403, %v2422
        %v2427 = vadd.f32 %v2404, %v2423
        %s2428 = sld [smem:[#allocation7 + $0x104]]
        %v2429 = vstv %s2428
        %v2430 = vmul.f32 %v2405, %v2429
        %v2431 = vmul.f32 %v2406, %v2429
        %v2432 = vmul.f32 %v2407, %v2429
        %2436 = vrot.lane.b32.xlu0 %v2430, 126
        %v2437 = vpop.permute.xlu0 %2436
        %2438 = vrot.lane.b32.xlu0 %v2431, 126
        %v2439 = vpop.permute.xlu0 %2438
        %2440 = vrot.lane.b32.xlu0 %v2432, 126
        %v2441 = vpop.permute.xlu0 %2440
        %v2442 = vsel %vm333, %v2437, %v2439
        %v2443 = vsel %vm333, %v2439, %v2441
        %v2446 = vadd.f32 %v2426, %v2442
        %v2447 = vadd.f32 %v2427, %v2443
        %s2448 = sld [smem:[#allocation7 + $0x184]]
        %v2449 = vstv %s2448
        %v2450 = vmul.f32 %v2405, %v2449
        %v2451 = vmul.f32 %v2406, %v2449
        %v2452 = vmul.f32 %v2407, %v2449
        %2456 = vrot.lane.b32.xlu0 %v2450, 113
        %v2457 = vpop.permute.xlu0 %2456
        %2458 = vrot.lane.b32.xlu0 %v2451, 113
        %v2459 = vpop.permute.xlu0 %2458
        %2460 = vrot.lane.b32.xlu0 %v2452, 113
        %v2461 = vpop.permute.xlu0 %2460
        %v2462 = vsel %vm354, %v2457, %v2459
        %v2463 = vsel %vm354, %v2459, %v2461
        %v2466 = vadd.f32 %v2446, %v2462
        %v2467 = vadd.f32 %v2447, %v2463
        %s2468 = sld [smem:[#allocation7 + $0x204]]
        %v2469 = vstv %s2468
        %v2470 = vmul.f32 %v2405, %v2469
        %v2471 = vmul.f32 %v2406, %v2469
        %v2472 = vmul.f32 %v2407, %v2469
        %2476 = vrot.lane.b32.xlu0 %v2470, 112
        %v2477 = vpop.permute.xlu0 %2476
        %2478 = vrot.lane.b32.xlu0 %v2471, 112
        %v2479 = vpop.permute.xlu0 %2478
        %2480 = vrot.lane.b32.xlu0 %v2472, 112
        %v2481 = vpop.permute.xlu0 %2480
        %v2482 = vsel %vm375, %v2477, %v2479
        %v2483 = vsel %vm375, %v2479, %v2481
        %v2486 = vadd.f32 %v2466, %v2482
        %v2487 = vadd.f32 %v2467, %v2483
        %s2488 = sld [smem:[#allocation7 + $0x284]]
        %v2489 = vstv %s2488
        %v2490 = vmul.f32 %v2405, %v2489
        %v2491 = vmul.f32 %v2406, %v2489
        %v2492 = vmul.f32 %v2407, %v2489
        %2496 = vrot.lane.b32.xlu0 %v2490, 111
        %v2497 = vpop.permute.xlu0 %2496
        %2498 = vrot.lane.b32.xlu0 %v2491, 111
        %v2499 = vpop.permute.xlu0 %2498
        %2500 = vrot.lane.b32.xlu0 %v2492, 111
        %v2501 = vpop.permute.xlu0 %2500
        %v2502 = vsel %vm396, %v2497, %v2499
        %v2503 = vsel %vm396, %v2499, %v2501
        %v2506 = vadd.f32 %v2486, %v2502
        %v2507 = vadd.f32 %v2487, %v2503
        %s2508 = sld [smem:[#allocation7 + $0x304]]
        %v2509 = vstv %s2508
        %v2510 = vmul.f32 %v2405, %v2509
        %v2511 = vmul.f32 %v2406, %v2509
        %v2512 = vmul.f32 %v2407, %v2509
        %2516 = vrot.lane.b32.xlu0 %v2510, 98
        %v2517 = vpop.permute.xlu0 %2516
        %2518 = vrot.lane.b32.xlu0 %v2511, 98
        %v2519 = vpop.permute.xlu0 %2518
        %2520 = vrot.lane.b32.xlu0 %v2512, 98
        %v2521 = vpop.permute.xlu0 %2520
        %v2522 = vsel %vm417, %v2517, %v2519
        %v2523 = vsel %vm417, %v2519, %v2521
        %v2526 = vadd.f32 %v2506, %v2522
        %v2527 = vadd.f32 %v2507, %v2523
        %s2528 = sld [smem:[#allocation7 + $0x384]]
        %v2529 = vstv %s2528
        %v2530 = vmul.f32 %v2405, %v2529
        %v2531 = vmul.f32 %v2406, %v2529
        %v2532 = vmul.f32 %v2407, %v2529
        %2536 = vrot.lane.b32.xlu0 %v2530, 97
        %v2537 = vpop.permute.xlu0 %2536
        %2538 = vrot.lane.b32.xlu0 %v2531, 97
        %v2539 = vpop.permute.xlu0 %2538
        %2540 = vrot.lane.b32.xlu0 %v2532, 97
        %v2541 = vpop.permute.xlu0 %2540
        %v2542 = vsel %vm438, %v2537, %v2539
        %v2543 = vsel %vm438, %v2539, %v2541
        %v2546 = vadd.f32 %v2526, %v2542
        %v2547 = vadd.f32 %v2527, %v2543
        %s2548 = sld [smem:[#allocation7 + $0x404]]
        %v2549 = vstv %s2548
        %v2550 = vmul.f32 %v2405, %v2549
        %v2551 = vmul.f32 %v2406, %v2549
        %v2552 = vmul.f32 %v2407, %v2549
        %2556 = vrot.lane.b32.xlu0 %v2550, 96
        %v2557 = vpop.permute.xlu0 %2556
        %2558 = vrot.lane.b32.xlu0 %v2551, 96
        %v2559 = vpop.permute.xlu0 %2558
        %2560 = vrot.lane.b32.xlu0 %v2552, 96
        %v2561 = vpop.permute.xlu0 %2560
        %v2562 = vsel %vm459, %v2557, %v2559
        %v2563 = vsel %vm459, %v2559, %v2561
        %v2566 = vadd.f32 %v2546, %v2562
        %v2567 = vadd.f32 %v2547, %v2563
        %v2568 = vld [vmem:[%s466] sm:$0xff]
        %v2569 = vld [vmem:[%s466 + $0x8] sm:$0xff]
        %s2570 = sld [smem:[#allocation7 + $0x484]]
        %v2571 = vstv %s2570
        %v2572 = vmul.f32 %v2568, %v2571
        %v2573 = vmul.f32 %v2569, %v2571
        %v2574 = vadd.f32 %v2572, 0.0
        %v2575 = vadd.f32 %v2573, 0.0
        %v2576 = vld [vmem:[%s466] sm:$0xff]
        %v2577 = vld [vmem:[%s466 + $0x8] sm:$0xff]
        %v2578 = vld [vmem:[%s466 + $0x10] sm:$0xff]
        %s2579 = sld [smem:[#allocation7 + $0x504]]
        %v2580 = vstv %s2579
        %v2581 = vmul.f32 %v2576, %v2580
        %v2582 = vmul.f32 %v2577, %v2580
        %v2583 = vmul.f32 %v2578, %v2580
        %2587 = vrot.lane.b32.xlu0 %v2581, 127
        %v2588 = vpop.permute.xlu0 %2587
        %2589 = vrot.lane.b32.xlu0 %v2582, 127
        %v2590 = vpop.permute.xlu0 %2589
        %2591 = vrot.lane.b32.xlu0 %v2583, 127
        %v2592 = vpop.permute.xlu0 %2591
        %v2593 = vsel %vm312, %v2588, %v2590
        %v2594 = vsel %vm312, %v2590, %v2592
        %v2597 = vadd.f32 %v2574, %v2593
        %v2598 = vadd.f32 %v2575, %v2594
        %s2599 = sld [smem:[#allocation7 + $0x584]]
        %v2600 = vstv %s2599
        %v2601 = vmul.f32 %v2576, %v2600
        %v2602 = vmul.f32 %v2577, %v2600
        %v2603 = vmul.f32 %v2578, %v2600
        %2607 = vrot.lane.b32.xlu0 %v2601, 126
        %v2608 = vpop.permute.xlu0 %2607
        %2609 = vrot.lane.b32.xlu0 %v2602, 126
        %v2610 = vpop.permute.xlu0 %2609
        %2611 = vrot.lane.b32.xlu0 %v2603, 126
        %v2612 = vpop.permute.xlu0 %2611
        %v2613 = vsel %vm333, %v2608, %v2610
        %v2614 = vsel %vm333, %v2610, %v2612
        %v2617 = vadd.f32 %v2597, %v2613
        %v2618 = vadd.f32 %v2598, %v2614
        %s2619 = sld [smem:[#allocation7 + $0x604]]
        %v2620 = vstv %s2619
        %v2621 = vmul.f32 %v2576, %v2620
        %v2622 = vmul.f32 %v2577, %v2620
        %v2623 = vmul.f32 %v2578, %v2620
        %2627 = vrot.lane.b32.xlu0 %v2621, 113
        %v2628 = vpop.permute.xlu0 %2627
        %2629 = vrot.lane.b32.xlu0 %v2622, 113
        %v2630 = vpop.permute.xlu0 %2629
        %2631 = vrot.lane.b32.xlu0 %v2623, 113
        %v2632 = vpop.permute.xlu0 %2631
        %v2633 = vsel %vm354, %v2628, %v2630
        %v2634 = vsel %vm354, %v2630, %v2632
        %v2637 = vadd.f32 %v2617, %v2633
        %v2638 = vadd.f32 %v2618, %v2634
        %s2639 = sld [smem:[#allocation7 + $0x684]]
        %v2640 = vstv %s2639
        %v2641 = vmul.f32 %v2576, %v2640
        %v2642 = vmul.f32 %v2577, %v2640
        %v2643 = vmul.f32 %v2578, %v2640
        %2647 = vrot.lane.b32.xlu0 %v2641, 112
        %v2648 = vpop.permute.xlu0 %2647
        %2649 = vrot.lane.b32.xlu0 %v2642, 112
        %v2650 = vpop.permute.xlu0 %2649
        %2651 = vrot.lane.b32.xlu0 %v2643, 112
        %v2652 = vpop.permute.xlu0 %2651
        %v2653 = vsel %vm375, %v2648, %v2650
        %v2654 = vsel %vm375, %v2650, %v2652
        %v2657 = vadd.f32 %v2637, %v2653
        %v2658 = vadd.f32 %v2638, %v2654
        %s2659 = sld [smem:[#allocation7 + $0x704]]
        %v2660 = vstv %s2659
        %v2661 = vmul.f32 %v2576, %v2660
        %v2662 = vmul.f32 %v2577, %v2660
        %v2663 = vmul.f32 %v2578, %v2660
        %2667 = vrot.lane.b32.xlu0 %v2661, 111
        %v2668 = vpop.permute.xlu0 %2667
        %2669 = vrot.lane.b32.xlu0 %v2662, 111
        %v2670 = vpop.permute.xlu0 %2669
        %2671 = vrot.lane.b32.xlu0 %v2663, 111
        %v2672 = vpop.permute.xlu0 %2671
        %v2673 = vsel %vm396, %v2668, %v2670
        %v2674 = vsel %vm396, %v2670, %v2672
        %v2677 = vadd.f32 %v2657, %v2673
        %v2678 = vadd.f32 %v2658, %v2674
        %s2679 = sld [smem:[#allocation7 + $0x784]]
        %v2680 = vstv %s2679
        %v2681 = vmul.f32 %v2576, %v2680
        %v2682 = vmul.f32 %v2577, %v2680
        %v2683 = vmul.f32 %v2578, %v2680
        %2687 = vrot.lane.b32.xlu0 %v2681, 98
        %v2688 = vpop.permute.xlu0 %2687
        %2689 = vrot.lane.b32.xlu0 %v2682, 98
        %v2690 = vpop.permute.xlu0 %2689
        %2691 = vrot.lane.b32.xlu0 %v2683, 98
        %v2692 = vpop.permute.xlu0 %2691
        %v2693 = vsel %vm417, %v2688, %v2690
        %v2694 = vsel %vm417, %v2690, %v2692
        %v2697 = vadd.f32 %v2677, %v2693
        %v2698 = vadd.f32 %v2678, %v2694
        %s2699 = sld [smem:[#allocation7 + $0x804]]
        %v2700 = vstv %s2699
        %v2701 = vmul.f32 %v2576, %v2700
        %v2702 = vmul.f32 %v2577, %v2700
        %v2703 = vmul.f32 %v2578, %v2700
        %2707 = vrot.lane.b32.xlu0 %v2701, 97
        %v2708 = vpop.permute.xlu0 %2707
        %2709 = vrot.lane.b32.xlu0 %v2702, 97
        %v2710 = vpop.permute.xlu0 %2709
        %2711 = vrot.lane.b32.xlu0 %v2703, 97
        %v2712 = vpop.permute.xlu0 %2711
        %v2713 = vsel %vm438, %v2708, %v2710
        %v2714 = vsel %vm438, %v2710, %v2712
        %v2717 = vadd.f32 %v2697, %v2713
        %v2718 = vadd.f32 %v2698, %v2714
        %s2719 = sld [smem:[#allocation7 + $0x884]]
        %v2720 = vstv %s2719
        %v2721 = vmul.f32 %v2576, %v2720
        %v2722 = vmul.f32 %v2577, %v2720
        %v2723 = vmul.f32 %v2578, %v2720
        %2727 = vrot.lane.b32.xlu0 %v2721, 96
        %v2728 = vpop.permute.xlu0 %2727
        %2729 = vrot.lane.b32.xlu0 %v2722, 96
        %v2730 = vpop.permute.xlu0 %2729
        %2731 = vrot.lane.b32.xlu0 %v2723, 96
        %v2732 = vpop.permute.xlu0 %2731
        %v2733 = vsel %vm459, %v2728, %v2730
        %v2734 = vsel %vm459, %v2730, %v2732
        %v2737 = vadd.f32 %v2717, %v2733
        %v2738 = vadd.f32 %v2718, %v2734
        %v2739 = vld [vmem:[%s638] sm:$0xff]
        %v2740 = vld [vmem:[%s638 + $0x8] sm:$0xff]
        %s2741 = sld [smem:[#allocation7 + $0x904]]
        %v2742 = vstv %s2741
        %v2743 = vmul.f32 %v2739, %v2742
        %v2744 = vmul.f32 %v2740, %v2742
        %v2745 = vadd.f32 %v2743, 0.0
        %v2746 = vadd.f32 %v2744, 0.0
        %v2747 = vld [vmem:[%s638] sm:$0xff]
        %v2748 = vld [vmem:[%s638 + $0x8] sm:$0xff]
        %v2749 = vld [vmem:[%s638 + $0x10] sm:$0xff]
        %s2750 = sld [smem:[#allocation7 + $0x984]]
        %v2751 = vstv %s2750
        %v2752 = vmul.f32 %v2747, %v2751
        %v2753 = vmul.f32 %v2748, %v2751
        %v2754 = vmul.f32 %v2749, %v2751
        %2758 = vrot.lane.b32.xlu0 %v2752, 127
        %v2759 = vpop.permute.xlu0 %2758
        %2760 = vrot.lane.b32.xlu0 %v2753, 127
        %v2761 = vpop.permute.xlu0 %2760
        %2762 = vrot.lane.b32.xlu0 %v2754, 127
        %v2763 = vpop.permute.xlu0 %2762
        %v2764 = vsel %vm312, %v2759, %v2761
        %v2765 = vsel %vm312, %v2761, %v2763
        %v2768 = vadd.f32 %v2745, %v2764
        %v2769 = vadd.f32 %v2746, %v2765
        %s2770 = sld [smem:[#allocation7 + $0xa04]]
        %v2771 = vstv %s2770
        %v2772 = vmul.f32 %v2747, %v2771
        %v2773 = vmul.f32 %v2748, %v2771
        %v2774 = vmul.f32 %v2749, %v2771
        %2778 = vrot.lane.b32.xlu0 %v2772, 126
        %v2779 = vpop.permute.xlu0 %2778
        %2780 = vrot.lane.b32.xlu0 %v2773, 126
        %v2781 = vpop.permute.xlu0 %2780
        %2782 = vrot.lane.b32.xlu0 %v2774, 126
        %v2783 = vpop.permute.xlu0 %2782
        %v2784 = vsel %vm333, %v2779, %v2781
        %v2785 = vsel %vm333, %v2781, %v2783
        %v2788 = vadd.f32 %v2768, %v2784
        %v2789 = vadd.f32 %v2769, %v2785
        %s2790 = sld [smem:[#allocation7 + $0xa84]]
        %v2791 = vstv %s2790
        %v2792 = vmul.f32 %v2747, %v2791
        %v2793 = vmul.f32 %v2748, %v2791
        %v2794 = vmul.f32 %v2749, %v2791
        %2798 = vrot.lane.b32.xlu0 %v2792, 113
        %v2799 = vpop.permute.xlu0 %2798
        %2800 = vrot.lane.b32.xlu0 %v2793, 113
        %v2801 = vpop.permute.xlu0 %2800
        %2802 = vrot.lane.b32.xlu0 %v2794, 113
        %v2803 = vpop.permute.xlu0 %2802
        %v2804 = vsel %vm354, %v2799, %v2801
        %v2805 = vsel %vm354, %v2801, %v2803
        %v2808 = vadd.f32 %v2788, %v2804
        %v2809 = vadd.f32 %v2789, %v2805
        %s2810 = sld [smem:[#allocation7 + $0xb04]]
        %v2811 = vstv %s2810
        %v2812 = vmul.f32 %v2747, %v2811
        %v2813 = vmul.f32 %v2748, %v2811
        %v2814 = vmul.f32 %v2749, %v2811
        %2818 = vrot.lane.b32.xlu0 %v2812, 112
        %v2819 = vpop.permute.xlu0 %2818
        %2820 = vrot.lane.b32.xlu0 %v2813, 112
        %v2821 = vpop.permute.xlu0 %2820
        %2822 = vrot.lane.b32.xlu0 %v2814, 112
        %v2823 = vpop.permute.xlu0 %2822
        %v2824 = vsel %vm375, %v2819, %v2821
        %v2825 = vsel %vm375, %v2821, %v2823
        %v2828 = vadd.f32 %v2808, %v2824
        %v2829 = vadd.f32 %v2809, %v2825
        %s2830 = sld [smem:[#allocation7 + $0xb84]]
        %v2831 = vstv %s2830
        %v2832 = vmul.f32 %v2747, %v2831
        %v2833 = vmul.f32 %v2748, %v2831
        %v2834 = vmul.f32 %v2749, %v2831
        %2838 = vrot.lane.b32.xlu0 %v2832, 111
        %v2839 = vpop.permute.xlu0 %2838
        %2840 = vrot.lane.b32.xlu0 %v2833, 111
        %v2841 = vpop.permute.xlu0 %2840
        %2842 = vrot.lane.b32.xlu0 %v2834, 111
        %v2843 = vpop.permute.xlu0 %2842
        %v2844 = vsel %vm396, %v2839, %v2841
        %v2845 = vsel %vm396, %v2841, %v2843
        %v2848 = vadd.f32 %v2828, %v2844
        %v2849 = vadd.f32 %v2829, %v2845
        %s2850 = sld [smem:[#allocation7 + $0xc04]]
        %v2851 = vstv %s2850
        %v2852 = vmul.f32 %v2747, %v2851
        %v2853 = vmul.f32 %v2748, %v2851
        %v2854 = vmul.f32 %v2749, %v2851
        %2858 = vrot.lane.b32.xlu0 %v2852, 98
        %v2859 = vpop.permute.xlu0 %2858
        %2860 = vrot.lane.b32.xlu0 %v2853, 98
        %v2861 = vpop.permute.xlu0 %2860
        %2862 = vrot.lane.b32.xlu0 %v2854, 98
        %v2863 = vpop.permute.xlu0 %2862
        %v2864 = vsel %vm417, %v2859, %v2861
        %v2865 = vsel %vm417, %v2861, %v2863
        %v2868 = vadd.f32 %v2848, %v2864
        %v2869 = vadd.f32 %v2849, %v2865
        %s2870 = sld [smem:[#allocation7 + $0xc84]]
        %v2871 = vstv %s2870
        %v2872 = vmul.f32 %v2747, %v2871
        %v2873 = vmul.f32 %v2748, %v2871
        %v2874 = vmul.f32 %v2749, %v2871
        %2878 = vrot.lane.b32.xlu0 %v2872, 97
        %v2879 = vpop.permute.xlu0 %2878
        %2880 = vrot.lane.b32.xlu0 %v2873, 97
        %v2881 = vpop.permute.xlu0 %2880
        %2882 = vrot.lane.b32.xlu0 %v2874, 97
        %v2883 = vpop.permute.xlu0 %2882
        %v2884 = vsel %vm438, %v2879, %v2881
        %v2885 = vsel %vm438, %v2881, %v2883
        %v2888 = vadd.f32 %v2868, %v2884
        %v2889 = vadd.f32 %v2869, %v2885
        %s2890 = sld [smem:[#allocation7 + $0xd04]]
        %v2891 = vstv %s2890
        %v2892 = vmul.f32 %v2747, %v2891
        %v2893 = vmul.f32 %v2748, %v2891
        %v2894 = vmul.f32 %v2749, %v2891
        %2898 = vrot.lane.b32.xlu0 %v2892, 96
        %v2899 = vpop.permute.xlu0 %2898
        %2900 = vrot.lane.b32.xlu0 %v2893, 96
        %v2901 = vpop.permute.xlu0 %2900
        %2902 = vrot.lane.b32.xlu0 %v2894, 96
        %v2903 = vpop.permute.xlu0 %2902
        %v2904 = vsel %vm459, %v2899, %v2901
        %v2905 = vsel %vm459, %v2901, %v2903
        %v2908 = vadd.f32 %v2888, %v2904
        %v2909 = vadd.f32 %v2889, %v2905
        %v2910 = vadd.f32 %v2566, %v2737
        %v2911 = vadd.f32 %v2567, %v2738
        %v2912 = vadd.f32 %v2910, %v2908
        %v2913 = vadd.f32 %v2911, %v2909
        %s2914 = sld [smem:[#allocation8 + $0x4]]
        %v2915 = vstv %s2914
        %v2916 = vadd.f32 %v2912, %v2915
        %v2917 = vadd.f32 %v2913, %v2915
        %v2918 = vmax.f32 %v2916, 0.0
        %v2919 = vmax.f32 %v2917, 0.0
        %2920 = vst [vmem:[#allocation2 + $0x40] sm:$0xff] %v2918
        %2921 = vst [vmem:[#allocation2 + $0x48] sm:$0xff] %v2919
        %v2922 = vld [vmem:[%s247] sm:$0xff]
        %v2923 = vld [vmem:[%s247 + $0x8] sm:$0xff]
        %s2924 = sld [smem:[#allocation7 + $0x5]]
        %v2925 = vstv %s2924
        %v2926 = vmul.f32 %v2922, %v2925
        %v2927 = vmul.f32 %v2923, %v2925
        %v2928 = vadd.f32 %v2926, 0.0
        %v2929 = vadd.f32 %v2927, 0.0
        %v2930 = vld [vmem:[%s247] sm:$0xff]
        %v2931 = vld [vmem:[%s247 + $0x8] sm:$0xff]
        %v2932 = vld [vmem:[%s247 + $0x10] sm:$0xff]
        %s2933 = sld [smem:[#allocation7 + $0x85]]
        %v2934 = vstv %s2933
        %v2935 = vmul.f32 %v2930, %v2934
        %v2936 = vmul.f32 %v2931, %v2934
        %v2937 = vmul.f32 %v2932, %v2934
        %2941 = vrot.lane.b32.xlu0 %v2935, 127
        %v2942 = vpop.permute.xlu0 %2941
        %2943 = vrot.lane.b32.xlu0 %v2936, 127
        %v2944 = vpop.permute.xlu0 %2943
        %2945 = vrot.lane.b32.xlu0 %v2937, 127
        %v2946 = vpop.permute.xlu0 %2945
        %v2947 = vsel %vm312, %v2942, %v2944
        %v2948 = vsel %vm312, %v2944, %v2946
        %v2951 = vadd.f32 %v2928, %v2947
        %v2952 = vadd.f32 %v2929, %v2948
        %s2953 = sld [smem:[#allocation7 + $0x105]]
        %v2954 = vstv %s2953
        %v2955 = vmul.f32 %v2930, %v2954
        %v2956 = vmul.f32 %v2931, %v2954
        %v2957 = vmul.f32 %v2932, %v2954
        %2961 = vrot.lane.b32.xlu0 %v2955, 126
        %v2962 = vpop.permute.xlu0 %2961
        %2963 = vrot.lane.b32.xlu0 %v2956, 126
        %v2964 = vpop.permute.xlu0 %2963
        %2965 = vrot.lane.b32.xlu0 %v2957, 126
        %v2966 = vpop.permute.xlu0 %2965
        %v2967 = vsel %vm333, %v2962, %v2964
        %v2968 = vsel %vm333, %v2964, %v2966
        %v2971 = vadd.f32 %v2951, %v2967
        %v2972 = vadd.f32 %v2952, %v2968
        %s2973 = sld [smem:[#allocation7 + $0x185]]
        %v2974 = vstv %s2973
        %v2975 = vmul.f32 %v2930, %v2974
        %v2976 = vmul.f32 %v2931, %v2974
        %v2977 = vmul.f32 %v2932, %v2974
        %2981 = vrot.lane.b32.xlu0 %v2975, 113
        %v2982 = vpop.permute.xlu0 %2981
        %2983 = vrot.lane.b32.xlu0 %v2976, 113
        %v2984 = vpop.permute.xlu0 %2983
        %2985 = vrot.lane.b32.xlu0 %v2977, 113
        %v2986 = vpop.permute.xlu0 %2985
        %v2987 = vsel %vm354, %v2982, %v2984
        %v2988 = vsel %vm354, %v2984, %v2986
        %v2991 = vadd.f32 %v2971, %v2987
        %v2992 = vadd.f32 %v2972, %v2988
        %s2993 = sld [smem:[#allocation7 + $0x205]]
        %v2994 = vstv %s2993
        %v2995 = vmul.f32 %v2930, %v2994
        %v2996 = vmul.f32 %v2931, %v2994
        %v2997 = vmul.f32 %v2932, %v2994
        %3001 = vrot.lane.b32.xlu0 %v2995, 112
        %v3002 = vpop.permute.xlu0 %3001
        %3003 = vrot.lane.b32.xlu0 %v2996, 112
        %v3004 = vpop.permute.xlu0 %3003
        %3005 = vrot.lane.b32.xlu0 %v2997, 112
        %v3006 = vpop.permute.xlu0 %3005
        %v3007 = vsel %vm375, %v3002, %v3004
        %v3008 = vsel %vm375, %v3004, %v3006
        %v3011 = vadd.f32 %v2991, %v3007
        %v3012 = vadd.f32 %v2992, %v3008
        %s3013 = sld [smem:[#allocation7 + $0x285]]
        %v3014 = vstv %s3013
        %v3015 = vmul.f32 %v2930, %v3014
        %v3016 = vmul.f32 %v2931, %v3014
        %v3017 = vmul.f32 %v2932, %v3014
        %3021 = vrot.lane.b32.xlu0 %v3015, 111
        %v3022 = vpop.permute.xlu0 %3021
        %3023 = vrot.lane.b32.xlu0 %v3016, 111
        %v3024 = vpop.permute.xlu0 %3023
        %3025 = vrot.lane.b32.xlu0 %v3017, 111
        %v3026 = vpop.permute.xlu0 %3025
        %v3027 = vsel %vm396, %v3022, %v3024
        %v3028 = vsel %vm396, %v3024, %v3026
        %v3031 = vadd.f32 %v3011, %v3027
        %v3032 = vadd.f32 %v3012, %v3028
        %s3033 = sld [smem:[#allocation7 + $0x305]]
        %v3034 = vstv %s3033
        %v3035 = vmul.f32 %v2930, %v3034
        %v3036 = vmul.f32 %v2931, %v3034
        %v3037 = vmul.f32 %v2932, %v3034
        %3041 = vrot.lane.b32.xlu0 %v3035, 98
        %v3042 = vpop.permute.xlu0 %3041
        %3043 = vrot.lane.b32.xlu0 %v3036, 98
        %v3044 = vpop.permute.xlu0 %3043
        %3045 = vrot.lane.b32.xlu0 %v3037, 98
        %v3046 = vpop.permute.xlu0 %3045
        %v3047 = vsel %vm417, %v3042, %v3044
        %v3048 = vsel %vm417, %v3044, %v3046
        %v3051 = vadd.f32 %v3031, %v3047
        %v3052 = vadd.f32 %v3032, %v3048
        %s3053 = sld [smem:[#allocation7 + $0x385]]
        %v3054 = vstv %s3053
        %v3055 = vmul.f32 %v2930, %v3054
        %v3056 = vmul.f32 %v2931, %v3054
        %v3057 = vmul.f32 %v2932, %v3054
        %3061 = vrot.lane.b32.xlu0 %v3055, 97
        %v3062 = vpop.permute.xlu0 %3061
        %3063 = vrot.lane.b32.xlu0 %v3056, 97
        %v3064 = vpop.permute.xlu0 %3063
        %3065 = vrot.lane.b32.xlu0 %v3057, 97
        %v3066 = vpop.permute.xlu0 %3065
        %v3067 = vsel %vm438, %v3062, %v3064
        %v3068 = vsel %vm438, %v3064, %v3066
        %v3071 = vadd.f32 %v3051, %v3067
        %v3072 = vadd.f32 %v3052, %v3068
        %s3073 = sld [smem:[#allocation7 + $0x405]]
        %v3074 = vstv %s3073
        %v3075 = vmul.f32 %v2930, %v3074
        %v3076 = vmul.f32 %v2931, %v3074
        %v3077 = vmul.f32 %v2932, %v3074
        %3081 = vrot.lane.b32.xlu0 %v3075, 96
        %v3082 = vpop.permute.xlu0 %3081
        %3083 = vrot.lane.b32.xlu0 %v3076, 96
        %v3084 = vpop.permute.xlu0 %3083
        %3085 = vrot.lane.b32.xlu0 %v3077, 96
        %v3086 = vpop.permute.xlu0 %3085
        %v3087 = vsel %vm459, %v3082, %v3084
        %v3088 = vsel %vm459, %v3084, %v3086
        %v3091 = vadd.f32 %v3071, %v3087
        %v3092 = vadd.f32 %v3072, %v3088
        %v3093 = vld [vmem:[%s466] sm:$0xff]
        %v3094 = vld [vmem:[%s466 + $0x8] sm:$0xff]
        %s3095 = sld [smem:[#allocation7 + $0x485]]
        %v3096 = vstv %s3095
        %v3097 = vmul.f32 %v3093, %v3096
        %v3098 = vmul.f32 %v3094, %v3096
        %v3099 = vadd.f32 %v3097, 0.0
        %v3100 = vadd.f32 %v3098, 0.0
        %v3101 = vld [vmem:[%s466] sm:$0xff]
        %v3102 = vld [vmem:[%s466 + $0x8] sm:$0xff]
        %v3103 = vld [vmem:[%s466 + $0x10] sm:$0xff]
        %s3104 = sld [smem:[#allocation7 + $0x505]]
        %v3105 = vstv %s3104
        %v3106 = vmul.f32 %v3101, %v3105
        %v3107 = vmul.f32 %v3102, %v3105
        %v3108 = vmul.f32 %v3103, %v3105
        %3112 = vrot.lane.b32.xlu0 %v3106, 127
        %v3113 = vpop.permute.xlu0 %3112
        %3114 = vrot.lane.b32.xlu0 %v3107, 127
        %v3115 = vpop.permute.xlu0 %3114
        %3116 = vrot.lane.b32.xlu0 %v3108, 127
        %v3117 = vpop.permute.xlu0 %3116
        %v3118 = vsel %vm312, %v3113, %v3115
        %v3119 = vsel %vm312, %v3115, %v3117
        %v3122 = vadd.f32 %v3099, %v3118
        %v3123 = vadd.f32 %v3100, %v3119
        %s3124 = sld [smem:[#allocation7 + $0x585]]
        %v3125 = vstv %s3124
        %v3126 = vmul.f32 %v3101, %v3125
        %v3127 = vmul.f32 %v3102, %v3125
        %v3128 = vmul.f32 %v3103, %v3125
        %3132 = vrot.lane.b32.xlu0 %v3126, 126
        %v3133 = vpop.permute.xlu0 %3132
        %3134 = vrot.lane.b32.xlu0 %v3127, 126
        %v3135 = vpop.permute.xlu0 %3134
        %3136 = vrot.lane.b32.xlu0 %v3128, 126
        %v3137 = vpop.permute.xlu0 %3136
        %v3138 = vsel %vm333, %v3133, %v3135
        %v3139 = vsel %vm333, %v3135, %v3137
        %v3142 = vadd.f32 %v3122, %v3138
        %v3143 = vadd.f32 %v3123, %v3139
        %s3144 = sld [smem:[#allocation7 + $0x605]]
        %v3145 = vstv %s3144
        %v3146 = vmul.f32 %v3101, %v3145
        %v3147 = vmul.f32 %v3102, %v3145
        %v3148 = vmul.f32 %v3103, %v3145
        %3152 = vrot.lane.b32.xlu0 %v3146, 113
        %v3153 = vpop.permute.xlu0 %3152
        %3154 = vrot.lane.b32.xlu0 %v3147, 113
        %v3155 = vpop.permute.xlu0 %3154
        %3156 = vrot.lane.b32.xlu0 %v3148, 113
        %v3157 = vpop.permute.xlu0 %3156
        %v3158 = vsel %vm354, %v3153, %v3155
        %v3159 = vsel %vm354, %v3155, %v3157
        %v3162 = vadd.f32 %v3142, %v3158
        %v3163 = vadd.f32 %v3143, %v3159
        %s3164 = sld [smem:[#allocation7 + $0x685]]
        %v3165 = vstv %s3164
        %v3166 = vmul.f32 %v3101, %v3165
        %v3167 = vmul.f32 %v3102, %v3165
        %v3168 = vmul.f32 %v3103, %v3165
        %3172 = vrot.lane.b32.xlu0 %v3166, 112
        %v3173 = vpop.permute.xlu0 %3172
        %3174 = vrot.lane.b32.xlu0 %v3167, 112
        %v3175 = vpop.permute.xlu0 %3174
        %3176 = vrot.lane.b32.xlu0 %v3168, 112
        %v3177 = vpop.permute.xlu0 %3176
        %v3178 = vsel %vm375, %v3173, %v3175
        %v3179 = vsel %vm375, %v3175, %v3177
        %v3182 = vadd.f32 %v3162, %v3178
        %v3183 = vadd.f32 %v3163, %v3179
        %s3184 = sld [smem:[#allocation7 + $0x705]]
        %v3185 = vstv %s3184
        %v3186 = vmul.f32 %v3101, %v3185
        %v3187 = vmul.f32 %v3102, %v3185
        %v3188 = vmul.f32 %v3103, %v3185
        %3192 = vrot.lane.b32.xlu0 %v3186, 111
        %v3193 = vpop.permute.xlu0 %3192
        %3194 = vrot.lane.b32.xlu0 %v3187, 111
        %v3195 = vpop.permute.xlu0 %3194
        %3196 = vrot.lane.b32.xlu0 %v3188, 111
        %v3197 = vpop.permute.xlu0 %3196
        %v3198 = vsel %vm396, %v3193, %v3195
        %v3199 = vsel %vm396, %v3195, %v3197
        %v3202 = vadd.f32 %v3182, %v3198
        %v3203 = vadd.f32 %v3183, %v3199
        %s3204 = sld [smem:[#allocation7 + $0x785]]
        %v3205 = vstv %s3204
        %v3206 = vmul.f32 %v3101, %v3205
        %v3207 = vmul.f32 %v3102, %v3205
        %v3208 = vmul.f32 %v3103, %v3205
        %3212 = vrot.lane.b32.xlu0 %v3206, 98
        %v3213 = vpop.permute.xlu0 %3212
        %3214 = vrot.lane.b32.xlu0 %v3207, 98
        %v3215 = vpop.permute.xlu0 %3214
        %3216 = vrot.lane.b32.xlu0 %v3208, 98
        %v3217 = vpop.permute.xlu0 %3216
        %v3218 = vsel %vm417, %v3213, %v3215
        %v3219 = vsel %vm417, %v3215, %v3217
        %v3222 = vadd.f32 %v3202, %v3218
        %v3223 = vadd.f32 %v3203, %v3219
        %s3224 = sld [smem:[#allocation7 + $0x805]]
        %v3225 = vstv %s3224
        %v3226 = vmul.f32 %v3101, %v3225
        %v3227 = vmul.f32 %v3102, %v3225
        %v3228 = vmul.f32 %v3103, %v3225
        %3232 = vrot.lane.b32.xlu0 %v3226, 97
        %v3233 = vpop.permute.xlu0 %3232
        %3234 = vrot.lane.b32.xlu0 %v3227, 97
        %v3235 = vpop.permute.xlu0 %3234
        %3236 = vrot.lane.b32.xlu0 %v3228, 97
        %v3237 = vpop.permute.xlu0 %3236
        %v3238 = vsel %vm438, %v3233, %v3235
        %v3239 = vsel %vm438, %v3235, %v3237
        %v3242 = vadd.f32 %v3222, %v3238
        %v3243 = vadd.f32 %v3223, %v3239
        %s3244 = sld [smem:[#allocation7 + $0x885]]
        %v3245 = vstv %s3244
        %v3246 = vmul.f32 %v3101, %v3245
        %v3247 = vmul.f32 %v3102, %v3245
        %v3248 = vmul.f32 %v3103, %v3245
        %3252 = vrot.lane.b32.xlu0 %v3246, 96
        %v3253 = vpop.permute.xlu0 %3252
        %3254 = vrot.lane.b32.xlu0 %v3247, 96
        %v3255 = vpop.permute.xlu0 %3254
        %3256 = vrot.lane.b32.xlu0 %v3248, 96
        %v3257 = vpop.permute.xlu0 %3256
        %v3258 = vsel %vm459, %v3253, %v3255
        %v3259 = vsel %vm459, %v3255, %v3257
        %v3262 = vadd.f32 %v3242, %v3258
        %v3263 = vadd.f32 %v3243, %v3259
        %v3264 = vld [vmem:[%s638] sm:$0xff]
        %v3265 = vld [vmem:[%s638 + $0x8] sm:$0xff]
        %s3266 = sld [smem:[#allocation7 + $0x905]]
        %v3267 = vstv %s3266
        %v3268 = vmul.f32 %v3264, %v3267
        %v3269 = vmul.f32 %v3265, %v3267
        %v3270 = vadd.f32 %v3268, 0.0
        %v3271 = vadd.f32 %v3269, 0.0
        %v3272 = vld [vmem:[%s638] sm:$0xff]
        %v3273 = vld [vmem:[%s638 + $0x8] sm:$0xff]
        %v3274 = vld [vmem:[%s638 + $0x10] sm:$0xff]
        %s3275 = sld [smem:[#allocation7 + $0x985]]
        %v3276 = vstv %s3275
        %v3277 = vmul.f32 %v3272, %v3276
        %v3278 = vmul.f32 %v3273, %v3276
        %v3279 = vmul.f32 %v3274, %v3276
        %3283 = vrot.lane.b32.xlu0 %v3277, 127
        %v3284 = vpop.permute.xlu0 %3283
        %3285 = vrot.lane.b32.xlu0 %v3278, 127
        %v3286 = vpop.permute.xlu0 %3285
        %3287 = vrot.lane.b32.xlu0 %v3279, 127
        %v3288 = vpop.permute.xlu0 %3287
        %v3289 = vsel %vm312, %v3284, %v3286
        %v3290 = vsel %vm312, %v3286, %v3288
        %v3293 = vadd.f32 %v3270, %v3289
        %v3294 = vadd.f32 %v3271, %v3290
        %s3295 = sld [smem:[#allocation7 + $0xa05]]
        %v3296 = vstv %s3295
        %v3297 = vmul.f32 %v3272, %v3296
        %v3298 = vmul.f32 %v3273, %v3296
        %v3299 = vmul.f32 %v3274, %v3296
        %3303 = vrot.lane.b32.xlu0 %v3297, 126
        %v3304 = vpop.permute.xlu0 %3303
        %3305 = vrot.lane.b32.xlu0 %v3298, 126
        %v3306 = vpop.permute.xlu0 %3305
        %3307 = vrot.lane.b32.xlu0 %v3299, 126
        %v3308 = vpop.permute.xlu0 %3307
        %v3309 = vsel %vm333, %v3304, %v3306
        %v3310 = vsel %vm333, %v3306, %v3308
        %v3313 = vadd.f32 %v3293, %v3309
        %v3314 = vadd.f32 %v3294, %v3310
        %s3315 = sld [smem:[#allocation7 + $0xa85]]
        %v3316 = vstv %s3315
        %v3317 = vmul.f32 %v3272, %v3316
        %v3318 = vmul.f32 %v3273, %v3316
        %v3319 = vmul.f32 %v3274, %v3316
        %3323 = vrot.lane.b32.xlu0 %v3317, 113
        %v3324 = vpop.permute.xlu0 %3323
        %3325 = vrot.lane.b32.xlu0 %v3318, 113
        %v3326 = vpop.permute.xlu0 %3325
        %3327 = vrot.lane.b32.xlu0 %v3319, 113
        %v3328 = vpop.permute.xlu0 %3327
        %v3329 = vsel %vm354, %v3324, %v3326
        %v3330 = vsel %vm354, %v3326, %v3328
        %v3333 = vadd.f32 %v3313, %v3329
        %v3334 = vadd.f32 %v3314, %v3330
        %s3335 = sld [smem:[#allocation7 + $0xb05]]
        %v3336 = vstv %s3335
        %v3337 = vmul.f32 %v3272, %v3336
        %v3338 = vmul.f32 %v3273, %v3336
        %v3339 = vmul.f32 %v3274, %v3336
        %3343 = vrot.lane.b32.xlu0 %v3337, 112
        %v3344 = vpop.permute.xlu0 %3343
        %3345 = vrot.lane.b32.xlu0 %v3338, 112
        %v3346 = vpop.permute.xlu0 %3345
        %3347 = vrot.lane.b32.xlu0 %v3339, 112
        %v3348 = vpop.permute.xlu0 %3347
        %v3349 = vsel %vm375, %v3344, %v3346
        %v3350 = vsel %vm375, %v3346, %v3348
        %v3353 = vadd.f32 %v3333, %v3349
        %v3354 = vadd.f32 %v3334, %v3350
        %s3355 = sld [smem:[#allocation7 + $0xb85]]
        %v3356 = vstv %s3355
        %v3357 = vmul.f32 %v3272, %v3356
        %v3358 = vmul.f32 %v3273, %v3356
        %v3359 = vmul.f32 %v3274, %v3356
        %3363 = vrot.lane.b32.xlu0 %v3357, 111
        %v3364 = vpop.permute.xlu0 %3363
        %3365 = vrot.lane.b32.xlu0 %v3358, 111
        %v3366 = vpop.permute.xlu0 %3365
        %3367 = vrot.lane.b32.xlu0 %v3359, 111
        %v3368 = vpop.permute.xlu0 %3367
        %v3369 = vsel %vm396, %v3364, %v3366
        %v3370 = vsel %vm396, %v3366, %v3368
        %v3373 = vadd.f32 %v3353, %v3369
        %v3374 = vadd.f32 %v3354, %v3370
        %s3375 = sld [smem:[#allocation7 + $0xc05]]
        %v3376 = vstv %s3375
        %v3377 = vmul.f32 %v3272, %v3376
        %v3378 = vmul.f32 %v3273, %v3376
        %v3379 = vmul.f32 %v3274, %v3376
        %3383 = vrot.lane.b32.xlu0 %v3377, 98
        %v3384 = vpop.permute.xlu0 %3383
        %3385 = vrot.lane.b32.xlu0 %v3378, 98
        %v3386 = vpop.permute.xlu0 %3385
        %3387 = vrot.lane.b32.xlu0 %v3379, 98
        %v3388 = vpop.permute.xlu0 %3387
        %v3389 = vsel %vm417, %v3384, %v3386
        %v3390 = vsel %vm417, %v3386, %v3388
        %v3393 = vadd.f32 %v3373, %v3389
        %v3394 = vadd.f32 %v3374, %v3390
        %s3395 = sld [smem:[#allocation7 + $0xc85]]
        %v3396 = vstv %s3395
        %v3397 = vmul.f32 %v3272, %v3396
        %v3398 = vmul.f32 %v3273, %v3396
        %v3399 = vmul.f32 %v3274, %v3396
        %3403 = vrot.lane.b32.xlu0 %v3397, 97
        %v3404 = vpop.permute.xlu0 %3403
        %3405 = vrot.lane.b32.xlu0 %v3398, 97
        %v3406 = vpop.permute.xlu0 %3405
        %3407 = vrot.lane.b32.xlu0 %v3399, 97
        %v3408 = vpop.permute.xlu0 %3407
        %v3409 = vsel %vm438, %v3404, %v3406
        %v3410 = vsel %vm438, %v3406, %v3408
        %v3413 = vadd.f32 %v3393, %v3409
        %v3414 = vadd.f32 %v3394, %v3410
        %s3415 = sld [smem:[#allocation7 + $0xd05]]
        %v3416 = vstv %s3415
        %v3417 = vmul.f32 %v3272, %v3416
        %v3418 = vmul.f32 %v3273, %v3416
        %v3419 = vmul.f32 %v3274, %v3416
        %3423 = vrot.lane.b32.xlu0 %v3417, 96
        %v3424 = vpop.permute.xlu0 %3423
        %3425 = vrot.lane.b32.xlu0 %v3418, 96
        %v3426 = vpop.permute.xlu0 %3425
        %3427 = vrot.lane.b32.xlu0 %v3419, 96
        %v3428 = vpop.permute.xlu0 %3427
        %v3429 = vsel %vm459, %v3424, %v3426
        %v3430 = vsel %vm459, %v3426, %v3428
        %v3433 = vadd.f32 %v3413, %v3429
        %v3434 = vadd.f32 %v3414, %v3430
        %v3435 = vadd.f32 %v3091, %v3262
        %v3436 = vadd.f32 %v3092, %v3263
        %v3437 = vadd.f32 %v3435, %v3433
        %v3438 = vadd.f32 %v3436, %v3434
        %s3439 = sld [smem:[#allocation8 + $0x5]]
        %v3440 = vstv %s3439
        %v3441 = vadd.f32 %v3437, %v3440
        %v3442 = vadd.f32 %v3438, %v3440
        %v3443 = vmax.f32 %v3441, 0.0
        %v3444 = vmax.f32 %v3442, 0.0
        %3445 = vst [vmem:[#allocation2 + $0x50] sm:$0xff] %v3443
        %3446 = vst [vmem:[#allocation2 + $0x58] sm:$0xff] %v3444
        %v3447 = vld [vmem:[#allocation2] sm:$0xff]
        %v3448 = vld [vmem:[#allocation2 + $0x8] sm:$0xff]
        %v3449 = vld [vmem:[#allocation2 + $0x10] sm:$0xff]
        %v3450 = vld [vmem:[#allocation2 + $0x18] sm:$0xff]
        %v3451 = vld [vmem:[#allocation2 + $0x20] sm:$0xff]
        %v3452 = vld [vmem:[#allocation2 + $0x28] sm:$0xff]
        %v3453 = vld [vmem:[#allocation2 + $0x30] sm:$0xff]
        %v3454 = vld [vmem:[#allocation2 + $0x38] sm:$0xff]
        %v3455 = vld [vmem:[#allocation2 + $0x40] sm:$0xff]
        %v3456 = vld [vmem:[#allocation2 + $0x48] sm:$0xff]
        %v3457 = vld [vmem:[#allocation2 + $0x50] sm:$0xff]
        %v3458 = vld [vmem:[#allocation2 + $0x58] sm:$0xff]
        %v3459 = vld [vmem:[#allocation10] sm:$0xff]
        %v3460 = vld [vmem:[#allocation10 + $0x8] sm:$0xff]
        %v3461 = vld [vmem:[#allocation10 + $0x10] sm:$0xff]
        %v3462 = vld [vmem:[#allocation10 + $0x18] sm:$0xff]
        %v3463 = vld [vmem:[#allocation10 + $0x20] sm:$0xff]
        %v3464 = vld [vmem:[#allocation10 + $0x28] sm:$0xff]
        %v3465 = vld [vmem:[#allocation10 + $0x30] sm:$0xff]
        %v3466 = vld [vmem:[#allocation10 + $0x38] sm:$0xff]
        %v3467 = vld [vmem:[#allocation10 + $0x40] sm:$0xff]
        %v3468 = vld [vmem:[#allocation10 + $0x48] sm:$0xff]
        %v3469 = vld [vmem:[#allocation10 + $0x50] sm:$0xff]
        %v3470 = vld [vmem:[#allocation10 + $0x58] sm:$0xff]
        %v3471 = vld [vmem:[#allocation10 + $0x60] sm:$0xff]
        %v3472 = vld [vmem:[#allocation10 + $0x68] sm:$0xff]
        %v3473 = vld [vmem:[#allocation10 + $0x70] sm:$0xff]
        %v3474 = vld [vmem:[#allocation10 + $0x78] sm:$0xff]
        %v3475 = vld [vmem:[#allocation10 + $0x80] sm:$0xff]
        %v3476 = vld [vmem:[#allocation10 + $0x88] sm:$0xff]
        %v3477 = vld [vmem:[#allocation10 + $0x90] sm:$0xff]
        %v3478 = vld [vmem:[#allocation10 + $0x98] sm:$0xff]
        %v3479 = vld [vmem:[#allocation10 + $0xa0] sm:$0xff]
        %v3480 = vld [vmem:[#allocation10 + $0xa8] sm:$0xff]
        %v3481 = vld [vmem:[#allocation10 + $0xb0] sm:$0xff]
        %v3482 = vld [vmem:[#allocation10 + $0xb8] sm:$0xff]
        %v3483 = vld [vmem:[#allocation10 + $0xc0] sm:$0xff]
        %v3484 = vld [vmem:[#allocation10 + $0xc8] sm:$0xff]
        %v3485 = vld [vmem:[#allocation10 + $0xd0] sm:$0xff]
        %v3486 = vld [vmem:[#allocation10 + $0xd8] sm:$0xff]
        %v3487 = vld [vmem:[#allocation10 + $0xe0] sm:$0xff]
        %v3488 = vld [vmem:[#allocation10 + $0xe8] sm:$0xff]
        %v3489 = vld [vmem:[#allocation10 + $0xf0] sm:$0xff]
        %v3490 = vld [vmem:[#allocation10 + $0xf8] sm:$0xff]
        %v3491 = vld [vmem:[#allocation10 + $0x100] sm:$0xff]
        %v3492 = vld [vmem:[#allocation10 + $0x108] sm:$0xff]
        %v3493 = vld [vmem:[#allocation10 + $0x110] sm:$0xff]
        %v3494 = vld [vmem:[#allocation10 + $0x118] sm:$0xff]
        %v3495 = vld [vmem:[#allocation10 + $0x120] sm:$0xff]
        %v3496 = vld [vmem:[#allocation10 + $0x128] sm:$0xff]
        %v3497 = vld [vmem:[#allocation10 + $0x130] sm:$0xff]
        %v3498 = vld [vmem:[#allocation10 + $0x138] sm:$0xff]
        %v3499 = vld [vmem:[#allocation10 + $0x140] sm:$0xff]
        %v3500 = vld [vmem:[#allocation10 + $0x148] sm:$0xff]
        %v3501 = vld [vmem:[#allocation10 + $0x150] sm:$0xff]
        %v3502 = vld [vmem:[#allocation10 + $0x158] sm:$0xff]
        %v3503 = vld [vmem:[#allocation10 + $0x160] sm:$0xff]
        %v3504 = vld [vmem:[#allocation10 + $0x168] sm:$0xff]
        %v3505 = vld [vmem:[#allocation10 + $0x170] sm:$0xff]
        %v3506 = vld [vmem:[#allocation10 + $0x178] sm:$0xff]
        %v3507 = vld [vmem:[#allocation10 + $0x180] sm:$0xff]
        %v3508 = vld [vmem:[#allocation10 + $0x188] sm:$0xff]
        %v3509 = vld [vmem:[#allocation10 + $0x190] sm:$0xff]
        %v3510 = vld [vmem:[#allocation10 + $0x198] sm:$0xff]
        %v3511 = vld [vmem:[#allocation10 + $0x1a0] sm:$0xff]
        %v3512 = vld [vmem:[#allocation10 + $0x1a8] sm:$0xff]
        %v3513 = vld [vmem:[#allocation10 + $0x1b0] sm:$0xff]
        %v3514 = vld [vmem:[#allocation10 + $0x1b8] sm:$0xff]
        %v3515 = vld [vmem:[#allocation10 + $0x1c0] sm:$0xff]
        %v3516 = vld [vmem:[#allocation10 + $0x1c8] sm:$0xff]
        %v3517 = vld [vmem:[#allocation10 + $0x1d0] sm:$0xff]
        %v3518 = vld [vmem:[#allocation10 + $0x1d8] sm:$0xff]
        %v3519 = vld [vmem:[#allocation10 + $0x1e0] sm:$0xff]
        %v3520 = vld [vmem:[#allocation10 + $0x1e8] sm:$0xff]
        %v3521 = vld [vmem:[#allocation10 + $0x1f0] sm:$0xff]
        %v3522 = vld [vmem:[#allocation10 + $0x1f8] sm:$0xff]
        %v3523 = vld [vmem:[#allocation10 + $0x200] sm:$0xff]
        %v3524 = vld [vmem:[#allocation10 + $0x208] sm:$0xff]
        %v3525 = vld [vmem:[#allocation10 + $0x210] sm:$0xff]
        %v3526 = vld [vmem:[#allocation10 + $0x218] sm:$0xff]
        %v3527 = vld [vmem:[#allocation10 + $0x220] sm:$0xff]
        %v3528 = vld [vmem:[#allocation10 + $0x228] sm:$0xff]
        %v3529 = vld [vmem:[#allocation10 + $0x230] sm:$0xff]
        %v3530 = vld [vmem:[#allocation10 + $0x238] sm:$0xff]
        %v3531 = vld [vmem:[#allocation10 + $0x240] sm:$0xff]
        %v3532 = vld [vmem:[#allocation10 + $0x248] sm:$0xff]
        %v3533 = vld [vmem:[#allocation10 + $0x250] sm:$0xff]
        %v3534 = vld [vmem:[#allocation10 + $0x258] sm:$0xff]
        %v3535 = vld [vmem:[#allocation10 + $0x260] sm:$0xff]
        %v3536 = vld [vmem:[#allocation10 + $0x268] sm:$0xff]
        %v3537 = vld [vmem:[#allocation10 + $0x270] sm:$0xff]
        %v3538 = vld [vmem:[#allocation10 + $0x278] sm:$0xff]
        %v3539 = vld [vmem:[#allocation10 + $0x280] sm:$0xff]
        %v3540 = vld [vmem:[#allocation10 + $0x288] sm:$0xff]
        %v3541 = vld [vmem:[#allocation10 + $0x290] sm:$0xff]
        %v3542 = vld [vmem:[#allocation10 + $0x298] sm:$0xff]
        %v3543 = vld [vmem:[#allocation10 + $0x2a0] sm:$0xff]
        %v3544 = vld [vmem:[#allocation10 + $0x2a8] sm:$0xff]
        %v3545 = vld [vmem:[#allocation10 + $0x2b0] sm:$0xff]
        %v3546 = vld [vmem:[#allocation10 + $0x2b8] sm:$0xff]
        %v3547 = vld [vmem:[#allocation10 + $0x2c0] sm:$0xff]
        %v3548 = vld [vmem:[#allocation10 + $0x2c8] sm:$0xff]
        %v3549 = vld [vmem:[#allocation10 + $0x2d0] sm:$0xff]
        %v3550 = vld [vmem:[#allocation10 + $0x2d8] sm:$0xff]
        %v3551 = vld [vmem:[#allocation10 + $0x2e0] sm:$0xff]
        %v3552 = vld [vmem:[#allocation10 + $0x2e8] sm:$0xff]
        %v3553 = vld [vmem:[#allocation10 + $0x2f0] sm:$0xff]
        %v3554 = vld [vmem:[#allocation10 + $0x2f8] sm:$0xff]
        %v3555 = vld [vmem:[#allocation10 + $0x300] sm:$0xff]
        %v3556 = vld [vmem:[#allocation10 + $0x308] sm:$0xff]
        %v3557 = vld [vmem:[#allocation10 + $0x310] sm:$0xff]
        %v3558 = vld [vmem:[#allocation10 + $0x318] sm:$0xff]
        %v3559 = vld [vmem:[#allocation10 + $0x320] sm:$0xff]
        %v3560 = vld [vmem:[#allocation10 + $0x328] sm:$0xff]
        %v3561 = vld [vmem:[#allocation10 + $0x330] sm:$0xff]
        %v3562 = vld [vmem:[#allocation10 + $0x338] sm:$0xff]
        %v3563 = vld [vmem:[#allocation10 + $0x340] sm:$0xff]
        %v3564 = vld [vmem:[#allocation10 + $0x348] sm:$0xff]
        %v3565 = vld [vmem:[#allocation10 + $0x350] sm:$0xff]
        %v3566 = vld [vmem:[#allocation10 + $0x358] sm:$0xff]
        %v3567 = vld [vmem:[#allocation10 + $0x360] sm:$0xff]
        %v3568 = vld [vmem:[#allocation10 + $0x368] sm:$0xff]
        %v3569 = vld [vmem:[#allocation10 + $0x370] sm:$0xff]
        %v3570 = vld [vmem:[#allocation10 + $0x378] sm:$0xff]
        %v3571 = vld [vmem:[#allocation10 + $0x380] sm:$0xff]
        %v3572 = vld [vmem:[#allocation10 + $0x388] sm:$0xff]
        %v3573 = vld [vmem:[#allocation10 + $0x390] sm:$0xff]
        %v3574 = vld [vmem:[#allocation10 + $0x398] sm:$0xff]
        %v3575 = vld [vmem:[#allocation10 + $0x3a0] sm:$0xff]
        %v3576 = vld [vmem:[#allocation10 + $0x3a8] sm:$0xff]
        %v3577 = vld [vmem:[#allocation10 + $0x3b0] sm:$0xff]
        %v3578 = vld [vmem:[#allocation10 + $0x3b8] sm:$0xff]
        %v3579 = vld [vmem:[#allocation10 + $0x3c0] sm:$0xff]
        %v3580 = vld [vmem:[#allocation10 + $0x3c8] sm:$0xff]
        %v3581 = vld [vmem:[#allocation10 + $0x3d0] sm:$0xff]
        %v3582 = vld [vmem:[#allocation10 + $0x3d8] sm:$0xff]
        %v3583 = vld [vmem:[#allocation10 + $0x3e0] sm:$0xff]
        %v3584 = vld [vmem:[#allocation10 + $0x3e8] sm:$0xff]
        %v3585 = vld [vmem:[#allocation10 + $0x3f0] sm:$0xff]
        %v3586 = vld [vmem:[#allocation10 + $0x3f8] sm:$0xff]
        %v3587 = vld [vmem:[#allocation10 + $0x400] sm:$0xff]
        %v3588 = vld [vmem:[#allocation10 + $0x408] sm:$0xff]
        %v3589 = vld [vmem:[#allocation10 + $0x410] sm:$0xff]
        %v3590 = vld [vmem:[#allocation10 + $0x418] sm:$0xff]
        %v3591 = vld [vmem:[#allocation10 + $0x420] sm:$0xff]
        %v3592 = vld [vmem:[#allocation10 + $0x428] sm:$0xff]
        %v3593 = vld [vmem:[#allocation10 + $0x430] sm:$0xff]
        %v3594 = vld [vmem:[#allocation10 + $0x438] sm:$0xff]
        %v3595 = vld [vmem:[#allocation10 + $0x440] sm:$0xff]
        %v3596 = vld [vmem:[#allocation10 + $0x448] sm:$0xff]
        %v3597 = vld [vmem:[#allocation10 + $0x450] sm:$0xff]
        %v3598 = vld [vmem:[#allocation10 + $0x458] sm:$0xff]
        %v3599 = vld [vmem:[#allocation10 + $0x460] sm:$0xff]
        %v3600 = vld [vmem:[#allocation10 + $0x468] sm:$0xff]
        %v3601 = vld [vmem:[#allocation10 + $0x470] sm:$0xff]
        %v3602 = vld [vmem:[#allocation10 + $0x478] sm:$0xff]
        %v3603 = vld [vmem:[#allocation10 + $0x480] sm:$0xff]
        %v3604 = vld [vmem:[#allocation10 + $0x488] sm:$0xff]
        %v3605 = vld [vmem:[#allocation10 + $0x490] sm:$0xff]
        %v3606 = vld [vmem:[#allocation10 + $0x498] sm:$0xff]
        %v3607 = vld [vmem:[#allocation10 + $0x4a0] sm:$0xff]
        %v3608 = vld [vmem:[#allocation10 + $0x4a8] sm:$0xff]
        %v3609 = vld [vmem:[#allocation10 + $0x4b0] sm:$0xff]
        %v3610 = vld [vmem:[#allocation10 + $0x4b8] sm:$0xff]
        %v3611 = vld [vmem:[#allocation10 + $0x4c0] sm:$0xff]
        %v3612 = vld [vmem:[#allocation10 + $0x4c8] sm:$0xff]
        %v3613 = vld [vmem:[#allocation10 + $0x4d0] sm:$0xff]
        %v3614 = vld [vmem:[#allocation10 + $0x4d8] sm:$0xff]
        %v3615 = vld [vmem:[#allocation10 + $0x4e0] sm:$0xff]
        %v3616 = vld [vmem:[#allocation10 + $0x4e8] sm:$0xff]
        %v3617 = vld [vmem:[#allocation10 + $0x4f0] sm:$0xff]
        %v3618 = vld [vmem:[#allocation10 + $0x4f8] sm:$0xff]
        %v3619 = vld [vmem:[#allocation10 + $0x500] sm:$0xff]
        %v3620 = vld [vmem:[#allocation10 + $0x508] sm:$0xff]
        %v3621 = vld [vmem:[#allocation10 + $0x510] sm:$0xff]
        %v3622 = vld [vmem:[#allocation10 + $0x518] sm:$0xff]
        %v3623 = vld [vmem:[#allocation10 + $0x520] sm:$0xff]
        %v3624 = vld [vmem:[#allocation10 + $0x528] sm:$0xff]
        %v3625 = vld [vmem:[#allocation10 + $0x530] sm:$0xff]
        %v3626 = vld [vmem:[#allocation10 + $0x538] sm:$0xff]
        %v3627 = vld [vmem:[#allocation10 + $0x540] sm:$0xff]
        %v3628 = vld [vmem:[#allocation10 + $0x548] sm:$0xff]
        %v3629 = vld [vmem:[#allocation10 + $0x550] sm:$0xff]
        %v3630 = vld [vmem:[#allocation10 + $0x558] sm:$0xff]
        %v3631 = vld [vmem:[#allocation10 + $0x560] sm:$0xff]
        %v3632 = vld [vmem:[#allocation10 + $0x568] sm:$0xff]
        %v3633 = vld [vmem:[#allocation10 + $0x570] sm:$0xff]
        %v3634 = vld [vmem:[#allocation10 + $0x578] sm:$0xff]
        %v3635 = vld [vmem:[#allocation10 + $0x580] sm:$0xff]
        %v3636 = vld [vmem:[#allocation10 + $0x588] sm:$0xff]
        %v3637 = vld [vmem:[#allocation10 + $0x590] sm:$0xff]
        %v3638 = vld [vmem:[#allocation10 + $0x598] sm:$0xff]
        %v3639 = vld [vmem:[#allocation10 + $0x5a0] sm:$0xff]
        %v3640 = vld [vmem:[#allocation10 + $0x5a8] sm:$0xff]
        %v3641 = vld [vmem:[#allocation10 + $0x5b0] sm:$0xff]
        %v3642 = vld [vmem:[#allocation10 + $0x5b8] sm:$0xff]
        %v3643 = vld [vmem:[#allocation10 + $0x5c0] sm:$0xff]
        %v3644 = vld [vmem:[#allocation10 + $0x5c8] sm:$0xff]
        %v3645 = vld [vmem:[#allocation10 + $0x5d0] sm:$0xff]
        %v3646 = vld [vmem:[#allocation10 + $0x5d8] sm:$0xff]
        %v3647 = vld [vmem:[#allocation10 + $0x5e0] sm:$0xff]
        %v3648 = vld [vmem:[#allocation10 + $0x5e8] sm:$0xff]
        %v3649 = vld [vmem:[#allocation10 + $0x5f0] sm:$0xff]
        %v3650 = vld [vmem:[#allocation10 + $0x5f8] sm:$0xff]
        %v3651 = vld [vmem:[%s4] sm:$0x1]
        %v3653 = vlaneseq
        %v3654 = vshrl.u32 %v3653, 7
        %v3655 = vsub.s32 0, %v3654
        %v3656 = vrot.slane %v3651, %v3655
        %3658 = vmatprep.subr.mxu0 0.0
        %3659 = vmatpush1.msra.mxu0 %v3474
        %3660 = vmatprep.subr.mxu0 0.0
        %3661 = vmatpush1.msra.mxu0 %v3473
        %3662 = vmatprep.subr.mxu0 0.0
        %3663 = vmatpush1.msra.mxu0 %v3472
        %3664 = vmatprep.subr.mxu0 0.0
        %3665 = vmatpush1.msra.mxu0 %v3471
        %3666 = vmatprep.subr.mxu0 0.0
        %3667 = vmatpush1.msra.mxu0 %v3470
        %3668 = vmatprep.subr.mxu0 0.0
        %3669 = vmatpush1.msra.mxu0 %v3469
        %3670 = vmatprep.subr.mxu0 0.0
        %3671 = vmatpush1.msra.mxu0 %v3468
        %3672 = vmatprep.subr.mxu0 0.0
        %3673 = vmatpush1.msra.mxu0 %v3467
        %3674 = vmatprep.subr.mxu0 0.0
        %3675 = vmatpush1.msra.mxu0 %v3466
        %3676 = vmatprep.subr.mxu0 0.0
        %3677 = vmatpush1.msra.mxu0 %v3465
        %3678 = vmatprep.subr.mxu0 0.0
        %3679 = vmatpush1.msra.mxu0 %v3464
        %3680 = vmatprep.subr.mxu0 0.0
        %3681 = vmatpush1.msra.mxu0 %v3463
        %3682 = vmatprep.subr.mxu0 0.0
        %3683 = vmatpush1.msra.mxu0 %v3462
        %3684 = vmatprep.subr.mxu0 0.0
        %3685 = vmatpush1.msra.mxu0 %v3461
        %3686 = vmatprep.subr.mxu0 0.0
        %3687 = vmatpush1.msra.mxu0 %v3460
        %3688 = vmatprep.subr.mxu0 0.0
        %3689 = vmatpush1.msra.mxu0 %v3459
        %3690 = vmatprep.subr.mxu0 0.0
        %3691 = vmatpush2.msra.mxu0 %v3490
        %3692 = vmatprep.subr.mxu0 0.0
        %3693 = vmatpush2.msra.mxu0 %v3489
        %3694 = vmatprep.subr.mxu0 0.0
        %3695 = vmatpush2.msra.mxu0 %v3488
        %3696 = vmatprep.subr.mxu0 0.0
        %3697 = vmatpush2.msra.mxu0 %v3487
        %3698 = vmatprep.subr.mxu0 0.0
        %3699 = vmatpush2.msra.mxu0 %v3486
        %3700 = vmatprep.subr.mxu0 0.0
        %3701 = vmatpush2.msra.mxu0 %v3485
        %3702 = vmatprep.subr.mxu0 0.0
        %3703 = vmatpush2.msra.mxu0 %v3484
        %3704 = vmatprep.subr.mxu0 0.0
        %3705 = vmatpush2.msra.mxu0 %v3483
        %3706 = vmatprep.subr.mxu0 0.0
        %3707 = vmatpush2.msra.mxu0 %v3482
        %3708 = vmatprep.subr.mxu0 0.0
        %3709 = vmatpush2.msra.mxu0 %v3481
        %3710 = vmatprep.subr.mxu0 0.0
        %3711 = vmatpush2.msra.mxu0 %v3480
        %3712 = vmatprep.subr.mxu0 0.0
        %3713 = vmatpush2.msra.mxu0 %v3479
        %3714 = vmatprep.subr.mxu0 0.0
        %3715 = vmatpush2.msra.mxu0 %v3478
        %3716 = vmatprep.subr.mxu0 0.0
        %3717 = vmatpush2.msra.mxu0 %v3477
        %3718 = vmatprep.subr.mxu0 0.0
        %3719 = vmatpush2.msra.mxu0 %v3476
        %3720 = vmatprep.subr.mxu0 0.0
        %3721 = vmatpush2.msra.mxu0 %v3475
        %3722 = vmatprep.mubr.f32.mxu0 %v3448
        %3723 = vmatmul.mubr.f32.gmra.mxu0 %v3447
        %v3724 = vpop.f32.mrf.mxu0
        %v3725 = vadd.f32 %v3656, %v3724
        %v3726 = vpop.f32.mrf.mxu0
        %3727 = vdwg.mxu0
        %3728 = vmatprep.subr.mxu0 0.0
        %3729 = vmatpush1.msra.mxu0 %v3506
        %3730 = vmatprep.subr.mxu0 0.0
        %3731 = vmatpush1.msra.mxu0 %v3505
        %3732 = vmatprep.subr.mxu0 0.0
        %3733 = vmatpush1.msra.mxu0 %v3504
        %3734 = vmatprep.subr.mxu0 0.0
        %3735 = vmatpush1.msra.mxu0 %v3503
        %3736 = vmatprep.subr.mxu0 0.0
        %3737 = vmatpush1.msra.mxu0 %v3502
        %3738 = vmatprep.subr.mxu0 0.0
        %3739 = vmatpush1.msra.mxu0 %v3501
        %3740 = vmatprep.subr.mxu0 0.0
        %3741 = vmatpush1.msra.mxu0 %v3500
        %3742 = vmatprep.subr.mxu0 0.0
        %3743 = vmatpush1.msra.mxu0 %v3499
        %3744 = vmatprep.subr.mxu0 0.0
        %3745 = vmatpush1.msra.mxu0 %v3498
        %3746 = vmatprep.subr.mxu0 0.0
        %3747 = vmatpush1.msra.mxu0 %v3497
        %3748 = vmatprep.subr.mxu0 0.0
        %3749 = vmatpush1.msra.mxu0 %v3496
        %3750 = vmatprep.subr.mxu0 0.0
        %3751 = vmatpush1.msra.mxu0 %v3495
        %3752 = vmatprep.subr.mxu0 0.0
        %3753 = vmatpush1.msra.mxu0 %v3494
        %3754 = vmatprep.subr.mxu0 0.0
        %3755 = vmatpush1.msra.mxu0 %v3493
        %3756 = vmatprep.subr.mxu0 0.0
        %3757 = vmatpush1.msra.mxu0 %v3492
        %3758 = vmatprep.subr.mxu0 0.0
        %3759 = vmatpush1.msra.mxu0 %v3491
        %3760 = vmatprep.subr.mxu0 0.0
        %3761 = vmatpush2.msra.mxu0 %v3522
        %3762 = vmatprep.subr.mxu0 0.0
        %3763 = vmatpush2.msra.mxu0 %v3521
        %3764 = vmatprep.subr.mxu0 0.0
        %3765 = vmatpush2.msra.mxu0 %v3520
        %3766 = vmatprep.subr.mxu0 0.0
        %3767 = vmatpush2.msra.mxu0 %v3519
        %3768 = vmatprep.subr.mxu0 0.0
        %3769 = vmatpush2.msra.mxu0 %v3518
        %3770 = vmatprep.subr.mxu0 0.0
        %3771 = vmatpush2.msra.mxu0 %v3517
        %3772 = vmatprep.subr.mxu0 0.0
        %3773 = vmatpush2.msra.mxu0 %v3516
        %3774 = vmatprep.subr.mxu0 0.0
        %3775 = vmatpush2.msra.mxu0 %v3515
        %3776 = vmatprep.subr.mxu0 0.0
        %3777 = vmatpush2.msra.mxu0 %v3514
        %3778 = vmatprep.subr.mxu0 0.0
        %3779 = vmatpush2.msra.mxu0 %v3513
        %3780 = vmatprep.subr.mxu0 0.0
        %3781 = vmatpush2.msra.mxu0 %v3512
        %3782 = vmatprep.subr.mxu0 0.0
        %3783 = vmatpush2.msra.mxu0 %v3511
        %3784 = vmatprep.subr.mxu0 0.0
        %3785 = vmatpush2.msra.mxu0 %v3510
        %3786 = vmatprep.subr.mxu0 0.0
        %3787 = vmatpush2.msra.mxu0 %v3509
        %3788 = vmatprep.subr.mxu0 0.0
        %3789 = vmatpush2.msra.mxu0 %v3508
        %3790 = vmatprep.subr.mxu0 0.0
        %3791 = vmatpush2.msra.mxu0 %v3507
        %3792 = vmatprep.mubr.f32.mxu0 %v3450
        %3793 = vmatmul.mubr.f32.gmra.mxu0 %v3449
        %v3794 = vpop.f32.mrf.mxu0
        %v3795 = vadd.f32 %v3725, %v3794
        %v3796 = vpop.f32.mrf.mxu0
        %3797 = vdwg.mxu0
        %3798 = vmatprep.subr.mxu0 0.0
        %3799 = vmatpush1.msra.mxu0 %v3538
        %3800 = vmatprep.subr.mxu0 0.0
        %3801 = vmatpush1.msra.mxu0 %v3537
        %3802 = vmatprep.subr.mxu0 0.0
        %3803 = vmatpush1.msra.mxu0 %v3536
        %3804 = vmatprep.subr.mxu0 0.0
        %3805 = vmatpush1.msra.mxu0 %v3535
        %3806 = vmatprep.subr.mxu0 0.0
        %3807 = vmatpush1.msra.mxu0 %v3534
        %3808 = vmatprep.subr.mxu0 0.0
        %3809 = vmatpush1.msra.mxu0 %v3533
        %3810 = vmatprep.subr.mxu0 0.0
        %3811 = vmatpush1.msra.mxu0 %v3532
        %3812 = vmatprep.subr.mxu0 0.0
        %3813 = vmatpush1.msra.mxu0 %v3531
        %3814 = vmatprep.subr.mxu0 0.0
        %3815 = vmatpush1.msra.mxu0 %v3530
        %3816 = vmatprep.subr.mxu0 0.0
        %3817 = vmatpush1.msra.mxu0 %v3529
        %3818 = vmatprep.subr.mxu0 0.0
        %3819 = vmatpush1.msra.mxu0 %v3528
        %3820 = vmatprep.subr.mxu0 0.0
        %3821 = vmatpush1.msra.mxu0 %v3527
        %3822 = vmatprep.subr.mxu0 0.0
        %3823 = vmatpush1.msra.mxu0 %v3526
        %3824 = vmatprep.subr.mxu0 0.0
        %3825 = vmatpush1.msra.mxu0 %v3525
        %3826 = vmatprep.subr.mxu0 0.0
        %3827 = vmatpush1.msra.mxu0 %v3524
        %3828 = vmatprep.subr.mxu0 0.0
        %3829 = vmatpush1.msra.mxu0 %v3523
        %3830 = vmatprep.subr.mxu0 0.0
        %3831 = vmatpush2.msra.mxu0 %v3554
        %3832 = vmatprep.subr.mxu0 0.0
        %3833 = vmatpush2.msra.mxu0 %v3553
        %3834 = vmatprep.subr.mxu0 0.0
        %3835 = vmatpush2.msra.mxu0 %v3552
        %3836 = vmatprep.subr.mxu0 0.0
        %3837 = vmatpush2.msra.mxu0 %v3551
        %3838 = vmatprep.subr.mxu0 0.0
        %3839 = vmatpush2.msra.mxu0 %v3550
        %3840 = vmatprep.subr.mxu0 0.0
        %3841 = vmatpush2.msra.mxu0 %v3549
        %3842 = vmatprep.subr.mxu0 0.0
        %3843 = vmatpush2.msra.mxu0 %v3548
        %3844 = vmatprep.subr.mxu0 0.0
        %3845 = vmatpush2.msra.mxu0 %v3547
        %3846 = vmatprep.subr.mxu0 0.0
        %3847 = vmatpush2.msra.mxu0 %v3546
        %3848 = vmatprep.subr.mxu0 0.0
        %3849 = vmatpush2.msra.mxu0 %v3545
        %3850 = vmatprep.subr.mxu0 0.0
        %3851 = vmatpush2.msra.mxu0 %v3544
        %3852 = vmatprep.subr.mxu0 0.0
        %3853 = vmatpush2.msra.mxu0 %v3543
        %3854 = vmatprep.subr.mxu0 0.0
        %3855 = vmatpush2.msra.mxu0 %v3542
        %3856 = vmatprep.subr.mxu0 0.0
        %3857 = vmatpush2.msra.mxu0 %v3541
        %3858 = vmatprep.subr.mxu0 0.0
        %3859 = vmatpush2.msra.mxu0 %v3540
        %3860 = vmatprep.subr.mxu0 0.0
        %3861 = vmatpush2.msra.mxu0 %v3539
        %3862 = vmatprep.mubr.f32.mxu0 %v3452
        %3863 = vmatmul.mubr.f32.gmra.mxu0 %v3451
        %v3864 = vpop.f32.mrf.mxu0
        %v3865 = vadd.f32 %v3795, %v3864
        %v3866 = vpop.f32.mrf.mxu0
        %3867 = vdwg.mxu0
        %3868 = vmatprep.subr.mxu0 0.0
        %3869 = vmatpush1.msra.mxu0 %v3570
        %3870 = vmatprep.subr.mxu0 0.0
        %3871 = vmatpush1.msra.mxu0 %v3569
        %3872 = vmatprep.subr.mxu0 0.0
        %3873 = vmatpush1.msra.mxu0 %v3568
        %3874 = vmatprep.subr.mxu0 0.0
        %3875 = vmatpush1.msra.mxu0 %v3567
        %3876 = vmatprep.subr.mxu0 0.0
        %3877 = vmatpush1.msra.mxu0 %v3566
        %3878 = vmatprep.subr.mxu0 0.0
        %3879 = vmatpush1.msra.mxu0 %v3565
        %3880 = vmatprep.subr.mxu0 0.0
        %3881 = vmatpush1.msra.mxu0 %v3564
        %3882 = vmatprep.subr.mxu0 0.0
        %3883 = vmatpush1.msra.mxu0 %v3563
        %3884 = vmatprep.subr.mxu0 0.0
        %3885 = vmatpush1.msra.mxu0 %v3562
        %3886 = vmatprep.subr.mxu0 0.0
        %3887 = vmatpush1.msra.mxu0 %v3561
        %3888 = vmatprep.subr.mxu0 0.0
        %3889 = vmatpush1.msra.mxu0 %v3560
        %3890 = vmatprep.subr.mxu0 0.0
        %3891 = vmatpush1.msra.mxu0 %v3559
        %3892 = vmatprep.subr.mxu0 0.0
        %3893 = vmatpush1.msra.mxu0 %v3558
        %3894 = vmatprep.subr.mxu0 0.0
        %3895 = vmatpush1.msra.mxu0 %v3557
        %3896 = vmatprep.subr.mxu0 0.0
        %3897 = vmatpush1.msra.mxu0 %v3556
        %3898 = vmatprep.subr.mxu0 0.0
        %3899 = vmatpush1.msra.mxu0 %v3555
        %3900 = vmatprep.subr.mxu0 0.0
        %3901 = vmatpush2.msra.mxu0 %v3586
        %3902 = vmatprep.subr.mxu0 0.0
        %3903 = vmatpush2.msra.mxu0 %v3585
        %3904 = vmatprep.subr.mxu0 0.0
        %3905 = vmatpush2.msra.mxu0 %v3584
        %3906 = vmatprep.subr.mxu0 0.0
        %3907 = vmatpush2.msra.mxu0 %v3583
        %3908 = vmatprep.subr.mxu0 0.0
        %3909 = vmatpush2.msra.mxu0 %v3582
        %3910 = vmatprep.subr.mxu0 0.0
        %3911 = vmatpush2.msra.mxu0 %v3581
        %3912 = vmatprep.subr.mxu0 0.0
        %3913 = vmatpush2.msra.mxu0 %v3580
        %3914 = vmatprep.subr.mxu0 0.0
        %3915 = vmatpush2.msra.mxu0 %v3579
        %3916 = vmatprep.subr.mxu0 0.0
        %3917 = vmatpush2.msra.mxu0 %v3578
        %3918 = vmatprep.subr.mxu0 0.0
        %3919 = vmatpush2.msra.mxu0 %v3577
        %3920 = vmatprep.subr.mxu0 0.0
        %3921 = vmatpush2.msra.mxu0 %v3576
        %3922 = vmatprep.subr.mxu0 0.0
        %3923 = vmatpush2.msra.mxu0 %v3575
        %3924 = vmatprep.subr.mxu0 0.0
        %3925 = vmatpush2.msra.mxu0 %v3574
        %3926 = vmatprep.subr.mxu0 0.0
        %3927 = vmatpush2.msra.mxu0 %v3573
        %3928 = vmatprep.subr.mxu0 0.0
        %3929 = vmatpush2.msra.mxu0 %v3572
        %3930 = vmatprep.subr.mxu0 0.0
        %3931 = vmatpush2.msra.mxu0 %v3571
        %3932 = vmatprep.mubr.f32.mxu0 %v3454
        %3933 = vmatmul.mubr.f32.gmra.mxu0 %v3453
        %v3934 = vpop.f32.mrf.mxu0
        %v3935 = vadd.f32 %v3865, %v3934
        %v3936 = vpop.f32.mrf.mxu0
        %3937 = vdwg.mxu0
        %3938 = vmatprep.subr.mxu0 0.0
        %3939 = vmatpush1.msra.mxu0 %v3602
        %3940 = vmatprep.subr.mxu0 0.0
        %3941 = vmatpush1.msra.mxu0 %v3601
        %3942 = vmatprep.subr.mxu0 0.0
        %3943 = vmatpush1.msra.mxu0 %v3600
        %3944 = vmatprep.subr.mxu0 0.0
        %3945 = vmatpush1.msra.mxu0 %v3599
        %3946 = vmatprep.subr.mxu0 0.0
        %3947 = vmatpush1.msra.mxu0 %v3598
        %3948 = vmatprep.subr.mxu0 0.0
        %3949 = vmatpush1.msra.mxu0 %v3597
        %3950 = vmatprep.subr.mxu0 0.0
        %3951 = vmatpush1.msra.mxu0 %v3596
        %3952 = vmatprep.subr.mxu0 0.0
        %3953 = vmatpush1.msra.mxu0 %v3595
        %3954 = vmatprep.subr.mxu0 0.0
        %3955 = vmatpush1.msra.mxu0 %v3594
        %3956 = vmatprep.subr.mxu0 0.0
        %3957 = vmatpush1.msra.mxu0 %v3593
        %3958 = vmatprep.subr.mxu0 0.0
        %3959 = vmatpush1.msra.mxu0 %v3592
        %3960 = vmatprep.subr.mxu0 0.0
        %3961 = vmatpush1.msra.mxu0 %v3591
        %3962 = vmatprep.subr.mxu0 0.0
        %3963 = vmatpush1.msra.mxu0 %v3590
        %3964 = vmatprep.subr.mxu0 0.0
        %3965 = vmatpush1.msra.mxu0 %v3589
        %3966 = vmatprep.subr.mxu0 0.0
        %3967 = vmatpush1.msra.mxu0 %v3588
        %3968 = vmatprep.subr.mxu0 0.0
        %3969 = vmatpush1.msra.mxu0 %v3587
        %3970 = vmatprep.subr.mxu0 0.0
        %3971 = vmatpush2.msra.mxu0 %v3618
        %3972 = vmatprep.subr.mxu0 0.0
        %3973 = vmatpush2.msra.mxu0 %v3617
        %3974 = vmatprep.subr.mxu0 0.0
        %3975 = vmatpush2.msra.mxu0 %v3616
        %3976 = vmatprep.subr.mxu0 0.0
        %3977 = vmatpush2.msra.mxu0 %v3615
        %3978 = vmatprep.subr.mxu0 0.0
        %3979 = vmatpush2.msra.mxu0 %v3614
        %3980 = vmatprep.subr.mxu0 0.0
        %3981 = vmatpush2.msra.mxu0 %v3613
        %3982 = vmatprep.subr.mxu0 0.0
        %3983 = vmatpush2.msra.mxu0 %v3612
        %3984 = vmatprep.subr.mxu0 0.0
        %3985 = vmatpush2.msra.mxu0 %v3611
        %3986 = vmatprep.subr.mxu0 0.0
        %3987 = vmatpush2.msra.mxu0 %v3610
        %3988 = vmatprep.subr.mxu0 0.0
        %3989 = vmatpush2.msra.mxu0 %v3609
        %3990 = vmatprep.subr.mxu0 0.0
        %3991 = vmatpush2.msra.mxu0 %v3608
        %3992 = vmatprep.subr.mxu0 0.0
        %3993 = vmatpush2.msra.mxu0 %v3607
        %3994 = vmatprep.subr.mxu0 0.0
        %3995 = vmatpush2.msra.mxu0 %v3606
        %3996 = vmatprep.subr.mxu0 0.0
        %3997 = vmatpush2.msra.mxu0 %v3605
        %3998 = vmatprep.subr.mxu0 0.0
        %3999 = vmatpush2.msra.mxu0 %v3604
        %4000 = vmatprep.subr.mxu0 0.0
        %4001 = vmatpush2.msra.mxu0 %v3603
        %4002 = vmatprep.mubr.f32.mxu0 %v3456
        %4003 = vmatmul.mubr.f32.gmra.mxu0 %v3455
        %v4004 = vpop.f32.mrf.mxu0
        %v4005 = vadd.f32 %v3935, %v4004
        %v4006 = vpop.f32.mrf.mxu0
        %4007 = vdwg.mxu0
        %4008 = vmatprep.subr.mxu0 0.0
        %4009 = vmatpush1.msra.mxu0 %v3634
        %4010 = vmatprep.subr.mxu0 0.0
        %4011 = vmatpush1.msra.mxu0 %v3633
        %4012 = vmatprep.subr.mxu0 0.0
        %4013 = vmatpush1.msra.mxu0 %v3632
        %4014 = vmatprep.subr.mxu0 0.0
        %4015 = vmatpush1.msra.mxu0 %v3631
        %4016 = vmatprep.subr.mxu0 0.0
        %4017 = vmatpush1.msra.mxu0 %v3630
        %4018 = vmatprep.subr.mxu0 0.0
        %4019 = vmatpush1.msra.mxu0 %v3629
        %4020 = vmatprep.subr.mxu0 0.0
        %4021 = vmatpush1.msra.mxu0 %v3628
        %4022 = vmatprep.subr.mxu0 0.0
        %4023 = vmatpush1.msra.mxu0 %v3627
        %4024 = vmatprep.subr.mxu0 0.0
        %4025 = vmatpush1.msra.mxu0 %v3626
        %4026 = vmatprep.subr.mxu0 0.0
        %4027 = vmatpush1.msra.mxu0 %v3625
        %4028 = vmatprep.subr.mxu0 0.0
        %4029 = vmatpush1.msra.mxu0 %v3624
        %4030 = vmatprep.subr.mxu0 0.0
        %4031 = vmatpush1.msra.mxu0 %v3623
        %4032 = vmatprep.subr.mxu0 0.0
        %4033 = vmatpush1.msra.mxu0 %v3622
        %4034 = vmatprep.subr.mxu0 0.0
        %4035 = vmatpush1.msra.mxu0 %v3621
        %4036 = vmatprep.subr.mxu0 0.0
        %4037 = vmatpush1.msra.mxu0 %v3620
        %4038 = vmatprep.subr.mxu0 0.0
        %4039 = vmatpush1.msra.mxu0 %v3619
        %4040 = vmatprep.subr.mxu0 0.0
        %4041 = vmatpush2.msra.mxu0 %v3650
        %4042 = vmatprep.subr.mxu0 0.0
        %4043 = vmatpush2.msra.mxu0 %v3649
        %4044 = vmatprep.subr.mxu0 0.0
        %4045 = vmatpush2.msra.mxu0 %v3648
        %4046 = vmatprep.subr.mxu0 0.0
        %4047 = vmatpush2.msra.mxu0 %v3647
        %4048 = vmatprep.subr.mxu0 0.0
        %4049 = vmatpush2.msra.mxu0 %v3646
        %4050 = vmatprep.subr.mxu0 0.0
        %4051 = vmatpush2.msra.mxu0 %v3645
        %4052 = vmatprep.subr.mxu0 0.0
        %4053 = vmatpush2.msra.mxu0 %v3644
        %4054 = vmatprep.subr.mxu0 0.0
        %4055 = vmatpush2.msra.mxu0 %v3643
        %4056 = vmatprep.subr.mxu0 0.0
        %4057 = vmatpush2.msra.mxu0 %v3642
        %4058 = vmatprep.subr.mxu0 0.0
        %4059 = vmatpush2.msra.mxu0 %v3641
        %4060 = vmatprep.subr.mxu0 0.0
        %4061 = vmatpush2.msra.mxu0 %v3640
        %4062 = vmatprep.subr.mxu0 0.0
        %4063 = vmatpush2.msra.mxu0 %v3639
        %4064 = vmatprep.subr.mxu0 0.0
        %4065 = vmatpush2.msra.mxu0 %v3638
        %4066 = vmatprep.subr.mxu0 0.0
        %4067 = vmatpush2.msra.mxu0 %v3637
        %4068 = vmatprep.subr.mxu0 0.0
        %4069 = vmatpush2.msra.mxu0 %v3636
        %4070 = vmatprep.subr.mxu0 0.0
        %4071 = vmatpush2.msra.mxu0 %v3635
        %4072 = vmatprep.mubr.f32.mxu0 %v3458
        %4073 = vmatmul.mubr.f32.gmra.mxu0 %v3457
        %v4074 = vpop.f32.mrf.mxu0
        %v4075 = vadd.f32 %v4005, %v4074
        %v4076 = vpop.f32.mrf.mxu0
        %4077 = vdwg.mxu0
        %v4078 = vmax.f32 %v4075, 0.0
        %4079 = vst [vmem:[%s286] sm:$0xff] %v4078
        %s4080 = sand.u32 %s143, 1
        %s4081 = scalar_lea.sflag [#allocation5], %s4080
        %s4082 = sand.u32 %s143, 1
        %s4083 = smul.addr %s4082, 8
        %s4084 = scalar_lea.vmem [#allocation12], %s4083
        // Predicated region
        $region57: #{tpu_custom_call.1} parent=39 // pred_check
          %p4085 = pneg %p153
        $region58: #{tpu_custom_call.1} parent=39 // pred_check_branch
          %4087 = sbr.rel (%p4085) target = $region60
        $region59: #{tpu_custom_call.1} parent=39 // pred_region
          %s4089 = ssub.s32 128, 128
          %4090 = vsyncadd %s4081, %s4089
          %s4091 = smul.addr %s25, 128
          %s4092 = scalar_lea.hbm %s5, %s4091
          %s4094 = sshll.u32 %s4084, 4
          %s4095 = int_to_ptr.vmem [resolvable:$true] %s4094
          %4097 = dma.vmem_to_hbm [thread:$0]  %s4095, 128, %s4092, %s4081
        $region60: #{tpu_custom_call.1} parent=39 // pred_fallthru
          _
      $region40: #{tpu_custom_call.1} parent=5 // pred_fallthru
        _
      %p4098 = scmp.le.s32.totalorder 2, %s20
      // Predicated region
      $region61: #{tpu_custom_call.1} parent=5 // pred_check
        %p4099 = pneg %p4098
      $region62: #{tpu_custom_call.1} parent=5 // pred_check_branch
        %4101 = sbr.rel (%p4099) target = $region64
      $region63: #{tpu_custom_call.1} parent=5 // pred_region
        %s4102 = ssub.s32 %s20, 2
        // Predicated region
        $region65: #{tpu_custom_call.1} parent=63 // pred_check
          %p4103 = pneg %p159
        $region66: #{tpu_custom_call.1} parent=63 // pred_check_branch
          %4105 = sbr.rel (%p4103) target = $region68
        $region67: #{tpu_custom_call.1} parent=63 // pred_region
          %s4106 = sand.u32 %s144, 1
          %s4107 = scalar_lea.sflag [#allocation5], %s4106
          %s4108 = sand.u32 %s144, 1
          %s4109 = smul.addr %s4108, 8
          %s4110 = scalar_lea.vmem [#allocation12], %s4109
          %4111 = dma.done %s4107, 128
        $region68: #{tpu_custom_call.1} parent=63 // pred_fallthru
          _
      $region64: #{tpu_custom_call.1} parent=5 // pred_fallthru
        _
    $region6: #{tpu_custom_call.1} parent=1 // loop_footer
      %s24 = sadd.s32 1, %s20
    $region7: #{tpu_custom_call.1} parent=1 // loop_footer_branch
      %19 = sbr.rel target = $region3
    $region8: #{tpu_custom_call.1} parent=1 // loop_exit
      _
    %4112 = vsyncpa [#allocation4], 1
    %s4113 = scalar_lea.sflag [#allocation4], 1
    %4114 = vsyncpa %s4113, 1
    %4115 = vsyncpa [#allocation11], 1
    %4116 = vsyncpa [#allocation5], 1
    %s4117 = scalar_lea.sflag [#allocation5], 1
    %4118 = vsyncpa %s4117, 1
    %4119 = vsyncpa [#allocation6], 1
    %s4120 = scalar_lea.sflag [#allocation6], 1
    %4121 = vsyncpa %s4120, 1
    %4122 = vsyncpa [#allocation9], 1

</llo_original>
